<compile_context>
chip_gen: v7x
topology: tpu7x:2x2x1
jax: 0.10.0
libtpu: 0.0.40
codegen_flags: <defaults>
</compile_context>

<pallas_src>
import jax
import jax.numpy as jnp
from jax.experimental import pallas as pl
from jax.experimental.pallas import tpu as pltpu

# ----------------------- small synthetic AST encoder ------------------------
EMBED = 32                 # encoder.embed_dim
DEPTH = 2                  # transformer blocks in the encoder
N_BLOCKS = 2               # last-n intermediate layers collected
NUM_HEADS = 4
HEAD_DIM = EMBED // NUM_HEADS
MLP_DIM = 4 * EMBED
PATCH_H = 16               # patch spans the full frequency axis (ATST style)
PATCH_W = 4
SPEC_H = 16                # mel bins
AVGPOOL = True
CHUNK_SEC = 0.15
CHUNK_LEN = int(CHUNK_SEC * 16000 / 160 + 1)   # == 16 frames, same formula as the module
LN_EPS = 1e-6
SCALE = HEAD_DIM ** -0.5

P_PATCHES = (SPEC_H // PATCH_H) * (CHUNK_LEN // PATCH_W)     # 4 patches per chunk
N_TOKENS = P_PATCHES + 1                                     # + CLS = 5
NT = 8                                                       # tokens padded to a full sublane tile
K_PATCH = PATCH_H * PATCH_W                                  # 64
EMBED_DIM_OUT = EMBED * 2 * N_BLOCKS if AVGPOOL else EMBED * N_BLOCKS   # 128

# vector-slab layout: all tiny bias / LN / cls+pos vectors in one (VEC_ROWS, 128) f32 array
VEC_COLS = 128
ROW_TOK = 0                 # rows 0..7 : per-token additive term (cls+pos | patch_b+pos | 0)
ROW_NORM_G = 8
ROW_NORM_B = 9
ROW_BLK = 10                # per block: ln1_g, ln1_b, qkv_b, proj_b, ln2_g, ln2_b, fc1_b, fc2_b
ROWS_PER_BLK = 8
VEC_ROWS = ((ROW_BLK + ROWS_PER_BLK * DEPTH + 7) // 8) * 8   # 32

TB_TARGET = 32              # samples per grid step -> matmul M = TB*NT = 256


# ------------------------------ kernel helpers --------------------------------
def _ln(x, g, b):
    mu = jnp.mean(x, axis=-1, keepdims=True)
    var = jnp.mean(jnp.square(x - mu), axis=-1, keepdims=True)
    return (x - mu) * jax.lax.rsqrt(var + LN_EPS) * g + b


def _erf(x):
    # Abramowitz & Stegun 7.1.26 (|err| < 1.5e-7): exact-GELU parity with
    # torch.nn.GELU (erf form) using only exp / mul / add (guaranteed lowering).
    a1, a2, a3, a4, a5 = 0.254829592, -0.284496736, 1.421413741, -1.453152027, 1.061405429
    p = 0.3275911
    ax = jnp.abs(x)
    t = 1.0 / (1.0 + p * ax)
    poly = ((((a5 * t + a4) * t + a3) * t + a2) * t + a1) * t
    y = 1.0 - poly * jnp.exp(-ax * ax)
    return jnp.where(x >= 0, y, -y)


def _gelu_exact(x):
    return 0.5 * x * (1.0 + _erf(x * 0.7071067811865476))


# ------------------------------ fused kernel ---------------------------------
def _fused_encoder_kernel(*refs):
    # refs = [patches, vec_slab, patch_w, DEPTH*(qkv_w, proj_w, fc1_w, fc2_w), out]
    patches_ref, vec_ref, patch_w_ref = refs[0], refs[1], refs[2]
    blk_w_refs = refs[3:3 + 4 * DEPTH]
    out_ref = refs[-1]

    tb = patches_ref.shape[0]
    m = tb * NT                                        # sample axis folded into matmul M

    vec = vec_ref[...]                                 # (VEC_ROWS, 128) resident slab
    tok_add = vec[ROW_TOK:ROW_TOK + NT, 0:EMBED]       # (8, 32)
    norm_g = vec[ROW_NORM_G:ROW_NORM_G + 1, 0:EMBED]
    norm_b = vec[ROW_NORM_B:ROW_NORM_B + 1, 0:EMBED]

    # ---- patch embed (Conv2d with kernel==stride) as ONE dense matmul over all samples;
    #      rows 0 and 5..7 of each sample are zero, so adding tok_add recreates
    #      CLS+pos on row 0, patch_b+pos on rows 1..4 and zeros on padded rows.
    p = patches_ref[...].reshape(m, K_PATCH)           # bf16
    x = jnp.dot(p, patch_w_ref[...], preferred_element_type=jnp.float32)
    x = (x.reshape(tb, NT, EMBED) + tok_add[None]).reshape(m, EMBED)

    # ---- block-diagonal attention mask: attend only within the own sample and
    #      never to padded token slots (NT == 8, power of two -> shifts/ands).
    row = jax.lax.broadcasted_iota(jnp.int32, (m, m), 0)
    col = jax.lax.broadcasted_iota(jnp.int32, (m, m), 1)
    mask = ((row >> 3) == (col >> 3)) & ((col & (NT - 1)) < N_TOKENS)

    collected = []
    for blk in range(DEPTH):
        qkv_w_ref, proj_w_ref, fc1_w_ref, fc2_w_ref = blk_w_refs[4 * blk:4 * blk + 4]
        base = ROW_BLK + ROWS_PER_BLK * blk
        ln1_g = vec[base + 0:base + 1, 0:EMBED]
        ln1_b = vec[base + 1:base + 2, 0:EMBED]
        qkv_b = vec[base + 2:base + 3, 0:3 * EMBED]
        proj_b = vec[base + 3:base + 4, 0:EMBED]
        ln2_g = vec[base + 4:base + 5, 0:EMBED]
        ln2_b = vec[base + 5:base + 6, 0:EMBED]
        fc1_b = vec[base + 6:base + 7, 0:MLP_DIM]
        fc2_b = vec[base + 7:base + 8, 0:EMBED]

        # --- multi-head self-attention (bf16 MXU operands, f32 softmax) ---
        h = _ln(x, ln1_g, ln1_b)
        qkv = jnp.dot(h.astype(jnp.bfloat16), qkv_w_ref[...],
                      preferred_element_type=jnp.float32) + qkv_b        # (m, 3D)
        heads = []
        for hd in range(NUM_HEADS):
            lo = hd * HEAD_DIM
            qh = qkv[:, lo:lo + HEAD_DIM].astype(jnp.bfloat16)
            kh = qkv[:, EMBED + lo:EMBED + lo + HEAD_DIM].astype(jnp.bfloat16)
            vh = qkv[:, 2 * EMBED + lo:2 * EMBED + lo + HEAD_DIM].astype(jnp.bfloat16)
            s = jnp.dot(qh, kh.T, preferred_element_type=jnp.float32) * SCALE
            s = jnp.where(mask, s, -1e30)
            s = s - jnp.max(s, axis=-1, keepdims=True)
            pr = jnp.exp(s)
            pr = pr / jnp.sum(pr, axis=-1, keepdims=True)                # exact softmax
            heads.append(jnp.dot(pr.astype(jnp.bfloat16), vh,
                                 preferred_element_type=jnp.float32))    # (m, Dh)
        # one lane concat, then a single K=32 output projection (not 4x K=8)
        o_cat = jnp.concatenate(heads, axis=-1)                          # (m, D)
        x = x + jnp.dot(o_cat.astype(jnp.bfloat16), proj_w_ref[...],
                        preferred_element_type=jnp.float32) + proj_b

        # --- MLP (exact erf GELU, matching torch.nn.GELU) ---
        h = _ln(x, ln2_g, ln2_b)
        h = jnp.dot(h.astype(jnp.bfloat16), fc1_w_ref[...],
                    preferred_element_type=jnp.float32) + fc1_b
        h = _gelu_exact(h)
        x = x + jnp.dot(h.astype(jnp.bfloat16), fc2_w_ref[...],
                        preferred_element_type=jnp.float32) + fc2_b
        collected.append(x)

    # ---- final LayerNorm + CLS / patch-mean pooling of the last N_BLOCKS blocks;
    #      the full 128-lane row is assembled in registers -> one lane-dense store.
    rid = jax.lax.broadcasted_iota(jnp.int32, (NT, EMBED), 0)
    cls_w = (rid == 0).astype(jnp.float32)[None]                         # (1, 8, D)
    avg_w = (((rid >= 1) & (rid < N_TOKENS)).astype(jnp.float32)
             * (1.0 / P_PATCHES))[None]
    pieces = []
    for hidden in collected[-N_BLOCKS:]:
        hn = _ln(hidden, norm_g, norm_b).reshape(tb, NT, EMBED)
        pieces.append(jnp.sum(hn * cls_w, axis=1))                       # CLS token
        if AVGPOOL:
            pieces.append(jnp.sum(hn * avg_w, axis=1))                   # mean over patch tokens
    out_ref[...] = jnp.concatenate(pieces, axis=-1)                      # (tb, 128)


# ------------------------------ parameters ----------------------------------
def make_params(key):
    keys = iter(jax.random.split(key, 64))

    def nrm(shape, s=0.02):
        return s * jax.random.normal(next(keys), shape, dtype=jnp.float32)

    params = dict(
        patch_w=nrm((K_PATCH, EMBED)),                 # Conv2d(kernel=stride=patch) as matmul
        patch_b=jnp.zeros((1, EMBED), jnp.float32),
        cls_token=nrm((1, EMBED)),
        pos_embed=nrm((N_TOKENS, EMBED)),
        norm_g=jnp.ones((1, EMBED), jnp.float32),
        norm_b=jnp.zeros((1, EMBED), jnp.float32),
        blocks=[],
    )
    for _ in range(DEPTH):
        params["blocks"].append(dict(
            ln1_g=jnp.ones((1, EMBED), jnp.float32),
            ln1_b=jnp.zeros((1, EMBED), jnp.float32),
            qkv_w=nrm((EMBED, 3 * EMBED)),
            qkv_b=jnp.zeros((1, 3 * EMBED), jnp.float32),
            proj_w=nrm((EMBED, EMBED)),
            proj_b=jnp.zeros((1, EMBED), jnp.float32),
            ln2_g=jnp.ones((1, EMBED), jnp.float32),
            ln2_b=jnp.zeros((1, EMBED), jnp.float32),
            fc1_w=nrm((EMBED, MLP_DIM)),
            fc1_b=jnp.zeros((1, MLP_DIM), jnp.float32),
            fc2_w=nrm((MLP_DIM, EMBED)),
            fc2_b=jnp.zeros((1, EMBED), jnp.float32),
        ))
    return params


def _pack_params(params):
    """Pack tiny vectors into one f32 slab; cast matmul weights to bf16."""
    def padrow(v):
        v = v.reshape(1, -1).astype(jnp.float32)
        return jnp.pad(v, ((0, 0), (0, VEC_COLS - v.shape[1])))

    tok_add = jnp.concatenate([
        params["cls_token"] + params["pos_embed"][0:1],                  # CLS slot (row 0)
        params["patch_b"] + params["pos_embed"][1:1 + P_PATCHES],        # patch slots (rows 1..4)
        jnp.zeros((NT - N_TOKENS, EMBED), jnp.float32),                  # padded slots (rows 5..7)
    ], axis=0)
    rows = [jnp.pad(tok_add, ((0, 0), (0, VEC_COLS - EMBED)))]
    rows += [padrow(params["norm_g"]), padrow(params["norm_b"])]
    for blk in params["blocks"]:
        for name in ("ln1_g", "ln1_b", "qkv_b", "proj_b",
                     "ln2_g", "ln2_b", "fc1_b", "fc2_b"):
            rows.append(padrow(blk[name]))
    vec = jnp.concatenate(rows, axis=0)
    vec = jnp.pad(vec, ((0, VEC_ROWS - vec.shape[0]), (0, 0)))

    weights = [params["patch_w"].astype(jnp.bfloat16)]
    for blk in params["blocks"]:
        weights += [blk["qkv_w"].astype(jnp.bfloat16),
                    blk["proj_w"].astype(jnp.bfloat16),
                    blk["fc1_w"].astype(jnp.bfloat16),
                    blk["fc2_w"].astype(jnp.bfloat16)]
    return vec, weights


# ------------------------------ forward pass ---------------------------------
def _extract_patches(x_chunk):
    # x_chunk: (BC, 1, F, Tc) NCHW -> (BC, P, C*ph*pw), same pixel order as
    # torch Conv2d weight flattening; token order is freq-major then time.
    bc, c, f, t = x_chunk.shape
    nf, nt = f // PATCH_H, t // PATCH_W
    x = x_chunk.reshape(bc, c, nf, PATCH_H, nt, PATCH_W)
    x = x.transpose(0, 2, 4, 1, 3, 5)
    return x.reshape(bc, nf * nt, c * PATCH_H * PATCH_W)


def _choose_tb(bc):
    # TB*NT = 256 matmul rows per step (fills v6e's 256-wide MXU, >=128 for v5e)
    # while keeping >=2 grid steps so ("parallel",) shards across both v7x TCs.
    # Tiny batches run as a single full-array step (block == full array, no padding).
    if bc >= 2 * TB_TARGET:
        return TB_TARGET
    return max(bc, 1)


def _fused_encoder(vec, weights, patches):
    """One pallas_call over all (batch * chunk) samples; TB samples per grid step."""
    bc = patches.shape[0]
    tb = _choose_tb(bc)
    bc_pad = ((bc + tb - 1) // tb) * tb
    if bc_pad != bc:
        patches = jnp.pad(patches, ((0, bc_pad - bc), (0, 0), (0, 0)))
    flat = [vec] + list(weights)

    in_specs = [pl.BlockSpec((tb, NT, K_PATCH), lambda i: (i, 0, 0))]
    for w in flat:                       # resident params: constant index map, never re-fetched
        in_specs.append(pl.BlockSpec(w.shape, lambda i, nd=w.ndim: (0,) * nd))

    out = pl.pallas_call(
        _fused_encoder_kernel,
        out_shape=jax.ShapeDtypeStruct((bc_pad, EMBED_DIM_OUT), jnp.float32),
        grid=(bc_pad // tb,),
        in_specs=in_specs,
        out_specs=pl.BlockSpec((tb, EMBED_DIM_OUT), lambda i: (i, 0)),
        compiler_params=pltpu.CompilerParams(dimension_semantics=("parallel",)),
    )(patches, *flat)
    return out[:bc]


def pretrained_encoder_forward(params, x):
    """Equivalent of PretrainedEncoderPLModule.forward; x: (B, 1, F, T) NCHW."""
    b, c, f, t = x.shape
    # `length = torch.tensor([T]*B)` in the module; with full chunks the mask is identity.
    # TODO(synk): ATST uses `length` to mask padded frames of a partial final chunk;
    # here we require t % CHUNK_LEN == 0 so all chunks are full and no mask is needed.
    assert t % CHUNK_LEN == 0, "partial final chunk (length masking) not implemented"
    n_chunks = t // CHUNK_LEN

    # chunks are independent until the final mean -> fold them into the batch axis
    xc = x.reshape(b, c, f, n_chunks, CHUNK_LEN).transpose(0, 3, 1, 2, 4)
    xc = xc.reshape(b * n_chunks, c, f, CHUNK_LEN)

    patches = _extract_patches(xc)                               # (BC, 4, 64)
    # pad the token axis to NT=8 (zero CLS slot + 4 patches + 3 zero slots) so each
    # sample is exactly one sublane tile and in-kernel reshapes are layout-free
    patches = jnp.pad(patches, ((0, 0), (1, NT - 1 - P_PATCHES), (0, 0)))
    patches = patches.astype(jnp.bfloat16)                       # bf16 MXU operand

    vec, weights = _pack_params(params)
    feats = _fused_encoder(vec, weights, patches)                # (BC, 128)
    feats = feats.reshape(b, n_chunks, EMBED_DIM_OUT)
    return jnp.mean(feats, axis=1)                               # average over chunks


# ---------------------------------- main --------------------------------------
if __name__ == "__main__":
    key = jax.random.PRNGKey(0)
    pkey, xkey = jax.random.split(key)
    params = make_params(pkey)

    B, T = 2, 32                                                 # 2 chunks of 16 frames
    x = jax.random.normal(xkey, (B, 1, SPEC_H, T), dtype=jnp.float32)

    fwd = jax.jit(pretrained_encoder_forward)
    out = jax.block_until_ready(fwd(params, x))

    assert out.shape == (B, EMBED_DIM_OUT), out.shape
    assert bool(jnp.all(jnp.isfinite(out)))
    print("KERNEL_OK")
</pallas_src>

<mosaic_0001>
module attributes {stable_mosaic.version = 11 : i64} {
  func.func @_fused_encoder_kernel(%arg0: i32, %arg1: memref<4x8x64xbf16, #tpu.memory_space<vmem>>, %arg2: memref<32x128xf32, #tpu.memory_space<vmem>>, %arg3: memref<64x32xbf16, #tpu.memory_space<vmem>>, %arg4: memref<32x96xbf16, #tpu.memory_space<vmem>>, %arg5: memref<32x32xbf16, #tpu.memory_space<vmem>>, %arg6: memref<32x128xbf16, #tpu.memory_space<vmem>>, %arg7: memref<128x32xbf16, #tpu.memory_space<vmem>>, %arg8: memref<32x96xbf16, #tpu.memory_space<vmem>>, %arg9: memref<32x32xbf16, #tpu.memory_space<vmem>>, %arg10: memref<32x128xbf16, #tpu.memory_space<vmem>>, %arg11: memref<128x32xbf16, #tpu.memory_space<vmem>>, %arg12: memref<4x128xf32, #tpu.memory_space<vmem>>) attributes {dimension_semantics = [#tpu.dimension_semantics<parallel>], iteration_bounds = array<i64: 1>, scalar_prefetch = 0 : i64, scratch_operands = 0 : i64, tpu.core_type = #tpu.core_type<tc>, window_params = [{transform_indices = @transform_0, window_bounds = array<i64: 4, 8, 64>}, {pipeline_mode = #tpu.pipeline_mode<synchronous>, transform_indices = @transform_1, window_bounds = array<i64: 32, 128>}, {pipeline_mode = #tpu.pipeline_mode<synchronous>, transform_indices = @transform_2, window_bounds = array<i64: 64, 32>}, {pipeline_mode = #tpu.pipeline_mode<synchronous>, transform_indices = @transform_3, window_bounds = array<i64: 32, 96>}, {pipeline_mode = #tpu.pipeline_mode<synchronous>, transform_indices = @transform_4, window_bounds = array<i64: 32, 32>}, {pipeline_mode = #tpu.pipeline_mode<synchronous>, transform_indices = @transform_5, window_bounds = array<i64: 32, 128>}, {pipeline_mode = #tpu.pipeline_mode<synchronous>, transform_indices = @transform_6, window_bounds = array<i64: 128, 32>}, {pipeline_mode = #tpu.pipeline_mode<synchronous>, transform_indices = @transform_7, window_bounds = array<i64: 32, 96>}, {pipeline_mode = #tpu.pipeline_mode<synchronous>, transform_indices = @transform_8, window_bounds = array<i64: 32, 32>}, {pipeline_mode = #tpu.pipeline_mode<synchronous>, transform_indices = @transform_9, window_bounds = array<i64: 32, 128>}, {pipeline_mode = #tpu.pipeline_mode<synchronous>, transform_indices = @transform_10, window_bounds = array<i64: 128, 32>}, {transform_indices = @transform_11, window_bounds = array<i64: 4, 128>}]} {
    %c0 = arith.constant 0 : index
    %c0_0 = arith.constant 0 : index
    %0 = vector.load %arg2[%c0, %c0_0] : memref<32x128xf32, #tpu.memory_space<vmem>>, vector<32x128xf32>
    %1 = vector.extract_strided_slice %0 {offsets = [0, 0], sizes = [8, 32], strides = [1, 1]} : vector<32x128xf32> to vector<8x32xf32>
    %2 = vector.extract_strided_slice %0 {offsets = [8, 0], sizes = [1, 32], strides = [1, 1]} : vector<32x128xf32> to vector<1x32xf32>
    %3 = vector.extract_strided_slice %0 {offsets = [9, 0], sizes = [1, 32], strides = [1, 1]} : vector<32x128xf32> to vector<1x32xf32>
    %c0_1 = arith.constant 0 : index
    %c0_2 = arith.constant 0 : index
    %c0_3 = arith.constant 0 : index
    %4 = vector.load %arg1[%c0_1, %c0_2, %c0_3] : memref<4x8x64xbf16, #tpu.memory_space<vmem>>, vector<4x8x64xbf16>
    %5 = vector.shape_cast %4 : vector<4x8x64xbf16> to vector<32x64xbf16>
    %c0_4 = arith.constant 0 : index
    %c0_5 = arith.constant 0 : index
    %6 = vector.load %arg3[%c0_4, %c0_5] : memref<64x32xbf16, #tpu.memory_space<vmem>>, vector<64x32xbf16>
    %cst = arith.constant dense<0.000000e+00> : vector<32x32xf32>
    %7 = tpu.matmul %5, %6, %cst {dimension_numbers = #tpu.dot_dimension_numbers<[1], [0], [0], [1], [0, 0, 1, 1], [], []>} : vector<32x64xbf16>, vector<64x32xbf16>, vector<32x32xf32> -> vector<32x32xf32>
    %8 = vector.shape_cast %7 : vector<32x32xf32> to vector<4x8x32xf32>
    %9 = vector.shape_cast %1 : vector<8x32xf32> to vector<1x8x32xf32>
    %10 = vector.broadcast %9 : vector<1x8x32xf32> to vector<4x8x32xf32>
    %11 = arith.addf %8, %10 : vector<4x8x32xf32>
    %12 = vector.shape_cast %11 : vector<4x8x32xf32> to vector<32x32xf32>
    %13 = tpu.iota {dimensions = array<i32: 0>} : vector<32x32xi32>
    %14 = tpu.iota {dimensions = array<i32: 1>} : vector<32x32xi32>
    %c3_i32 = arith.constant 3 : i32
    %15 = vector.broadcast %c3_i32 : i32 to vector<32x32xi32>
    %16 = arith.shrsi %13, %15 : vector<32x32xi32>
    %c3_i32_6 = arith.constant 3 : i32
    %17 = vector.broadcast %c3_i32_6 : i32 to vector<32x32xi32>
    %18 = arith.shrsi %14, %17 : vector<32x32xi32>
    %19 = arith.cmpi eq, %16, %18 : vector<32x32xi32>
    %c7_i32 = arith.constant 7 : i32
    %20 = vector.broadcast %c7_i32 : i32 to vector<32x32xi32>
    %21 = arith.andi %14, %20 : vector<32x32xi32>
    %c5_i32 = arith.constant 5 : i32
    %22 = vector.broadcast %c5_i32 : i32 to vector<32x32xi32>
    %23 = arith.cmpi slt, %21, %22 : vector<32x32xi32>
    %24 = arith.andi %19, %23 : vector<32x32xi1>
    %25 = vector.extract_strided_slice %0 {offsets = [10, 0], sizes = [1, 32], strides = [1, 1]} : vector<32x128xf32> to vector<1x32xf32>
    %26 = vector.extract_strided_slice %0 {offsets = [11, 0], sizes = [1, 32], strides = [1, 1]} : vector<32x128xf32> to vector<1x32xf32>
    %27 = vector.extract_strided_slice %0 {offsets = [12, 0], sizes = [1, 96], strides = [1, 1]} : vector<32x128xf32> to vector<1x96xf32>
    %28 = vector.extract_strided_slice %0 {offsets = [13, 0], sizes = [1, 32], strides = [1, 1]} : vector<32x128xf32> to vector<1x32xf32>
    %29 = vector.extract_strided_slice %0 {offsets = [14, 0], sizes = [1, 32], strides = [1, 1]} : vector<32x128xf32> to vector<1x32xf32>
    %30 = vector.extract_strided_slice %0 {offsets = [15, 0], sizes = [1, 32], strides = [1, 1]} : vector<32x128xf32> to vector<1x32xf32>
    %31 = vector.extract_strided_slice %0 {offsets = [16, 0], sizes = [1, 128], strides = [1, 1]} : vector<32x128xf32> to vector<1x128xf32>
    %32 = vector.extract_strided_slice %0 {offsets = [17, 0], sizes = [1, 32], strides = [1, 1]} : vector<32x128xf32> to vector<1x32xf32>
    %cst_7 = arith.constant dense<0.000000e+00> : vector<32xf32>
    %33 = vector.multi_reduction <add>, %12, %cst_7 [1] : vector<32x32xf32> to vector<32xf32>
    %34 = vector.shape_cast %33 : vector<32xf32> to vector<32x1xf32>
    %cst_8 = arith.constant 3.200000e+01 : f32
    %35 = vector.broadcast %cst_8 : f32 to vector<32x1xf32>
    %36 = arith.divf %34, %35 : vector<32x1xf32>
    %37 = vector.broadcast %36 : vector<32x1xf32> to vector<32x32xf32>
    %38 = arith.subf %12, %37 : vector<32x32xf32>
    %39 = arith.mulf %38, %38 : vector<32x32xf32>
    %cst_9 = arith.constant dense<0.000000e+00> : vector<32xf32>
    %40 = vector.multi_reduction <add>, %39, %cst_9 [1] : vector<32x32xf32> to vector<32xf32>
    %41 = vector.shape_cast %40 : vector<32xf32> to vector<32x1xf32>
    %cst_10 = arith.constant 3.200000e+01 : f32
    %42 = vector.broadcast %cst_10 : f32 to vector<32x1xf32>
    %43 = arith.divf %41, %42 : vector<32x1xf32>
    %44 = vector.broadcast %36 : vector<32x1xf32> to vector<32x32xf32>
    %45 = arith.subf %12, %44 : vector<32x32xf32>
    %cst_11 = arith.constant 9.99999997E-7 : f32
    %46 = vector.broadcast %cst_11 : f32 to vector<32x1xf32>
    %47 = arith.addf %43, %46 : vector<32x1xf32>
    %48 = math.rsqrt %47 : vector<32x1xf32>
    %49 = vector.broadcast %48 : vector<32x1xf32> to vector<32x32xf32>
    %50 = arith.mulf %45, %49 : vector<32x32xf32>
    %51 = vector.broadcast %25 : vector<1x32xf32> to vector<32x32xf32>
    %52 = arith.mulf %50, %51 : vector<32x32xf32>
    %53 = vector.broadcast %26 : vector<1x32xf32> to vector<32x32xf32>
    %54 = arith.addf %52, %53 : vector<32x32xf32>
    %55 = arith.truncf %54 : vector<32x32xf32> to vector<32x32xbf16>
    %c0_12 = arith.constant 0 : index
    %c0_13 = arith.constant 0 : index
    %56 = vector.load %arg4[%c0_12, %c0_13] : memref<32x96xbf16, #tpu.memory_space<vmem>>, vector<32x96xbf16>
    %cst_14 = arith.constant dense<0.000000e+00> : vector<32x96xf32>
    %57 = tpu.matmul %55, %56, %cst_14 {dimension_numbers = #tpu.dot_dimension_numbers<[1], [0], [0], [1], [0, 0, 1, 1], [], []>} : vector<32x32xbf16>, vector<32x96xbf16>, vector<32x96xf32> -> vector<32x96xf32>
    %58 = vector.broadcast %27 : vector<1x96xf32> to vector<32x96xf32>
    %59 = arith.addf %57, %58 : vector<32x96xf32>
    %60 = vector.extract_strided_slice %59 {offsets = [0, 0], sizes = [32, 8], strides = [1, 1]} : vector<32x96xf32> to vector<32x8xf32>
    %61 = arith.truncf %60 : vector<32x8xf32> to vector<32x8xbf16>
    %62 = vector.extract_strided_slice %59 {offsets = [0, 32], sizes = [32, 8], strides = [1, 1]} : vector<32x96xf32> to vector<32x8xf32>
    %63 = arith.truncf %62 : vector<32x8xf32> to vector<32x8xbf16>
    %64 = vector.extract_strided_slice %59 {offsets = [0, 64], sizes = [32, 8], strides = [1, 1]} : vector<32x96xf32> to vector<32x8xf32>
    %65 = arith.truncf %64 : vector<32x8xf32> to vector<32x8xbf16>
    %66 = tpu.transpose %63, [1, 0] : vector<32x8xbf16> -> vector<8x32xbf16>
    %cst_15 = arith.constant dense<0.000000e+00> : vector<32x32xf32>
    %67 = tpu.matmul %61, %66, %cst_15 {dimension_numbers = #tpu.dot_dimension_numbers<[1], [0], [0], [1], [0, 0, 1, 1], [], []>} : vector<32x8xbf16>, vector<8x32xbf16>, vector<32x32xf32> -> vector<32x32xf32>
    %cst_16 = arith.constant 0.353553385 : f32
    %68 = vector.broadcast %cst_16 : f32 to vector<32x32xf32>
    %69 = arith.mulf %67, %68 : vector<32x32xf32>
    %cst_17 = arith.constant -1.000000e+30 : f32
    %70 = vector.broadcast %cst_17 : f32 to vector<32x32xf32>
    %71 = arith.select %24, %69, %70 : vector<32x32xi1>, vector<32x32xf32>
    %cst_18 = arith.constant dense<0xFF800000> : vector<32xf32>
    %72 = vector.multi_reduction <maximumf>, %71, %cst_18 [1] : vector<32x32xf32> to vector<32xf32>
    %73 = vector.shape_cast %72 : vector<32xf32> to vector<32x1xf32>
    %74 = vector.broadcast %73 : vector<32x1xf32> to vector<32x32xf32>
    %75 = arith.subf %71, %74 : vector<32x32xf32>
    %76 = math.exp %75 : vector<32x32xf32>
    %cst_19 = arith.constant dense<0.000000e+00> : vector<32xf32>
    %77 = vector.multi_reduction <add>, %76, %cst_19 [1] : vector<32x32xf32> to vector<32xf32>
    %78 = vector.shape_cast %77 : vector<32xf32> to vector<32x1xf32>
    %79 = vector.broadcast %78 : vector<32x1xf32> to vector<32x32xf32>
    %80 = arith.divf %76, %79 : vector<32x32xf32>
    %81 = arith.truncf %80 : vector<32x32xf32> to vector<32x32xbf16>
    %cst_20 = arith.constant dense<0.000000e+00> : vector<32x8xf32>
    %82 = tpu.matmul %81, %65, %cst_20 {dimension_numbers = #tpu.dot_dimension_numbers<[1], [0], [0], [1], [0, 0, 1, 1], [], []>} : vector<32x32xbf16>, vector<32x8xbf16>, vector<32x8xf32> -> vector<32x8xf32>
    %83 = vector.extract_strided_slice %59 {offsets = [0, 8], sizes = [32, 8], strides = [1, 1]} : vector<32x96xf32> to vector<32x8xf32>
    %84 = arith.truncf %83 : vector<32x8xf32> to vector<32x8xbf16>
    %85 = vector.extract_strided_slice %59 {offsets = [0, 40], sizes = [32, 8], strides = [1, 1]} : vector<32x96xf32> to vector<32x8xf32>
    %86 = arith.truncf %85 : vector<32x8xf32> to vector<32x8xbf16>
    %87 = vector.extract_strided_slice %59 {offsets = [0, 72], sizes = [32, 8], strides = [1, 1]} : vector<32x96xf32> to vector<32x8xf32>
    %88 = arith.truncf %87 : vector<32x8xf32> to vector<32x8xbf16>
    %89 = tpu.transpose %86, [1, 0] : vector<32x8xbf16> -> vector<8x32xbf16>
    %cst_21 = arith.constant dense<0.000000e+00> : vector<32x32xf32>
    %90 = tpu.matmul %84, %89, %cst_21 {dimension_numbers = #tpu.dot_dimension_numbers<[1], [0], [0], [1], [0, 0, 1, 1], [], []>} : vector<32x8xbf16>, vector<8x32xbf16>, vector<32x32xf32> -> vector<32x32xf32>
    %cst_22 = arith.constant 0.353553385 : f32
    %91 = vector.broadcast %cst_22 : f32 to vector<32x32xf32>
    %92 = arith.mulf %90, %91 : vector<32x32xf32>
    %cst_23 = arith.constant -1.000000e+30 : f32
    %93 = vector.broadcast %cst_23 : f32 to vector<32x32xf32>
    %94 = arith.select %24, %92, %93 : vector<32x32xi1>, vector<32x32xf32>
    %cst_24 = arith.constant dense<0xFF800000> : vector<32xf32>
    %95 = vector.multi_reduction <maximumf>, %94, %cst_24 [1] : vector<32x32xf32> to vector<32xf32>
    %96 = vector.shape_cast %95 : vector<32xf32> to vector<32x1xf32>
    %97 = vector.broadcast %96 : vector<32x1xf32> to vector<32x32xf32>
    %98 = arith.subf %94, %97 : vector<32x32xf32>
    %99 = math.exp %98 : vector<32x32xf32>
    %cst_25 = arith.constant dense<0.000000e+00> : vector<32xf32>
    %100 = vector.multi_reduction <add>, %99, %cst_25 [1] : vector<32x32xf32> to vector<32xf32>
    %101 = vector.shape_cast %100 : vector<32xf32> to vector<32x1xf32>
    %102 = vector.broadcast %101 : vector<32x1xf32> to vector<32x32xf32>
    %103 = arith.divf %99, %102 : vector<32x32xf32>
    %104 = arith.truncf %103 : vector<32x32xf32> to vector<32x32xbf16>
    %cst_26 = arith.constant dense<0.000000e+00> : vector<32x8xf32>
    %105 = tpu.matmul %104, %88, %cst_26 {dimension_numbers = #tpu.dot_dimension_numbers<[1], [0], [0], [1], [0, 0, 1, 1], [], []>} : vector<32x32xbf16>, vector<32x8xbf16>, vector<32x8xf32> -> vector<32x8xf32>
    %106 = vector.extract_strided_slice %59 {offsets = [0, 16], sizes = [32, 8], strides = [1, 1]} : vector<32x96xf32> to vector<32x8xf32>
    %107 = arith.truncf %106 : vector<32x8xf32> to vector<32x8xbf16>
    %108 = vector.extract_strided_slice %59 {offsets = [0, 48], sizes = [32, 8], strides = [1, 1]} : vector<32x96xf32> to vector<32x8xf32>
    %109 = arith.truncf %108 : vector<32x8xf32> to vector<32x8xbf16>
    %110 = vector.extract_strided_slice %59 {offsets = [0, 80], sizes = [32, 8], strides = [1, 1]} : vector<32x96xf32> to vector<32x8xf32>
    %111 = arith.truncf %110 : vector<32x8xf32> to vector<32x8xbf16>
    %112 = tpu.transpose %109, [1, 0] : vector<32x8xbf16> -> vector<8x32xbf16>
    %cst_27 = arith.constant dense<0.000000e+00> : vector<32x32xf32>
    %113 = tpu.matmul %107, %112, %cst_27 {dimension_numbers = #tpu.dot_dimension_numbers<[1], [0], [0], [1], [0, 0, 1, 1], [], []>} : vector<32x8xbf16>, vector<8x32xbf16>, vector<32x32xf32> -> vector<32x32xf32>
    %cst_28 = arith.constant 0.353553385 : f32
    %114 = vector.broadcast %cst_28 : f32 to vector<32x32xf32>
    %115 = arith.mulf %113, %114 : vector<32x32xf32>
    %cst_29 = arith.constant -1.000000e+30 : f32
    %116 = vector.broadcast %cst_29 : f32 to vector<32x32xf32>
    %117 = arith.select %24, %115, %116 : vector<32x32xi1>, vector<32x32xf32>
    %cst_30 = arith.constant dense<0xFF800000> : vector<32xf32>
    %118 = vector.multi_reduction <maximumf>, %117, %cst_30 [1] : vector<32x32xf32> to vector<32xf32>
    %119 = vector.shape_cast %118 : vector<32xf32> to vector<32x1xf32>
    %120 = vector.broadcast %119 : vector<32x1xf32> to vector<32x32xf32>
    %121 = arith.subf %117, %120 : vector<32x32xf32>
    %122 = math.exp %121 : vector<32x32xf32>
    %cst_31 = arith.constant dense<0.000000e+00> : vector<32xf32>
    %123 = vector.multi_reduction <add>, %122, %cst_31 [1] : vector<32x32xf32> to vector<32xf32>
    %124 = vector.shape_cast %123 : vector<32xf32> to vector<32x1xf32>
    %125 = vector.broadcast %124 : vector<32x1xf32> to vector<32x32xf32>
    %126 = arith.divf %122, %125 : vector<32x32xf32>
    %127 = arith.truncf %126 : vector<32x32xf32> to vector<32x32xbf16>
    %cst_32 = arith.constant dense<0.000000e+00> : vector<32x8xf32>
    %128 = tpu.matmul %127, %111, %cst_32 {dimension_numbers = #tpu.dot_dimension_numbers<[1], [0], [0], [1], [0, 0, 1, 1], [], []>} : vector<32x32xbf16>, vector<32x8xbf16>, vector<32x8xf32> -> vector<32x8xf32>
    %129 = vector.extract_strided_slice %59 {offsets = [0, 24], sizes = [32, 8], strides = [1, 1]} : vector<32x96xf32> to vector<32x8xf32>
    %130 = arith.truncf %129 : vector<32x8xf32> to vector<32x8xbf16>
    %131 = vector.extract_strided_slice %59 {offsets = [0, 56], sizes = [32, 8], strides = [1, 1]} : vector<32x96xf32> to vector<32x8xf32>
    %132 = arith.truncf %131 : vector<32x8xf32> to vector<32x8xbf16>
    %133 = vector.extract_strided_slice %59 {offsets = [0, 88], sizes = [32, 8], strides = [1, 1]} : vector<32x96xf32> to vector<32x8xf32>
    %134 = arith.truncf %133 : vector<32x8xf32> to vector<32x8xbf16>
    %135 = tpu.transpose %132, [1, 0] : vector<32x8xbf16> -> vector<8x32xbf16>
    %cst_33 = arith.constant dense<0.000000e+00> : vector<32x32xf32>
    %136 = tpu.matmul %130, %135, %cst_33 {dimension_numbers = #tpu.dot_dimension_numbers<[1], [0], [0], [1], [0, 0, 1, 1], [], []>} : vector<32x8xbf16>, vector<8x32xbf16>, vector<32x32xf32> -> vector<32x32xf32>
    %cst_34 = arith.constant 0.353553385 : f32
    %137 = vector.broadcast %cst_34 : f32 to vector<32x32xf32>
    %138 = arith.mulf %136, %137 : vector<32x32xf32>
    %cst_35 = arith.constant -1.000000e+30 : f32
    %139 = vector.broadcast %cst_35 : f32 to vector<32x32xf32>
    %140 = arith.select %24, %138, %139 : vector<32x32xi1>, vector<32x32xf32>
    %cst_36 = arith.constant dense<0xFF800000> : vector<32xf32>
    %141 = vector.multi_reduction <maximumf>, %140, %cst_36 [1] : vector<32x32xf32> to vector<32xf32>
    %142 = vector.shape_cast %141 : vector<32xf32> to vector<32x1xf32>
    %143 = vector.broadcast %142 : vector<32x1xf32> to vector<32x32xf32>
    %144 = arith.subf %140, %143 : vector<32x32xf32>
    %145 = math.exp %144 : vector<32x32xf32>
    %cst_37 = arith.constant dense<0.000000e+00> : vector<32xf32>
    %146 = vector.multi_reduction <add>, %145, %cst_37 [1] : vector<32x32xf32> to vector<32xf32>
    %147 = vector.shape_cast %146 : vector<32xf32> to vector<32x1xf32>
    %148 = vector.broadcast %147 : vector<32x1xf32> to vector<32x32xf32>
    %149 = arith.divf %145, %148 : vector<32x32xf32>
    %150 = arith.truncf %149 : vector<32x32xf32> to vector<32x32xbf16>
    %cst_38 = arith.constant dense<0.000000e+00> : vector<32x8xf32>
    %151 = tpu.matmul %150, %134, %cst_38 {dimension_numbers = #tpu.dot_dimension_numbers<[1], [0], [0], [1], [0, 0, 1, 1], [], []>} : vector<32x32xbf16>, vector<32x8xbf16>, vector<32x8xf32> -> vector<32x8xf32>
    %152 = tpu.concatenate %82, %105, %128, %151 in 1 : vector<32x8xf32>, vector<32x8xf32>, vector<32x8xf32>, vector<32x8xf32> -> vector<32x32xf32>
    %153 = arith.truncf %152 : vector<32x32xf32> to vector<32x32xbf16>
    %c0_39 = arith.constant 0 : index
    %c0_40 = arith.constant 0 : index
    %154 = vector.load %arg5[%c0_39, %c0_40] : memref<32x32xbf16, #tpu.memory_space<vmem>>, vector<32x32xbf16>
    %cst_41 = arith.constant dense<0.000000e+00> : vector<32x32xf32>
    %155 = tpu.matmul %153, %154, %cst_41 {dimension_numbers = #tpu.dot_dimension_numbers<[1], [0], [0], [1], [0, 0, 1, 1], [], []>} : vector<32x32xbf16>, vector<32x32xbf16>, vector<32x32xf32> -> vector<32x32xf32>
    %156 = arith.addf %12, %155 : vector<32x32xf32>
    %157 = vector.broadcast %28 : vector<1x32xf32> to vector<32x32xf32>
    %158 = arith.addf %156, %157 : vector<32x32xf32>
    %cst_42 = arith.constant dense<0.000000e+00> : vector<32xf32>
    %159 = vector.multi_reduction <add>, %158, %cst_42 [1] : vector<32x32xf32> to vector<32xf32>
    %160 = vector.shape_cast %159 : vector<32xf32> to vector<32x1xf32>
    %cst_43 = arith.constant 3.200000e+01 : f32
    %161 = vector.broadcast %cst_43 : f32 to vector<32x1xf32>
    %162 = arith.divf %160, %161 : vector<32x1xf32>
    %163 = vector.broadcast %162 : vector<32x1xf32> to vector<32x32xf32>
    %164 = arith.subf %158, %163 : vector<32x32xf32>
    %165 = arith.mulf %164, %164 : vector<32x32xf32>
    %cst_44 = arith.constant dense<0.000000e+00> : vector<32xf32>
    %166 = vector.multi_reduction <add>, %165, %cst_44 [1] : vector<32x32xf32> to vector<32xf32>
    %167 = vector.shape_cast %166 : vector<32xf32> to vector<32x1xf32>
    %cst_45 = arith.constant 3.200000e+01 : f32
    %168 = vector.broadcast %cst_45 : f32 to vector<32x1xf32>
    %169 = arith.divf %167, %168 : vector<32x1xf32>
    %170 = vector.broadcast %162 : vector<32x1xf32> to vector<32x32xf32>
    %171 = arith.subf %158, %170 : vector<32x32xf32>
    %cst_46 = arith.constant 9.99999997E-7 : f32
    %172 = vector.broadcast %cst_46 : f32 to vector<32x1xf32>
    %173 = arith.addf %169, %172 : vector<32x1xf32>
    %174 = math.rsqrt %173 : vector<32x1xf32>
    %175 = vector.broadcast %174 : vector<32x1xf32> to vector<32x32xf32>
    %176 = arith.mulf %171, %175 : vector<32x32xf32>
    %177 = vector.broadcast %29 : vector<1x32xf32> to vector<32x32xf32>
    %178 = arith.mulf %176, %177 : vector<32x32xf32>
    %179 = vector.broadcast %30 : vector<1x32xf32> to vector<32x32xf32>
    %180 = arith.addf %178, %179 : vector<32x32xf32>
    %181 = arith.truncf %180 : vector<32x32xf32> to vector<32x32xbf16>
    %c0_47 = arith.constant 0 : index
    %c0_48 = arith.constant 0 : index
    %182 = vector.load %arg6[%c0_47, %c0_48] : memref<32x128xbf16, #tpu.memory_space<vmem>>, vector<32x128xbf16>
    %cst_49 = arith.constant dense<0.000000e+00> : vector<32x128xf32>
    %183 = tpu.matmul %181, %182, %cst_49 {dimension_numbers = #tpu.dot_dimension_numbers<[1], [0], [0], [1], [0, 0, 1, 1], [], []>} : vector<32x32xbf16>, vector<32x128xbf16>, vector<32x128xf32> -> vector<32x128xf32>
    %184 = vector.broadcast %31 : vector<1x128xf32> to vector<32x128xf32>
    %185 = arith.addf %183, %184 : vector<32x128xf32>
    %cst_50 = arith.constant 5.000000e-01 : f32
    %186 = vector.broadcast %cst_50 : f32 to vector<32x128xf32>
    %187 = arith.mulf %186, %185 : vector<32x128xf32>
    %cst_51 = arith.constant 0.707106769 : f32
    %188 = vector.broadcast %cst_51 : f32 to vector<32x128xf32>
    %189 = arith.mulf %185, %188 : vector<32x128xf32>
    %190 = math.absf %189 : vector<32x128xf32>
    %cst_52 = arith.constant 0.327591091 : f32
    %191 = vector.broadcast %cst_52 : f32 to vector<32x128xf32>
    %192 = arith.mulf %191, %190 : vector<32x128xf32>
    %cst_53 = arith.constant 1.000000e+00 : f32
    %193 = vector.broadcast %cst_53 : f32 to vector<32x128xf32>
    %194 = arith.addf %193, %192 : vector<32x128xf32>
    %cst_54 = arith.constant 1.000000e+00 : f32
    %195 = vector.broadcast %cst_54 : f32 to vector<32x128xf32>
    %196 = arith.divf %195, %194 : vector<32x128xf32>
    %cst_55 = arith.constant 1.06140542 : f32
    %197 = vector.broadcast %cst_55 : f32 to vector<32x128xf32>
    %198 = arith.mulf %197, %196 : vector<32x128xf32>
    %cst_56 = arith.constant -1.45315206 : f32
    %199 = vector.broadcast %cst_56 : f32 to vector<32x128xf32>
    %200 = arith.addf %198, %199 : vector<32x128xf32>
    %201 = arith.mulf %200, %196 : vector<32x128xf32>
    %cst_57 = arith.constant 1.42141378 : f32
    %202 = vector.broadcast %cst_57 : f32 to vector<32x128xf32>
    %203 = arith.addf %201, %202 : vector<32x128xf32>
    %204 = arith.mulf %203, %196 : vector<32x128xf32>
    %cst_58 = arith.constant -0.284496725 : f32
    %205 = vector.broadcast %cst_58 : f32 to vector<32x128xf32>
    %206 = arith.addf %204, %205 : vector<32x128xf32>
    %207 = arith.mulf %206, %196 : vector<32x128xf32>
    %cst_59 = arith.constant 0.254829586 : f32
    %208 = vector.broadcast %cst_59 : f32 to vector<32x128xf32>
    %209 = arith.addf %207, %208 : vector<32x128xf32>
    %210 = arith.mulf %209, %196 : vector<32x128xf32>
    %cst_60 = arith.constant 0.000000e+00 : f32
    %211 = vector.broadcast %cst_60 : f32 to vector<32x128xf32>
    %212 = arith.subf %211, %190 : vector<32x128xf32>
    %213 = arith.mulf %212, %190 : vector<32x128xf32>
    %214 = math.exp %213 : vector<32x128xf32>
    %215 = arith.mulf %210, %214 : vector<32x128xf32>
    %cst_61 = arith.constant 1.000000e+00 : f32
    %216 = vector.broadcast %cst_61 : f32 to vector<32x128xf32>
    %217 = arith.subf %216, %215 : vector<32x128xf32>
    %cst_62 = arith.constant 0.000000e+00 : f32
    %218 = vector.broadcast %cst_62 : f32 to vector<32x128xf32>
    %219 = arith.cmpf oge, %189, %218 : vector<32x128xf32>
    %cst_63 = arith.constant 0.000000e+00 : f32
    %220 = vector.broadcast %cst_63 : f32 to vector<32x128xf32>
    %221 = arith.subf %220, %217 : vector<32x128xf32>
    %222 = arith.select %219, %217, %221 : vector<32x128xi1>, vector<32x128xf32>
    %cst_64 = arith.constant 1.000000e+00 : f32
    %223 = vector.broadcast %cst_64 : f32 to vector<32x128xf32>
    %224 = arith.addf %223, %222 : vector<32x128xf32>
    %225 = arith.mulf %187, %224 : vector<32x128xf32>
    %226 = arith.truncf %225 : vector<32x128xf32> to vector<32x128xbf16>
    %c0_65 = arith.constant 0 : index
    %c0_66 = arith.constant 0 : index
    %227 = vector.load %arg7[%c0_65, %c0_66] : memref<128x32xbf16, #tpu.memory_space<vmem>>, vector<128x32xbf16>
    %cst_67 = arith.constant dense<0.000000e+00> : vector<32x32xf32>
    %228 = tpu.matmul %226, %227, %cst_67 {dimension_numbers = #tpu.dot_dimension_numbers<[1], [0], [0], [1], [0, 0, 1, 1], [], []>} : vector<32x128xbf16>, vector<128x32xbf16>, vector<32x32xf32> -> vector<32x32xf32>
    %229 = arith.addf %158, %228 : vector<32x32xf32>
    %230 = vector.broadcast %32 : vector<1x32xf32> to vector<32x32xf32>
    %231 = arith.addf %229, %230 : vector<32x32xf32>
    %232 = vector.extract_strided_slice %0 {offsets = [18, 0], sizes = [1, 32], strides = [1, 1]} : vector<32x128xf32> to vector<1x32xf32>
    %233 = vector.extract_strided_slice %0 {offsets = [19, 0], sizes = [1, 32], strides = [1, 1]} : vector<32x128xf32> to vector<1x32xf32>
    %234 = vector.extract_strided_slice %0 {offsets = [20, 0], sizes = [1, 96], strides = [1, 1]} : vector<32x128xf32> to vector<1x96xf32>
    %235 = vector.extract_strided_slice %0 {offsets = [21, 0], sizes = [1, 32], strides = [1, 1]} : vector<32x128xf32> to vector<1x32xf32>
    %236 = vector.extract_strided_slice %0 {offsets = [22, 0], sizes = [1, 32], strides = [1, 1]} : vector<32x128xf32> to vector<1x32xf32>
    %237 = vector.extract_strided_slice %0 {offsets = [23, 0], sizes = [1, 32], strides = [1, 1]} : vector<32x128xf32> to vector<1x32xf32>
    %238 = vector.extract_strided_slice %0 {offsets = [24, 0], sizes = [1, 128], strides = [1, 1]} : vector<32x128xf32> to vector<1x128xf32>
    %239 = vector.extract_strided_slice %0 {offsets = [25, 0], sizes = [1, 32], strides = [1, 1]} : vector<32x128xf32> to vector<1x32xf32>
    %cst_68 = arith.constant dense<0.000000e+00> : vector<32xf32>
    %240 = vector.multi_reduction <add>, %231, %cst_68 [1] : vector<32x32xf32> to vector<32xf32>
    %241 = vector.shape_cast %240 : vector<32xf32> to vector<32x1xf32>
    %cst_69 = arith.constant 3.200000e+01 : f32
    %242 = vector.broadcast %cst_69 : f32 to vector<32x1xf32>
    %243 = arith.divf %241, %242 : vector<32x1xf32>
    %244 = vector.broadcast %243 : vector<32x1xf32> to vector<32x32xf32>
    %245 = arith.subf %231, %244 : vector<32x32xf32>
    %246 = arith.mulf %245, %245 : vector<32x32xf32>
    %cst_70 = arith.constant dense<0.000000e+00> : vector<32xf32>
    %247 = vector.multi_reduction <add>, %246, %cst_70 [1] : vector<32x32xf32> to vector<32xf32>
    %248 = vector.shape_cast %247 : vector<32xf32> to vector<32x1xf32>
    %cst_71 = arith.constant 3.200000e+01 : f32
    %249 = vector.broadcast %cst_71 : f32 to vector<32x1xf32>
    %250 = arith.divf %248, %249 : vector<32x1xf32>
    %251 = vector.broadcast %243 : vector<32x1xf32> to vector<32x32xf32>
    %252 = arith.subf %231, %251 : vector<32x32xf32>
    %cst_72 = arith.constant 9.99999997E-7 : f32
    %253 = vector.broadcast %cst_72 : f32 to vector<32x1xf32>
    %254 = arith.addf %250, %253 : vector<32x1xf32>
    %255 = math.rsqrt %254 : vector<32x1xf32>
    %256 = vector.broadcast %255 : vector<32x1xf32> to vector<32x32xf32>
    %257 = arith.mulf %252, %256 : vector<32x32xf32>
    %258 = vector.broadcast %232 : vector<1x32xf32> to vector<32x32xf32>
    %259 = arith.mulf %257, %258 : vector<32x32xf32>
    %260 = vector.broadcast %233 : vector<1x32xf32> to vector<32x32xf32>
    %261 = arith.addf %259, %260 : vector<32x32xf32>
    %262 = arith.truncf %261 : vector<32x32xf32> to vector<32x32xbf16>
    %c0_73 = arith.constant 0 : index
    %c0_74 = arith.constant 0 : index
    %263 = vector.load %arg8[%c0_73, %c0_74] : memref<32x96xbf16, #tpu.memory_space<vmem>>, vector<32x96xbf16>
    %cst_75 = arith.constant dense<0.000000e+00> : vector<32x96xf32>
    %264 = tpu.matmul %262, %263, %cst_75 {dimension_numbers = #tpu.dot_dimension_numbers<[1], [0], [0], [1], [0, 0, 1, 1], [], []>} : vector<32x32xbf16>, vector<32x96xbf16>, vector<32x96xf32> -> vector<32x96xf32>
    %265 = vector.broadcast %234 : vector<1x96xf32> to vector<32x96xf32>
    %266 = arith.addf %264, %265 : vector<32x96xf32>
    %267 = vector.extract_strided_slice %266 {offsets = [0, 0], sizes = [32, 8], strides = [1, 1]} : vector<32x96xf32> to vector<32x8xf32>
    %268 = arith.truncf %267 : vector<32x8xf32> to vector<32x8xbf16>
    %269 = vector.extract_strided_slice %266 {offsets = [0, 32], sizes = [32, 8], strides = [1, 1]} : vector<32x96xf32> to vector<32x8xf32>
    %270 = arith.truncf %269 : vector<32x8xf32> to vector<32x8xbf16>
    %271 = vector.extract_strided_slice %266 {offsets = [0, 64], sizes = [32, 8], strides = [1, 1]} : vector<32x96xf32> to vector<32x8xf32>
    %272 = arith.truncf %271 : vector<32x8xf32> to vector<32x8xbf16>
    %273 = tpu.transpose %270, [1, 0] : vector<32x8xbf16> -> vector<8x32xbf16>
    %cst_76 = arith.constant dense<0.000000e+00> : vector<32x32xf32>
    %274 = tpu.matmul %268, %273, %cst_76 {dimension_numbers = #tpu.dot_dimension_numbers<[1], [0], [0], [1], [0, 0, 1, 1], [], []>} : vector<32x8xbf16>, vector<8x32xbf16>, vector<32x32xf32> -> vector<32x32xf32>
    %cst_77 = arith.constant 0.353553385 : f32
    %275 = vector.broadcast %cst_77 : f32 to vector<32x32xf32>
    %276 = arith.mulf %274, %275 : vector<32x32xf32>
    %cst_78 = arith.constant -1.000000e+30 : f32
    %277 = vector.broadcast %cst_78 : f32 to vector<32x32xf32>
    %278 = arith.select %24, %276, %277 : vector<32x32xi1>, vector<32x32xf32>
    %cst_79 = arith.constant dense<0xFF800000> : vector<32xf32>
    %279 = vector.multi_reduction <maximumf>, %278, %cst_79 [1] : vector<32x32xf32> to vector<32xf32>
    %280 = vector.shape_cast %279 : vector<32xf32> to vector<32x1xf32>
    %281 = vector.broadcast %280 : vector<32x1xf32> to vector<32x32xf32>
    %282 = arith.subf %278, %281 : vector<32x32xf32>
    %283 = math.exp %282 : vector<32x32xf32>
    %cst_80 = arith.constant dense<0.000000e+00> : vector<32xf32>
    %284 = vector.multi_reduction <add>, %283, %cst_80 [1] : vector<32x32xf32> to vector<32xf32>
    %285 = vector.shape_cast %284 : vector<32xf32> to vector<32x1xf32>
    %286 = vector.broadcast %285 : vector<32x1xf32> to vector<32x32xf32>
    %287 = arith.divf %283, %286 : vector<32x32xf32>
    %288 = arith.truncf %287 : vector<32x32xf32> to vector<32x32xbf16>
    %cst_81 = arith.constant dense<0.000000e+00> : vector<32x8xf32>
    %289 = tpu.matmul %288, %272, %cst_81 {dimension_numbers = #tpu.dot_dimension_numbers<[1], [0], [0], [1], [0, 0, 1, 1], [], []>} : vector<32x32xbf16>, vector<32x8xbf16>, vector<32x8xf32> -> vector<32x8xf32>
    %290 = vector.extract_strided_slice %266 {offsets = [0, 8], sizes = [32, 8], strides = [1, 1]} : vector<32x96xf32> to vector<32x8xf32>
    %291 = arith.truncf %290 : vector<32x8xf32> to vector<32x8xbf16>
    %292 = vector.extract_strided_slice %266 {offsets = [0, 40], sizes = [32, 8], strides = [1, 1]} : vector<32x96xf32> to vector<32x8xf32>
    %293 = arith.truncf %292 : vector<32x8xf32> to vector<32x8xbf16>
    %294 = vector.extract_strided_slice %266 {offsets = [0, 72], sizes = [32, 8], strides = [1, 1]} : vector<32x96xf32> to vector<32x8xf32>
    %295 = arith.truncf %294 : vector<32x8xf32> to vector<32x8xbf16>
    %296 = tpu.transpose %293, [1, 0] : vector<32x8xbf16> -> vector<8x32xbf16>
    %cst_82 = arith.constant dense<0.000000e+00> : vector<32x32xf32>
    %297 = tpu.matmul %291, %296, %cst_82 {dimension_numbers = #tpu.dot_dimension_numbers<[1], [0], [0], [1], [0, 0, 1, 1], [], []>} : vector<32x8xbf16>, vector<8x32xbf16>, vector<32x32xf32> -> vector<32x32xf32>
    %cst_83 = arith.constant 0.353553385 : f32
    %298 = vector.broadcast %cst_83 : f32 to vector<32x32xf32>
    %299 = arith.mulf %297, %298 : vector<32x32xf32>
    %cst_84 = arith.constant -1.000000e+30 : f32
    %300 = vector.broadcast %cst_84 : f32 to vector<32x32xf32>
    %301 = arith.select %24, %299, %300 : vector<32x32xi1>, vector<32x32xf32>
    %cst_85 = arith.constant dense<0xFF800000> : vector<32xf32>
    %302 = vector.multi_reduction <maximumf>, %301, %cst_85 [1] : vector<32x32xf32> to vector<32xf32>
    %303 = vector.shape_cast %302 : vector<32xf32> to vector<32x1xf32>
    %304 = vector.broadcast %303 : vector<32x1xf32> to vector<32x32xf32>
    %305 = arith.subf %301, %304 : vector<32x32xf32>
    %306 = math.exp %305 : vector<32x32xf32>
    %cst_86 = arith.constant dense<0.000000e+00> : vector<32xf32>
    %307 = vector.multi_reduction <add>, %306, %cst_86 [1] : vector<32x32xf32> to vector<32xf32>
    %308 = vector.shape_cast %307 : vector<32xf32> to vector<32x1xf32>
    %309 = vector.broadcast %308 : vector<32x1xf32> to vector<32x32xf32>
    %310 = arith.divf %306, %309 : vector<32x32xf32>
    %311 = arith.truncf %310 : vector<32x32xf32> to vector<32x32xbf16>
    %cst_87 = arith.constant dense<0.000000e+00> : vector<32x8xf32>
    %312 = tpu.matmul %311, %295, %cst_87 {dimension_numbers = #tpu.dot_dimension_numbers<[1], [0], [0], [1], [0, 0, 1, 1], [], []>} : vector<32x32xbf16>, vector<32x8xbf16>, vector<32x8xf32> -> vector<32x8xf32>
    %313 = vector.extract_strided_slice %266 {offsets = [0, 16], sizes = [32, 8], strides = [1, 1]} : vector<32x96xf32> to vector<32x8xf32>
    %314 = arith.truncf %313 : vector<32x8xf32> to vector<32x8xbf16>
    %315 = vector.extract_strided_slice %266 {offsets = [0, 48], sizes = [32, 8], strides = [1, 1]} : vector<32x96xf32> to vector<32x8xf32>
    %316 = arith.truncf %315 : vector<32x8xf32> to vector<32x8xbf16>
    %317 = vector.extract_strided_slice %266 {offsets = [0, 80], sizes = [32, 8], strides = [1, 1]} : vector<32x96xf32> to vector<32x8xf32>
    %318 = arith.truncf %317 : vector<32x8xf32> to vector<32x8xbf16>
    %319 = tpu.transpose %316, [1, 0] : vector<32x8xbf16> -> vector<8x32xbf16>
    %cst_88 = arith.constant dense<0.000000e+00> : vector<32x32xf32>
    %320 = tpu.matmul %314, %319, %cst_88 {dimension_numbers = #tpu.dot_dimension_numbers<[1], [0], [0], [1], [0, 0, 1, 1], [], []>} : vector<32x8xbf16>, vector<8x32xbf16>, vector<32x32xf32> -> vector<32x32xf32>
    %cst_89 = arith.constant 0.353553385 : f32
    %321 = vector.broadcast %cst_89 : f32 to vector<32x32xf32>
    %322 = arith.mulf %320, %321 : vector<32x32xf32>
    %cst_90 = arith.constant -1.000000e+30 : f32
    %323 = vector.broadcast %cst_90 : f32 to vector<32x32xf32>
    %324 = arith.select %24, %322, %323 : vector<32x32xi1>, vector<32x32xf32>
    %cst_91 = arith.constant dense<0xFF800000> : vector<32xf32>
    %325 = vector.multi_reduction <maximumf>, %324, %cst_91 [1] : vector<32x32xf32> to vector<32xf32>
    %326 = vector.shape_cast %325 : vector<32xf32> to vector<32x1xf32>
    %327 = vector.broadcast %326 : vector<32x1xf32> to vector<32x32xf32>
    %328 = arith.subf %324, %327 : vector<32x32xf32>
    %329 = math.exp %328 : vector<32x32xf32>
    %cst_92 = arith.constant dense<0.000000e+00> : vector<32xf32>
    %330 = vector.multi_reduction <add>, %329, %cst_92 [1] : vector<32x32xf32> to vector<32xf32>
    %331 = vector.shape_cast %330 : vector<32xf32> to vector<32x1xf32>
    %332 = vector.broadcast %331 : vector<32x1xf32> to vector<32x32xf32>
    %333 = arith.divf %329, %332 : vector<32x32xf32>
    %334 = arith.truncf %333 : vector<32x32xf32> to vector<32x32xbf16>
    %cst_93 = arith.constant dense<0.000000e+00> : vector<32x8xf32>
    %335 = tpu.matmul %334, %318, %cst_93 {dimension_numbers = #tpu.dot_dimension_numbers<[1], [0], [0], [1], [0, 0, 1, 1], [], []>} : vector<32x32xbf16>, vector<32x8xbf16>, vector<32x8xf32> -> vector<32x8xf32>
    %336 = vector.extract_strided_slice %266 {offsets = [0, 24], sizes = [32, 8], strides = [1, 1]} : vector<32x96xf32> to vector<32x8xf32>
    %337 = arith.truncf %336 : vector<32x8xf32> to vector<32x8xbf16>
    %338 = vector.extract_strided_slice %266 {offsets = [0, 56], sizes = [32, 8], strides = [1, 1]} : vector<32x96xf32> to vector<32x8xf32>
    %339 = arith.truncf %338 : vector<32x8xf32> to vector<32x8xbf16>
    %340 = vector.extract_strided_slice %266 {offsets = [0, 88], sizes = [32, 8], strides = [1, 1]} : vector<32x96xf32> to vector<32x8xf32>
    %341 = arith.truncf %340 : vector<32x8xf32> to vector<32x8xbf16>
    %342 = tpu.transpose %339, [1, 0] : vector<32x8xbf16> -> vector<8x32xbf16>
    %cst_94 = arith.constant dense<0.000000e+00> : vector<32x32xf32>
    %343 = tpu.matmul %337, %342, %cst_94 {dimension_numbers = #tpu.dot_dimension_numbers<[1], [0], [0], [1], [0, 0, 1, 1], [], []>} : vector<32x8xbf16>, vector<8x32xbf16>, vector<32x32xf32> -> vector<32x32xf32>
    %cst_95 = arith.constant 0.353553385 : f32
    %344 = vector.broadcast %cst_95 : f32 to vector<32x32xf32>
    %345 = arith.mulf %343, %344 : vector<32x32xf32>
    %cst_96 = arith.constant -1.000000e+30 : f32
    %346 = vector.broadcast %cst_96 : f32 to vector<32x32xf32>
    %347 = arith.select %24, %345, %346 : vector<32x32xi1>, vector<32x32xf32>
    %cst_97 = arith.constant dense<0xFF800000> : vector<32xf32>
    %348 = vector.multi_reduction <maximumf>, %347, %cst_97 [1] : vector<32x32xf32> to vector<32xf32>
    %349 = vector.shape_cast %348 : vector<32xf32> to vector<32x1xf32>
    %350 = vector.broadcast %349 : vector<32x1xf32> to vector<32x32xf32>
    %351 = arith.subf %347, %350 : vector<32x32xf32>
    %352 = math.exp %351 : vector<32x32xf32>
    %cst_98 = arith.constant dense<0.000000e+00> : vector<32xf32>
    %353 = vector.multi_reduction <add>, %352, %cst_98 [1] : vector<32x32xf32> to vector<32xf32>
    %354 = vector.shape_cast %353 : vector<32xf32> to vector<32x1xf32>
    %355 = vector.broadcast %354 : vector<32x1xf32> to vector<32x32xf32>
    %356 = arith.divf %352, %355 : vector<32x32xf32>
    %357 = arith.truncf %356 : vector<32x32xf32> to vector<32x32xbf16>
    %cst_99 = arith.constant dense<0.000000e+00> : vector<32x8xf32>
    %358 = tpu.matmul %357, %341, %cst_99 {dimension_numbers = #tpu.dot_dimension_numbers<[1], [0], [0], [1], [0, 0, 1, 1], [], []>} : vector<32x32xbf16>, vector<32x8xbf16>, vector<32x8xf32> -> vector<32x8xf32>
    %359 = tpu.concatenate %289, %312, %335, %358 in 1 : vector<32x8xf32>, vector<32x8xf32>, vector<32x8xf32>, vector<32x8xf32> -> vector<32x32xf32>
    %360 = arith.truncf %359 : vector<32x32xf32> to vector<32x32xbf16>
    %c0_100 = arith.constant 0 : index
    %c0_101 = arith.constant 0 : index
    %361 = vector.load %arg9[%c0_100, %c0_101] : memref<32x32xbf16, #tpu.memory_space<vmem>>, vector<32x32xbf16>
    %cst_102 = arith.constant dense<0.000000e+00> : vector<32x32xf32>
    %362 = tpu.matmul %360, %361, %cst_102 {dimension_numbers = #tpu.dot_dimension_numbers<[1], [0], [0], [1], [0, 0, 1, 1], [], []>} : vector<32x32xbf16>, vector<32x32xbf16>, vector<32x32xf32> -> vector<32x32xf32>
    %363 = arith.addf %231, %362 : vector<32x32xf32>
    %364 = vector.broadcast %235 : vector<1x32xf32> to vector<32x32xf32>
    %365 = arith.addf %363, %364 : vector<32x32xf32>
    %cst_103 = arith.constant dense<0.000000e+00> : vector<32xf32>
    %366 = vector.multi_reduction <add>, %365, %cst_103 [1] : vector<32x32xf32> to vector<32xf32>
    %367 = vector.shape_cast %366 : vector<32xf32> to vector<32x1xf32>
    %cst_104 = arith.constant 3.200000e+01 : f32
    %368 = vector.broadcast %cst_104 : f32 to vector<32x1xf32>
    %369 = arith.divf %367, %368 : vector<32x1xf32>
    %370 = vector.broadcast %369 : vector<32x1xf32> to vector<32x32xf32>
    %371 = arith.subf %365, %370 : vector<32x32xf32>
    %372 = arith.mulf %371, %371 : vector<32x32xf32>
    %cst_105 = arith.constant dense<0.000000e+00> : vector<32xf32>
    %373 = vector.multi_reduction <add>, %372, %cst_105 [1] : vector<32x32xf32> to vector<32xf32>
    %374 = vector.shape_cast %373 : vector<32xf32> to vector<32x1xf32>
    %cst_106 = arith.constant 3.200000e+01 : f32
    %375 = vector.broadcast %cst_106 : f32 to vector<32x1xf32>
    %376 = arith.divf %374, %375 : vector<32x1xf32>
    %377 = vector.broadcast %369 : vector<32x1xf32> to vector<32x32xf32>
    %378 = arith.subf %365, %377 : vector<32x32xf32>
    %cst_107 = arith.constant 9.99999997E-7 : f32
    %379 = vector.broadcast %cst_107 : f32 to vector<32x1xf32>
    %380 = arith.addf %376, %379 : vector<32x1xf32>
    %381 = math.rsqrt %380 : vector<32x1xf32>
    %382 = vector.broadcast %381 : vector<32x1xf32> to vector<32x32xf32>
    %383 = arith.mulf %378, %382 : vector<32x32xf32>
    %384 = vector.broadcast %236 : vector<1x32xf32> to vector<32x32xf32>
    %385 = arith.mulf %383, %384 : vector<32x32xf32>
    %386 = vector.broadcast %237 : vector<1x32xf32> to vector<32x32xf32>
    %387 = arith.addf %385, %386 : vector<32x32xf32>
    %388 = arith.truncf %387 : vector<32x32xf32> to vector<32x32xbf16>
    %c0_108 = arith.constant 0 : index
    %c0_109 = arith.constant 0 : index
    %389 = vector.load %arg10[%c0_108, %c0_109] : memref<32x128xbf16, #tpu.memory_space<vmem>>, vector<32x128xbf16>
    %cst_110 = arith.constant dense<0.000000e+00> : vector<32x128xf32>
    %390 = tpu.matmul %388, %389, %cst_110 {dimension_numbers = #tpu.dot_dimension_numbers<[1], [0], [0], [1], [0, 0, 1, 1], [], []>} : vector<32x32xbf16>, vector<32x128xbf16>, vector<32x128xf32> -> vector<32x128xf32>
    %391 = vector.broadcast %238 : vector<1x128xf32> to vector<32x128xf32>
    %392 = arith.addf %390, %391 : vector<32x128xf32>
    %cst_111 = arith.constant 5.000000e-01 : f32
    %393 = vector.broadcast %cst_111 : f32 to vector<32x128xf32>
    %394 = arith.mulf %393, %392 : vector<32x128xf32>
    %cst_112 = arith.constant 0.707106769 : f32
    %395 = vector.broadcast %cst_112 : f32 to vector<32x128xf32>
    %396 = arith.mulf %392, %395 : vector<32x128xf32>
    %397 = math.absf %396 : vector<32x128xf32>
    %cst_113 = arith.constant 0.327591091 : f32
    %398 = vector.broadcast %cst_113 : f32 to vector<32x128xf32>
    %399 = arith.mulf %398, %397 : vector<32x128xf32>
    %cst_114 = arith.constant 1.000000e+00 : f32
    %400 = vector.broadcast %cst_114 : f32 to vector<32x128xf32>
    %401 = arith.addf %400, %399 : vector<32x128xf32>
    %cst_115 = arith.constant 1.000000e+00 : f32
    %402 = vector.broadcast %cst_115 : f32 to vector<32x128xf32>
    %403 = arith.divf %402, %401 : vector<32x128xf32>
    %cst_116 = arith.constant 1.06140542 : f32
    %404 = vector.broadcast %cst_116 : f32 to vector<32x128xf32>
    %405 = arith.mulf %404, %403 : vector<32x128xf32>
    %cst_117 = arith.constant -1.45315206 : f32
    %406 = vector.broadcast %cst_117 : f32 to vector<32x128xf32>
    %407 = arith.addf %405, %406 : vector<32x128xf32>
    %408 = arith.mulf %407, %403 : vector<32x128xf32>
    %cst_118 = arith.constant 1.42141378 : f32
    %409 = vector.broadcast %cst_118 : f32 to vector<32x128xf32>
    %410 = arith.addf %408, %409 : vector<32x128xf32>
    %411 = arith.mulf %410, %403 : vector<32x128xf32>
    %cst_119 = arith.constant -0.284496725 : f32
    %412 = vector.broadcast %cst_119 : f32 to vector<32x128xf32>
    %413 = arith.addf %411, %412 : vector<32x128xf32>
    %414 = arith.mulf %413, %403 : vector<32x128xf32>
    %cst_120 = arith.constant 0.254829586 : f32
    %415 = vector.broadcast %cst_120 : f32 to vector<32x128xf32>
    %416 = arith.addf %414, %415 : vector<32x128xf32>
    %417 = arith.mulf %416, %403 : vector<32x128xf32>
    %cst_121 = arith.constant 0.000000e+00 : f32
    %418 = vector.broadcast %cst_121 : f32 to vector<32x128xf32>
    %419 = arith.subf %418, %397 : vector<32x128xf32>
    %420 = arith.mulf %419, %397 : vector<32x128xf32>
    %421 = math.exp %420 : vector<32x128xf32>
    %422 = arith.mulf %417, %421 : vector<32x128xf32>
    %cst_122 = arith.constant 1.000000e+00 : f32
    %423 = vector.broadcast %cst_122 : f32 to vector<32x128xf32>
    %424 = arith.subf %423, %422 : vector<32x128xf32>
    %cst_123 = arith.constant 0.000000e+00 : f32
    %425 = vector.broadcast %cst_123 : f32 to vector<32x128xf32>
    %426 = arith.cmpf oge, %396, %425 : vector<32x128xf32>
    %cst_124 = arith.constant 0.000000e+00 : f32
    %427 = vector.broadcast %cst_124 : f32 to vector<32x128xf32>
    %428 = arith.subf %427, %424 : vector<32x128xf32>
    %429 = arith.select %426, %424, %428 : vector<32x128xi1>, vector<32x128xf32>
    %cst_125 = arith.constant 1.000000e+00 : f32
    %430 = vector.broadcast %cst_125 : f32 to vector<32x128xf32>
    %431 = arith.addf %430, %429 : vector<32x128xf32>
    %432 = arith.mulf %394, %431 : vector<32x128xf32>
    %433 = arith.truncf %432 : vector<32x128xf32> to vector<32x128xbf16>
    %c0_126 = arith.constant 0 : index
    %c0_127 = arith.constant 0 : index
    %434 = vector.load %arg11[%c0_126, %c0_127] : memref<128x32xbf16, #tpu.memory_space<vmem>>, vector<128x32xbf16>
    %cst_128 = arith.constant dense<0.000000e+00> : vector<32x32xf32>
    %435 = tpu.matmul %433, %434, %cst_128 {dimension_numbers = #tpu.dot_dimension_numbers<[1], [0], [0], [1], [0, 0, 1, 1], [], []>} : vector<32x128xbf16>, vector<128x32xbf16>, vector<32x32xf32> -> vector<32x32xf32>
    %436 = arith.addf %365, %435 : vector<32x32xf32>
    %437 = vector.broadcast %239 : vector<1x32xf32> to vector<32x32xf32>
    %438 = arith.addf %436, %437 : vector<32x32xf32>
    %439 = tpu.iota {dimensions = array<i32: 0>} : vector<8x32xi32>
    %c0_i32 = arith.constant 0 : i32
    %440 = vector.broadcast %c0_i32 : i32 to vector<8x32xi32>
    %441 = arith.cmpi eq, %439, %440 : vector<8x32xi32>
    %442 = arith.extui %441 : vector<8x32xi1> to vector<8x32xi32>
    %443 = arith.sitofp %442 : vector<8x32xi32> to vector<8x32xf32>
    %444 = vector.shape_cast %443 : vector<8x32xf32> to vector<1x8x32xf32>
    %c1_i32 = arith.constant 1 : i32
    %445 = vector.broadcast %c1_i32 : i32 to vector<8x32xi32>
    %446 = arith.cmpi sge, %439, %445 : vector<8x32xi32>
    %c5_i32_129 = arith.constant 5 : i32
    %447 = vector.broadcast %c5_i32_129 : i32 to vector<8x32xi32>
    %448 = arith.cmpi slt, %439, %447 : vector<8x32xi32>
    %449 = arith.andi %446, %448 : vector<8x32xi1>
    %450 = arith.extui %449 : vector<8x32xi1> to vector<8x32xi32>
    %451 = arith.sitofp %450 : vector<8x32xi32> to vector<8x32xf32>
    %cst_130 = arith.constant 2.500000e-01 : f32
    %452 = vector.broadcast %cst_130 : f32 to vector<8x32xf32>
    %453 = arith.mulf %451, %452 : vector<8x32xf32>
    %454 = vector.shape_cast %453 : vector<8x32xf32> to vector<1x8x32xf32>
    %cst_131 = arith.constant dense<0.000000e+00> : vector<32xf32>
    %455 = vector.multi_reduction <add>, %231, %cst_131 [1] : vector<32x32xf32> to vector<32xf32>
    %456 = vector.shape_cast %455 : vector<32xf32> to vector<32x1xf32>
    %cst_132 = arith.constant 3.200000e+01 : f32
    %457 = vector.broadcast %cst_132 : f32 to vector<32x1xf32>
    %458 = arith.divf %456, %457 : vector<32x1xf32>
    %459 = vector.broadcast %458 : vector<32x1xf32> to vector<32x32xf32>
    %460 = arith.subf %231, %459 : vector<32x32xf32>
    %461 = arith.mulf %460, %460 : vector<32x32xf32>
    %cst_133 = arith.constant dense<0.000000e+00> : vector<32xf32>
    %462 = vector.multi_reduction <add>, %461, %cst_133 [1] : vector<32x32xf32> to vector<32xf32>
    %463 = vector.shape_cast %462 : vector<32xf32> to vector<32x1xf32>
    %cst_134 = arith.constant 3.200000e+01 : f32
    %464 = vector.broadcast %cst_134 : f32 to vector<32x1xf32>
    %465 = arith.divf %463, %464 : vector<32x1xf32>
    %466 = vector.broadcast %458 : vector<32x1xf32> to vector<32x32xf32>
    %467 = arith.subf %231, %466 : vector<32x32xf32>
    %cst_135 = arith.constant 9.99999997E-7 : f32
    %468 = vector.broadcast %cst_135 : f32 to vector<32x1xf32>
    %469 = arith.addf %465, %468 : vector<32x1xf32>
    %470 = math.rsqrt %469 : vector<32x1xf32>
    %471 = vector.broadcast %470 : vector<32x1xf32> to vector<32x32xf32>
    %472 = arith.mulf %467, %471 : vector<32x32xf32>
    %473 = vector.broadcast %2 : vector<1x32xf32> to vector<32x32xf32>
    %474 = arith.mulf %472, %473 : vector<32x32xf32>
    %475 = vector.broadcast %3 : vector<1x32xf32> to vector<32x32xf32>
    %476 = arith.addf %474, %475 : vector<32x32xf32>
    %477 = vector.shape_cast %476 : vector<32x32xf32> to vector<4x8x32xf32>
    %478 = vector.broadcast %444 : vector<1x8x32xf32> to vector<4x8x32xf32>
    %479 = arith.mulf %477, %478 : vector<4x8x32xf32>
    %cst_136 = arith.constant dense<0.000000e+00> : vector<4x32xf32>
    %480 = vector.multi_reduction <add>, %479, %cst_136 [1] : vector<4x8x32xf32> to vector<4x32xf32>
    %481 = vector.broadcast %454 : vector<1x8x32xf32> to vector<4x8x32xf32>
    %482 = arith.mulf %477, %481 : vector<4x8x32xf32>
    %cst_137 = arith.constant dense<0.000000e+00> : vector<4x32xf32>
    %483 = vector.multi_reduction <add>, %482, %cst_137 [1] : vector<4x8x32xf32> to vector<4x32xf32>
    %cst_138 = arith.constant dense<0.000000e+00> : vector<32xf32>
    %484 = vector.multi_reduction <add>, %438, %cst_138 [1] : vector<32x32xf32> to vector<32xf32>
    %485 = vector.shape_cast %484 : vector<32xf32> to vector<32x1xf32>
    %cst_139 = arith.constant 3.200000e+01 : f32
    %486 = vector.broadcast %cst_139 : f32 to vector<32x1xf32>
    %487 = arith.divf %485, %486 : vector<32x1xf32>
    %488 = vector.broadcast %487 : vector<32x1xf32> to vector<32x32xf32>
    %489 = arith.subf %438, %488 : vector<32x32xf32>
    %490 = arith.mulf %489, %489 : vector<32x32xf32>
    %cst_140 = arith.constant dense<0.000000e+00> : vector<32xf32>
    %491 = vector.multi_reduction <add>, %490, %cst_140 [1] : vector<32x32xf32> to vector<32xf32>
    %492 = vector.shape_cast %491 : vector<32xf32> to vector<32x1xf32>
    %cst_141 = arith.constant 3.200000e+01 : f32
    %493 = vector.broadcast %cst_141 : f32 to vector<32x1xf32>
    %494 = arith.divf %492, %493 : vector<32x1xf32>
    %495 = vector.broadcast %487 : vector<32x1xf32> to vector<32x32xf32>
    %496 = arith.subf %438, %495 : vector<32x32xf32>
    %cst_142 = arith.constant 9.99999997E-7 : f32
    %497 = vector.broadcast %cst_142 : f32 to vector<32x1xf32>
    %498 = arith.addf %494, %497 : vector<32x1xf32>
    %499 = math.rsqrt %498 : vector<32x1xf32>
    %500 = vector.broadcast %499 : vector<32x1xf32> to vector<32x32xf32>
    %501 = arith.mulf %496, %500 : vector<32x32xf32>
    %502 = vector.broadcast %2 : vector<1x32xf32> to vector<32x32xf32>
    %503 = arith.mulf %501, %502 : vector<32x32xf32>
    %504 = vector.broadcast %3 : vector<1x32xf32> to vector<32x32xf32>
    %505 = arith.addf %503, %504 : vector<32x32xf32>
    %506 = vector.shape_cast %505 : vector<32x32xf32> to vector<4x8x32xf32>
    %507 = vector.broadcast %444 : vector<1x8x32xf32> to vector<4x8x32xf32>
    %508 = arith.mulf %506, %507 : vector<4x8x32xf32>
    %cst_143 = arith.constant dense<0.000000e+00> : vector<4x32xf32>
    %509 = vector.multi_reduction <add>, %508, %cst_143 [1] : vector<4x8x32xf32> to vector<4x32xf32>
    %510 = vector.broadcast %454 : vector<1x8x32xf32> to vector<4x8x32xf32>
    %511 = arith.mulf %506, %510 : vector<4x8x32xf32>
    %cst_144 = arith.constant dense<0.000000e+00> : vector<4x32xf32>
    %512 = vector.multi_reduction <add>, %511, %cst_144 [1] : vector<4x8x32xf32> to vector<4x32xf32>
    %513 = tpu.concatenate %480, %483, %509, %512 in 1 : vector<4x32xf32>, vector<4x32xf32>, vector<4x32xf32>, vector<4x32xf32> -> vector<4x128xf32>
    %c0_145 = arith.constant 0 : index
    %c0_146 = arith.constant 0 : index
    %514 = vector.load %arg12[%c0_145, %c0_146] : memref<4x128xf32, #tpu.memory_space<vmem>>, vector<4x128xf32>
    tpu.vector_store %arg12[%c0_145, %c0_146], %513 {strides = array<i32>} : memref<4x128xf32, #tpu.memory_space<vmem>>, vector<4x128xf32>,
    return
  }
  func.func @transform_0(%arg0: i32) -> (i32, i32, i32) {
    %c0_i32 = arith.constant 0 : i32
    %c0_i32_0 = arith.constant 0 : i32
    %c0_i32_1 = arith.constant 0 : i32
    return %arg0, %c0_i32, %c0_i32_0 : i32, i32, i32
  }
  func.func @transform_1(%arg0: i32) -> (i32, i32) {
    %c0_i32 = arith.constant 0 : i32
    %c0_i32_0 = arith.constant 0 : i32
    %c0_i32_1 = arith.constant 0 : i32
    return %c0_i32, %c0_i32_0 : i32, i32
  }
  func.func @transform_2(%arg0: i32) -> (i32, i32) {
    %c0_i32 = arith.constant 0 : i32
    %c0_i32_0 = arith.constant 0 : i32
    %c0_i32_1 = arith.constant 0 : i32
    return %c0_i32, %c0_i32_0 : i32, i32
  }
  func.func @transform_3(%arg0: i32) -> (i32, i32) {
    %c0_i32 = arith.constant 0 : i32
    %c0_i32_0 = arith.constant 0 : i32
    %c0_i32_1 = arith.constant 0 : i32
    return %c0_i32, %c0_i32_0 : i32, i32
  }
  func.func @transform_4(%arg0: i32) -> (i32, i32) {
    %c0_i32 = arith.constant 0 : i32
    %c0_i32_0 = arith.constant 0 : i32
    %c0_i32_1 = arith.constant 0 : i32
    return %c0_i32, %c0_i32_0 : i32, i32
  }
  func.func @transform_5(%arg0: i32) -> (i32, i32) {
    %c0_i32 = arith.constant 0 : i32
    %c0_i32_0 = arith.constant 0 : i32
    %c0_i32_1 = arith.constant 0 : i32
    return %c0_i32, %c0_i32_0 : i32, i32
  }
  func.func @transform_6(%arg0: i32) -> (i32, i32) {
    %c0_i32 = arith.constant 0 : i32
    %c0_i32_0 = arith.constant 0 : i32
    %c0_i32_1 = arith.constant 0 : i32
    return %c0_i32, %c0_i32_0 : i32, i32
  }
  func.func @transform_7(%arg0: i32) -> (i32, i32) {
    %c0_i32 = arith.constant 0 : i32
    %c0_i32_0 = arith.constant 0 : i32
    %c0_i32_1 = arith.constant 0 : i32
    return %c0_i32, %c0_i32_0 : i32, i32
  }
  func.func @transform_8(%arg0: i32) -> (i32, i32) {
    %c0_i32 = arith.constant 0 : i32
    %c0_i32_0 = arith.constant 0 : i32
    %c0_i32_1 = arith.constant 0 : i32
    return %c0_i32, %c0_i32_0 : i32, i32
  }
  func.func @transform_9(%arg0: i32) -> (i32, i32) {
    %c0_i32 = arith.constant 0 : i32
    %c0_i32_0 = arith.constant 0 : i32
    %c0_i32_1 = arith.constant 0 : i32
    return %c0_i32, %c0_i32_0 : i32, i32
  }
  func.func @transform_10(%arg0: i32) -> (i32, i32) {
    %c0_i32 = arith.constant 0 : i32
    %c0_i32_0 = arith.constant 0 : i32
    %c0_i32_1 = arith.constant 0 : i32
    return %c0_i32, %c0_i32_0 : i32, i32
  }
  func.func @transform_11(%arg0: i32) -> (i32, i32) {
    %c0_i32 = arith.constant 0 : i32
    %c0_i32_0 = arith.constant 0 : i32
    return %arg0, %c0_i32 : i32, i32
  }
}

</mosaic_0001>

<llo_original>
// kernel: pretrained_encoder_forward.1
$region0: #{pretrained_encoder_forward.1}
  #allocation0 [shape = 'u32[]', space=smem, size = 0x4, offset = 0x4, fixed_abs, tag = 'smem constant byte address 0x4 - core index']
  #allocation1 [shape = 'u32[144,128]{1,0:T(1,128)}', space=vmem, size = 0x12000, scoped, tag = 'internal scratch']
  %s0 = inlined_call_operand.vmem [shape: bf16[4,8,64], index: 0, kind: input, shape index: {}]
  %s1 = inlined_call_operand.vmem [shape: f32[32,128], index: 1, kind: input, shape index: {}]
  %s2 = inlined_call_operand.vmem [shape: bf16[64,32], index: 2, kind: input, shape index: {}]
  %s3 = inlined_call_operand.vmem [shape: bf16[32,96], index: 3, kind: input, shape index: {}]
  %s4 = inlined_call_operand.vmem [shape: bf16[32,32], index: 4, kind: input, shape index: {}]
  %s5 = inlined_call_operand.vmem [shape: bf16[32,128], index: 5, kind: input, shape index: {}]
  %s6 = inlined_call_operand.vmem [shape: bf16[128,32], index: 6, kind: input, shape index: {}]
  %s7 = inlined_call_operand.vmem [shape: bf16[32,96], index: 7, kind: input, shape index: {}]
  %s8 = inlined_call_operand.vmem [shape: bf16[32,32], index: 8, kind: input, shape index: {}]
  %s9 = inlined_call_operand.vmem [shape: bf16[32,128], index: 9, kind: input, shape index: {}]
  %s10 = inlined_call_operand.vmem [shape: bf16[128,32], index: 10, kind: input, shape index: {}]
  %s11 = inlined_call_operand.vmem [shape: f32[4,128], index: 11, kind: output, shape index: {}]
  %s12 = sld [smem:[#allocation0]]
  $region54: #{pretrained_encoder_forward.1} parent=0
    _
  %s14 = ssub.s32 1, %s12
  %s15 = scalar_select 0, %s14, %s12
  // Predicated region
  $region2: #{pretrained_encoder_forward.1} parent=0 // pred_check
    _
  $region3: #{pretrained_encoder_forward.1} parent=0 // pred_check_branch
    %17 = sbr.rel (0) target = $region5
  $region4: #{pretrained_encoder_forward.1} parent=0 // pred_region
    _
  $region5: #{pretrained_encoder_forward.1} parent=0 // pred_fallthru
    _
  // Predicated region
  $region6: #{pretrained_encoder_forward.1} parent=0 // pred_check
    _
  $region7: #{pretrained_encoder_forward.1} parent=0 // pred_check_branch
    %19 = sbr.rel (0) target = $region9
  $region8: #{pretrained_encoder_forward.1} parent=0 // pred_region
    _
  $region9: #{pretrained_encoder_forward.1} parent=0 // pred_fallthru
    _
  // Predicated region
  $region10: #{pretrained_encoder_forward.1} parent=0 // pred_check
    _
  $region11: #{pretrained_encoder_forward.1} parent=0 // pred_check_branch
    %21 = sbr.rel (0) target = $region13
  $region12: #{pretrained_encoder_forward.1} parent=0 // pred_region
    _
  $region13: #{pretrained_encoder_forward.1} parent=0 // pred_fallthru
    _
  // Predicated region
  $region14: #{pretrained_encoder_forward.1} parent=0 // pred_check
    _
  $region15: #{pretrained_encoder_forward.1} parent=0 // pred_check_branch
    %23 = sbr.rel (0) target = $region17
  $region16: #{pretrained_encoder_forward.1} parent=0 // pred_region
    _
  $region17: #{pretrained_encoder_forward.1} parent=0 // pred_fallthru
    _
  // Predicated region
  $region18: #{pretrained_encoder_forward.1} parent=0 // pred_check
    _
  $region19: #{pretrained_encoder_forward.1} parent=0 // pred_check_branch
    %25 = sbr.rel (0) target = $region21
  $region20: #{pretrained_encoder_forward.1} parent=0 // pred_region
    _
  $region21: #{pretrained_encoder_forward.1} parent=0 // pred_fallthru
    _
  // Predicated region
  $region22: #{pretrained_encoder_forward.1} parent=0 // pred_check
    _
  $region23: #{pretrained_encoder_forward.1} parent=0 // pred_check_branch
    %27 = sbr.rel (0) target = $region25
  $region24: #{pretrained_encoder_forward.1} parent=0 // pred_region
    _
  $region25: #{pretrained_encoder_forward.1} parent=0 // pred_fallthru
    _
  // Predicated region
  $region26: #{pretrained_encoder_forward.1} parent=0 // pred_check
    _
  $region27: #{pretrained_encoder_forward.1} parent=0 // pred_check_branch
    %29 = sbr.rel (0) target = $region29
  $region28: #{pretrained_encoder_forward.1} parent=0 // pred_region
    _
  $region29: #{pretrained_encoder_forward.1} parent=0 // pred_fallthru
    _
  // Predicated region
  $region30: #{pretrained_encoder_forward.1} parent=0 // pred_check
    _
  $region31: #{pretrained_encoder_forward.1} parent=0 // pred_check_branch
    %31 = sbr.rel (0) target = $region33
  $region32: #{pretrained_encoder_forward.1} parent=0 // pred_region
    _
  $region33: #{pretrained_encoder_forward.1} parent=0 // pred_fallthru
    _
  // Predicated region
  $region34: #{pretrained_encoder_forward.1} parent=0 // pred_check
    _
  $region35: #{pretrained_encoder_forward.1} parent=0 // pred_check_branch
    %33 = sbr.rel (0) target = $region37
  $region36: #{pretrained_encoder_forward.1} parent=0 // pred_region
    _
  $region37: #{pretrained_encoder_forward.1} parent=0 // pred_fallthru
    _
  // Predicated region
  $region38: #{pretrained_encoder_forward.1} parent=0 // pred_check
    _
  $region39: #{pretrained_encoder_forward.1} parent=0 // pred_check_branch
    %35 = sbr.rel (0) target = $region41
  $region40: #{pretrained_encoder_forward.1} parent=0 // pred_region
    _
  $region41: #{pretrained_encoder_forward.1} parent=0 // pred_fallthru
    _
  // Predicated region
  $region42: #{pretrained_encoder_forward.1} parent=0 // pred_check
    _
  $region43: #{pretrained_encoder_forward.1} parent=0 // pred_check_branch
    %37 = sbr.rel (0) target = $region45
  $region44: #{pretrained_encoder_forward.1} parent=0 // pred_region
    _
  $region45: #{pretrained_encoder_forward.1} parent=0 // pred_fallthru
    _
  %v39 = vld [vmem:[%s1] sm:$0xff]
  %v40 = vld [vmem:[%s1 + $0x8] sm:$0xff]
  %v41 = vld [vmem:[%s1 + $0x10] sm:$0xff]
  %v42 = vld [vmem:[%s1 + $0x18] sm:$0xff]
  %v43 = vld [vmem:[%s0] sm:$0xf]
  %v44 = vld [vmem:[%s0 + $0x4] sm:$0xf]
  %v45 = vld [vmem:[%s0 + $0x8] sm:$0xf]
  %v46 = vld [vmem:[%s0 + $0xc] sm:$0xf]
  %v47 = vld [vmem:[%s2] sm:$0xf]
  %v48 = vld [vmem:[%s2 + $0x4] sm:$0xf]
  %v49 = vld [vmem:[%s2 + $0x8] sm:$0xf]
  %v50 = vld [vmem:[%s2 + $0xc] sm:$0xf]
  %v51 = vld [vmem:[%s2 + $0x10] sm:$0xf]
  %v52 = vld [vmem:[%s2 + $0x14] sm:$0xf]
  %v53 = vld [vmem:[%s2 + $0x18] sm:$0xf]
  %v54 = vld [vmem:[%s2 + $0x1c] sm:$0xf]
  %v59 = vunpack.c.l.b16 %v43
  %v60 = vunpack.c.l.b16 %v44
  %v61 = vunpack.c.l.b16 %v45
  %v62 = vunpack.c.l.b16 %v46
  %v63 = vpack.c.b16 %v60, %v59
  %v64 = vpack.c.b16 %v62, %v61
  %v73 = vunpack.c.l.b16 %v47
  %v74 = vunpack.c.l.b16 %v48
  %v75 = vunpack.c.l.b16 %v49
  %v76 = vunpack.c.l.b16 %v50
  %v77 = vunpack.c.l.b16 %v51
  %v78 = vunpack.c.l.b16 %v52
  %v79 = vunpack.c.l.b16 %v53
  %v80 = vunpack.c.l.b16 %v54
  %v81 = vpack.c.b16 %v74, %v73
  %v82 = vpack.c.b16 %v76, %v75
  %v83 = vpack.c.b16 %v78, %v77
  %v84 = vpack.c.b16 %v80, %v79
  %vm89 = vcmask 523264
  %v91 = vsel %vm89, %v63, 0
  %v94 = vsel %vm89, %v64, 0
  %96 = vmatprep.subr.bf16.mxu0 0
  %97 = vmatpush1.bf16.msra.mxu0 %v81
  %98 = vmatprep.subr.bf16.mxu0 0
  %99 = vmatpush1.bf16.msra.mxu0 %v82
  %100 = vmatprep.subr.bf16.mxu0 0
  %101 = vmatpush1.bf16.msra.mxu0 %v83
  %102 = vmatprep.subr.bf16.mxu0 0
  %103 = vmatpush1.bf16.msra.mxu0 %v84
  %104 = vmatprep.subr.bf16.mxu0 0
  %105 = vmatpush1.bf16.msra.mxu0 0
  %106 = vmatprep.subr.bf16.mxu0 0
  %107 = vmatpush1.bf16.msra.mxu0 0
  %108 = vmatprep.subr.bf16.mxu0 0
  %109 = vmatpush1.bf16.msra.mxu0 0
  %110 = vmatprep.subr.bf16.mxu0 0
  %111 = vmatpush1.bf16.msra.mxu0 0
  %112 = vmatprep.subr.bf16.mxu0 0
  %113 = vmatpush1.bf16.msra.mxu0 0
  %114 = vmatprep.subr.bf16.mxu0 0
  %115 = vmatpush1.bf16.msra.mxu0 0
  %116 = vmatprep.subr.bf16.mxu0 0
  %117 = vmatpush1.bf16.msra.mxu0 0
  %118 = vmatprep.subr.bf16.mxu0 0
  %119 = vmatpush1.bf16.msra.mxu0 0
  %120 = vmatprep.subr.bf16.mxu0 0
  %121 = vmatpush1.bf16.msra.mxu0 0
  %122 = vmatprep.subr.bf16.mxu0 0
  %123 = vmatpush1.bf16.msra.mxu0 0
  %124 = vmatprep.subr.bf16.mxu0 0
  %125 = vmatpush1.bf16.msra.mxu0 0
  %126 = vmatprep.subr.bf16.mxu0 0
  %127 = vmatpush1.bf16.msra.mxu0 0
  %128 = vmatprep.mubr.bf16.mxu0 0
  %129 = vmatmul.mubr.bf16.gmra.mrb[0].mxu0 %v91
  %v130 = vpop.f32.mrb[0].mxu0
  %v131 = vadd.f32 0.0, %v130
  %v132 = vpop.f32.mrb[0].mxu0
  %v133 = vpop.f32.mrb[0].mxu0
  %v134 = vadd.f32 0.0, %v133
  %v135 = vpop.f32.mrb[0].mxu0
  %136 = vmatprep.mubr.bf16.mxu0 0
  %137 = vmatmul.mubr.bf16.gmra.mrb[0].mxu0 %v94
  %v138 = vpop.f32.mrb[0].mxu0
  %v139 = vadd.f32 0.0, %v138
  %v140 = vpop.f32.mrb[0].mxu0
  %v141 = vpop.f32.mrb[0].mxu0
  %v142 = vadd.f32 0.0, %v141
  %v143 = vpop.f32.mrb[0].mxu0
  %144 = vdwg.mxu0
  %v145 = vadd.f32 %v131, %v39
  %v146 = vadd.f32 %v134, %v39
  %v147 = vadd.f32 %v139, %v39
  %v148 = vadd.f32 %v142, %v39
  %v149 = vlaneseq
  %v150 = vshrl.u32 %v149, 7
  %v151 = vadd.s32 %v150, 8
  %v152 = vadd.s32 %v150, 16
  %v153 = vadd.s32 %v150, 24
  %v154 = vlaneseq
  %v155 = vand.u32 %v154, 127
  %v156 = vshra.s32 %v150, 3
  %v157 = vshra.s32 %v151, 3
  %v158 = vshra.s32 %v152, 3
  %v159 = vshra.s32 %v153, 3
  %v160 = vshra.s32 %v155, 3
  %vm161 = vcmp.eq.s32.totalorder %v156, %v160
  %vm162 = vcmp.eq.s32.totalorder %v157, %v160
  %vm163 = vcmp.eq.s32.totalorder %v158, %v160
  %vm164 = vcmp.eq.s32.totalorder %v159, %v160
  %v165 = vand.u32 %v155, 7
  %vm166 = vcmp.lt.s32.totalorder %v165, 5
  %vm167 = vmand %vm161, %vm166
  %vm168 = vmand %vm162, %vm166
  %vm169 = vmand %vm163, %vm166
  %vm170 = vmand %vm164, %vm166
  %vm171 = vcmask 261120
  %v172 = vsel %vm171, %v145, 0.0
  %173 = vadd.xlane.f32.xlu0 %v172
  %v174 = vpop.xlane.xlu0 %173
  %v175 = vsel %vm171, %v146, 0.0
  %176 = vadd.xlane.f32.xlu0 %v175
  %v177 = vpop.xlane.xlu0 %176
  %v178 = vsel %vm171, %v147, 0.0
  %179 = vadd.xlane.f32.xlu0 %v178
  %v180 = vpop.xlane.xlu0 %179
  %v181 = vsel %vm171, %v148, 0.0
  %182 = vadd.xlane.f32.xlu0 %v181
  %v183 = vpop.xlane.xlu0 %182
  %v184 = vrcp.pop 32.0
  %v185 = vmul.f32 %v174, %v184
  %v186 = vmul.f32 %v177, %v184
  %v187 = vmul.f32 %v180, %v184
  %v188 = vmul.f32 %v183, %v184
  %v189 = vsub.f32 %v145, %v185
  %v190 = vsub.f32 %v146, %v186
  %v191 = vsub.f32 %v147, %v187
  %v192 = vsub.f32 %v148, %v188
  %v193 = vmul.f32 %v189, %v189
  %v194 = vmul.f32 %v190, %v190
  %v195 = vmul.f32 %v191, %v191
  %v196 = vmul.f32 %v192, %v192
  %v197 = vsel %vm171, %v193, 0.0
  %198 = vadd.xlane.f32.xlu0 %v197
  %v199 = vpop.xlane.xlu0 %198
  %v200 = vsel %vm171, %v194, 0.0
  %201 = vadd.xlane.f32.xlu0 %v200
  %v202 = vpop.xlane.xlu0 %201
  %v203 = vsel %vm171, %v195, 0.0
  %204 = vadd.xlane.f32.xlu0 %v203
  %v205 = vpop.xlane.xlu0 %204
  %v206 = vsel %vm171, %v196, 0.0
  %207 = vadd.xlane.f32.xlu0 %v206
  %v208 = vpop.xlane.xlu0 %207
  %v209 = vmul.f32 %v199, %v184
  %v210 = vmul.f32 %v202, %v184
  %v211 = vmul.f32 %v205, %v184
  %v212 = vmul.f32 %v208, %v184
  %v213 = vadd.f32 %v209, 1e-06
  %v214 = vadd.f32 %v210, 1e-06
  %v215 = vadd.f32 %v211, 1e-06
  %v216 = vadd.f32 %v212, 1e-06
  %v217 = vrsqrt.pop %v213
  %v218 = vrsqrt.pop %v214
  %v219 = vrsqrt.pop %v215
  %v220 = vrsqrt.pop %v216
  %v221 = vmul.f32 %v189, %v217
  %v222 = vmul.f32 %v190, %v218
  %v223 = vmul.f32 %v191, %v219
  %v224 = vmul.f32 %v192, %v220
  %v225 = vlaneseq
  %v226 = vshrl.u32 %v225, 7
  %v227 = vsub.s32 2, %v226
  %v228 = vrot.slane %v40, %v227
  %v229 = vmul.f32 %v221, %v228
  %v230 = vmul.f32 %v222, %v228
  %v231 = vmul.f32 %v223, %v228
  %v232 = vmul.f32 %v224, %v228
  %v233 = vlaneseq
  %v234 = vshrl.u32 %v233, 7
  %v235 = vsub.s32 3, %v234
  %v236 = vrot.slane %v40, %v235
  %v237 = vadd.f32 %v229, %v236
  %v238 = vadd.f32 %v230, %v236
  %v239 = vadd.f32 %v231, %v236
  %v240 = vadd.f32 %v232, %v236
  %v241 = vpack.c.bf16 %v238, %v237
  %v242 = vpack.c.bf16 %v240, %v239
  %v243 = vld [vmem:[%s3] sm:$0xf]
  %v244 = vld [vmem:[%s3 + $0x4] sm:$0xf]
  %v245 = vld [vmem:[%s3 + $0x8] sm:$0xf]
  %v246 = vld [vmem:[%s3 + $0xc] sm:$0xf]
  %v247 = vlaneseq
  %v248 = vshrl.u32 %v247, 7
  %v249 = vsub.s32 4, %v248
  %v250 = vrot.slane %v40, %v249
  %v255 = vunpack.c.l.b16 %v243
  %v256 = vunpack.c.l.b16 %v244
  %v257 = vunpack.c.l.b16 %v245
  %v258 = vunpack.c.l.b16 %v246
  %v259 = vpack.c.b16 %v256, %v255
  %v260 = vpack.c.b16 %v258, %v257
  %v264 = vsel %vm171, %v241, 0
  %v267 = vsel %vm171, %v242, 0
  %269 = vmatprep.subr.bf16.mxu0 0
  %270 = vmatpush1.bf16.msra.mxu0 %v259
  %271 = vmatprep.subr.bf16.mxu0 0
  %272 = vmatpush1.bf16.msra.mxu0 %v260
  %273 = vmatprep.subr.bf16.mxu0 0
  %274 = vmatpush1.bf16.msra.mxu0 0
  %275 = vmatprep.subr.bf16.mxu0 0
  %276 = vmatpush1.bf16.msra.mxu0 0
  %277 = vmatprep.subr.bf16.mxu0 0
  %278 = vmatpush1.bf16.msra.mxu0 0
  %279 = vmatprep.subr.bf16.mxu0 0
  %280 = vmatpush1.bf16.msra.mxu0 0
  %281 = vmatprep.subr.bf16.mxu0 0
  %282 = vmatpush1.bf16.msra.mxu0 0
  %283 = vmatprep.subr.bf16.mxu0 0
  %284 = vmatpush1.bf16.msra.mxu0 0
  %285 = vmatprep.subr.bf16.mxu0 0
  %286 = vmatpush1.bf16.msra.mxu0 0
  %287 = vmatprep.subr.bf16.mxu0 0
  %288 = vmatpush1.bf16.msra.mxu0 0
  %289 = vmatprep.subr.bf16.mxu0 0
  %290 = vmatpush1.bf16.msra.mxu0 0
  %291 = vmatprep.subr.bf16.mxu0 0
  %292 = vmatpush1.bf16.msra.mxu0 0
  %293 = vmatprep.subr.bf16.mxu0 0
  %294 = vmatpush1.bf16.msra.mxu0 0
  %295 = vmatprep.subr.bf16.mxu0 0
  %296 = vmatpush1.bf16.msra.mxu0 0
  %297 = vmatprep.subr.bf16.mxu0 0
  %298 = vmatpush1.bf16.msra.mxu0 0
  %299 = vmatprep.subr.bf16.mxu0 0
  %300 = vmatpush1.bf16.msra.mxu0 0
  %301 = vmatprep.mubr.bf16.mxu0 0
  %302 = vmatmul.mubr.bf16.gmra.mrb[0].mxu0 %v264
  %v303 = vpop.f32.mrb[0].mxu0
  %v304 = vadd.f32 %v250, %v303
  %v305 = vpop.f32.mrb[0].mxu0
  %v306 = vpop.f32.mrb[0].mxu0
  %v307 = vadd.f32 %v250, %v306
  %v308 = vpop.f32.mrb[0].mxu0
  %309 = vmatprep.mubr.bf16.mxu0 0
  %310 = vmatmul.mubr.bf16.gmra.mrb[0].mxu0 %v267
  %v311 = vpop.f32.mrb[0].mxu0
  %v312 = vadd.f32 %v250, %v311
  %v313 = vpop.f32.mrb[0].mxu0
  %v314 = vpop.f32.mrb[0].mxu0
  %v315 = vadd.f32 %v250, %v314
  %v316 = vpop.f32.mrb[0].mxu0
  %317 = vdwg.mxu0
  %v318 = vpack.c.bf16 %v307, %v304
  %v319 = vpack.c.bf16 %v315, %v312
  %322 = vrot.lane.b32.xlu0 %v318, 96
  %v323 = vpop.permute.xlu0 %322
  %324 = vrot.lane.b32.xlu0 %v319, 96
  %v325 = vpop.permute.xlu0 %324
  %vm326 = vcmask 64512
  %v328 = vsel %vm326, %v318, 0
  %v331 = vsel %vm326, %v319, 0
  %v334 = vsel %vm326, %v323, 0
  %v337 = vsel %vm326, %v325, 0
  %339 = vmatprep.subr.bf16.mxu0 0
  %340 = vmatpush1.bf16.xpose.msra.mxu0 %v334
  %341 = vmatprep.subr.bf16.mxu0 0
  %342 = vmatpush1.bf16.xpose.msra.mxu0 %v337
  %343 = vmatprep.subr.bf16.mxu0 0
  %344 = vmatpush1.bf16.xpose.msra.mxu0 0
  %345 = vmatprep.subr.bf16.mxu0 0
  %346 = vmatpush1.bf16.xpose.msra.mxu0 0
  %347 = vmatprep.subr.bf16.mxu0 0
  %348 = vmatpush1.bf16.xpose.msra.mxu0 0
  %349 = vmatprep.subr.bf16.mxu0 0
  %350 = vmatpush1.bf16.xpose.msra.mxu0 0
  %351 = vmatprep.subr.bf16.mxu0 0
  %352 = vmatpush1.bf16.xpose.msra.mxu0 0
  %353 = vmatprep.subr.bf16.mxu0 0
  %354 = vmatpush1.bf16.xpose.msra.mxu0 0
  %355 = vmatprep.subr.bf16.mxu0 0
  %356 = vmatpush1.bf16.xpose.msra.mxu0 0
  %357 = vmatprep.subr.bf16.mxu0 0
  %358 = vmatpush1.bf16.xpose.msra.mxu0 0
  %359 = vmatprep.subr.bf16.mxu0 0
  %360 = vmatpush1.bf16.xpose.msra.mxu0 0
  %361 = vmatprep.subr.bf16.mxu0 0
  %362 = vmatpush1.bf16.xpose.msra.mxu0 0
  %363 = vmatprep.subr.bf16.mxu0 0
  %364 = vmatpush1.bf16.xpose.msra.mxu0 0
  %365 = vmatprep.subr.bf16.mxu0 0
  %366 = vmatpush1.bf16.xpose.msra.mxu0 0
  %367 = vmatprep.subr.bf16.mxu0 0
  %368 = vmatpush1.bf16.xpose.msra.mxu0 0
  %369 = vmatprep.subr.bf16.mxu0 0
  %370 = vmatpush1.bf16.xpose.msra.mxu0 0
  %371 = vmatprep.mubr.bf16.mxu0 0
  %372 = vmatmul.mubr.bf16.gmra.mrb[0].mxu0 %v328
  %v373 = vpop.f32.mrb[0].mxu0
  %v374 = vadd.f32 0.0, %v373
  %v375 = vpop.f32.mrb[0].mxu0
  %v376 = vpop.f32.mrb[0].mxu0
  %v377 = vadd.f32 0.0, %v376
  %v378 = vpop.f32.mrb[0].mxu0
  %379 = vmatprep.mubr.bf16.mxu0 0
  %380 = vmatmul.mubr.bf16.gmra.mrb[0].mxu0 %v331
  %v381 = vpop.f32.mrb[0].mxu0
  %v382 = vadd.f32 0.0, %v381
  %v383 = vpop.f32.mrb[0].mxu0
  %v384 = vpop.f32.mrb[0].mxu0
  %v385 = vadd.f32 0.0, %v384
  %v386 = vpop.f32.mrb[0].mxu0
  %387 = vdwg.mxu0
  %v388 = vmul.f32 %v374, 0.35355338
  %v389 = vmul.f32 %v377, 0.35355338
  %v390 = vmul.f32 %v382, 0.35355338
  %v391 = vmul.f32 %v385, 0.35355338
  %v392 = vsel %vm167, %v388, -1e+30
  %v393 = vsel %vm168, %v389, -1e+30
  %v394 = vsel %vm169, %v390, -1e+30
  %v395 = vsel %vm170, %v391, -1e+30
  %v396 = vsel %vm171, %v392, -inf
  %397 = vmax.xlane.f32.xlu0 %v396
  %v398 = vpop.xlane.xlu0 %397
  %v399 = vsel %vm171, %v393, -inf
  %400 = vmax.xlane.f32.xlu0 %v399
  %v401 = vpop.xlane.xlu0 %400
  %v402 = vsel %vm171, %v394, -inf
  %403 = vmax.xlane.f32.xlu0 %v402
  %v404 = vpop.xlane.xlu0 %403
  %v405 = vsel %vm171, %v395, -inf
  %406 = vmax.xlane.f32.xlu0 %v405
  %v407 = vpop.xlane.xlu0 %406
  %v408 = vsub.f32 %v392, %v398
  %v409 = vsub.f32 %v393, %v401
  %v410 = vsub.f32 %v394, %v404
  %v411 = vsub.f32 %v395, %v407
  %v412 = vmul.f32 %v408, 1.442695
  %v413 = vpow.pop %v412
  %v414 = vmul.f32 %v409, 1.442695
  %v415 = vpow.pop %v414
  %v416 = vmul.f32 %v410, 1.442695
  %v417 = vpow.pop %v416
  %v418 = vmul.f32 %v411, 1.442695
  %v419 = vpow.pop %v418
  %v420 = vsel %vm171, %v413, 0.0
  %421 = vadd.xlane.f32.xlu0 %v420
  %v422 = vpop.xlane.xlu0 %421
  %v423 = vsel %vm171, %v415, 0.0
  %424 = vadd.xlane.f32.xlu0 %v423
  %v425 = vpop.xlane.xlu0 %424
  %v426 = vsel %vm171, %v417, 0.0
  %427 = vadd.xlane.f32.xlu0 %v426
  %v428 = vpop.xlane.xlu0 %427
  %v429 = vsel %vm171, %v419, 0.0
  %430 = vadd.xlane.f32.xlu0 %v429
  %v431 = vpop.xlane.xlu0 %430
  %v432 = vrcp.pop %v422
  %v433 = vmul.f32 %v413, %v432
  %v434 = vrcp.pop %v425
  %v435 = vmul.f32 %v415, %v434
  %v436 = vrcp.pop %v428
  %v437 = vmul.f32 %v417, %v436
  %v438 = vrcp.pop %v431
  %v439 = vmul.f32 %v419, %v438
  %v440 = vpack.c.bf16 %v435, %v433
  %v441 = vpack.c.bf16 %v439, %v437
  %442 = vrot.lane.b32.xlu0 %v318, 64
  %v443 = vpop.permute.xlu0 %442
  %444 = vrot.lane.b32.xlu0 %v319, 64
  %v445 = vpop.permute.xlu0 %444
  %v449 = vsel %vm171, %v440, 0
  %v452 = vsel %vm171, %v441, 0
  %454 = vmatprep.subr.bf16.mxu0 0
  %455 = vmatpush1.bf16.msra.mxu0 %v443
  %456 = vmatprep.subr.bf16.mxu0 0
  %457 = vmatpush1.bf16.msra.mxu0 %v445
  %458 = vmatprep.subr.bf16.mxu0 0
  %459 = vmatpush1.bf16.msra.mxu0 0
  %460 = vmatprep.subr.bf16.mxu0 0
  %461 = vmatpush1.bf16.msra.mxu0 0
  %462 = vmatprep.subr.bf16.mxu0 0
  %463 = vmatpush1.bf16.msra.mxu0 0
  %464 = vmatprep.subr.bf16.mxu0 0
  %465 = vmatpush1.bf16.msra.mxu0 0
  %466 = vmatprep.subr.bf16.mxu0 0
  %467 = vmatpush1.bf16.msra.mxu0 0
  %468 = vmatprep.subr.bf16.mxu0 0
  %469 = vmatpush1.bf16.msra.mxu0 0
  %470 = vmatprep.subr.bf16.mxu0 0
  %471 = vmatpush1.bf16.msra.mxu0 0
  %472 = vmatprep.subr.bf16.mxu0 0
  %473 = vmatpush1.bf16.msra.mxu0 0
  %474 = vmatprep.subr.bf16.mxu0 0
  %475 = vmatpush1.bf16.msra.mxu0 0
  %476 = vmatprep.subr.bf16.mxu0 0
  %477 = vmatpush1.bf16.msra.mxu0 0
  %478 = vmatprep.subr.bf16.mxu0 0
  %479 = vmatpush1.bf16.msra.mxu0 0
  %480 = vmatprep.subr.bf16.mxu0 0
  %481 = vmatpush1.bf16.msra.mxu0 0
  %482 = vmatprep.subr.bf16.mxu0 0
  %483 = vmatpush1.bf16.msra.mxu0 0
  %484 = vmatprep.subr.bf16.mxu0 0
  %485 = vmatpush1.bf16.msra.mxu0 0
  %486 = vmatprep.mubr.bf16.mxu0 0
  %487 = vmatmul.mubr.bf16.gmra.mrb[0].mxu0 %v449
  %v488 = vpop.f32.mrb[0].mxu0
  %v489 = vadd.f32 0.0, %v488
  %v490 = vpop.f32.mrb[0].mxu0
  %v491 = vpop.f32.mrb[0].mxu0
  %v492 = vadd.f32 0.0, %v491
  %v493 = vpop.f32.mrb[0].mxu0
  %494 = vmatprep.mubr.bf16.mxu0 0
  %495 = vmatmul.mubr.bf16.gmra.mrb[0].mxu0 %v452
  %v496 = vpop.f32.mrb[0].mxu0
  %v497 = vadd.f32 0.0, %v496
  %v498 = vpop.f32.mrb[0].mxu0
  %v499 = vpop.f32.mrb[0].mxu0
  %v500 = vadd.f32 0.0, %v499
  %v501 = vpop.f32.mrb[0].mxu0
  %502 = vdwg.mxu0
  %503 = vrot.lane.b32.xlu0 %v318, 120
  %v504 = vpop.permute.xlu0 %503
  %505 = vrot.lane.b32.xlu0 %v319, 120
  %v506 = vpop.permute.xlu0 %505
  %507 = vrot.lane.b32.xlu0 %v318, 88
  %v508 = vpop.permute.xlu0 %507
  %509 = vrot.lane.b32.xlu0 %v319, 88
  %v510 = vpop.permute.xlu0 %509
  %v512 = vsel %vm326, %v504, 0
  %v515 = vsel %vm326, %v506, 0
  %v518 = vsel %vm326, %v508, 0
  %v521 = vsel %vm326, %v510, 0
  %523 = vmatprep.subr.bf16.mxu0 0
  %524 = vmatpush1.bf16.xpose.msra.mxu0 %v518
  %525 = vmatprep.subr.bf16.mxu0 0
  %526 = vmatpush1.bf16.xpose.msra.mxu0 %v521
  %527 = vmatprep.subr.bf16.mxu0 0
  %528 = vmatpush1.bf16.xpose.msra.mxu0 0
  %529 = vmatprep.subr.bf16.mxu0 0
  %530 = vmatpush1.bf16.xpose.msra.mxu0 0
  %531 = vmatprep.subr.bf16.mxu0 0
  %532 = vmatpush1.bf16.xpose.msra.mxu0 0
  %533 = vmatprep.subr.bf16.mxu0 0
  %534 = vmatpush1.bf16.xpose.msra.mxu0 0
  %535 = vmatprep.subr.bf16.mxu0 0
  %536 = vmatpush1.bf16.xpose.msra.mxu0 0
  %537 = vmatprep.subr.bf16.mxu0 0
  %538 = vmatpush1.bf16.xpose.msra.mxu0 0
  %539 = vmatprep.subr.bf16.mxu0 0
  %540 = vmatpush1.bf16.xpose.msra.mxu0 0
  %541 = vmatprep.subr.bf16.mxu0 0
  %542 = vmatpush1.bf16.xpose.msra.mxu0 0
  %543 = vmatprep.subr.bf16.mxu0 0
  %544 = vmatpush1.bf16.xpose.msra.mxu0 0
  %545 = vmatprep.subr.bf16.mxu0 0
  %546 = vmatpush1.bf16.xpose.msra.mxu0 0
  %547 = vmatprep.subr.bf16.mxu0 0
  %548 = vmatpush1.bf16.xpose.msra.mxu0 0
  %549 = vmatprep.subr.bf16.mxu0 0
  %550 = vmatpush1.bf16.xpose.msra.mxu0 0
  %551 = vmatprep.subr.bf16.mxu0 0
  %552 = vmatpush1.bf16.xpose.msra.mxu0 0
  %553 = vmatprep.subr.bf16.mxu0 0
  %554 = vmatpush1.bf16.xpose.msra.mxu0 0
  %555 = vmatprep.mubr.bf16.mxu0 0
  %556 = vmatmul.mubr.bf16.gmra.mrb[0].mxu0 %v512
  %v557 = vpop.f32.mrb[0].mxu0
  %v558 = vadd.f32 0.0, %v557
  %v559 = vpop.f32.mrb[0].mxu0
  %v560 = vpop.f32.mrb[0].mxu0
  %v561 = vadd.f32 0.0, %v560
  %v562 = vpop.f32.mrb[0].mxu0
  %563 = vmatprep.mubr.bf16.mxu0 0
  %564 = vmatmul.mubr.bf16.gmra.mrb[0].mxu0 %v515
  %v565 = vpop.f32.mrb[0].mxu0
  %v566 = vadd.f32 0.0, %v565
  %v567 = vpop.f32.mrb[0].mxu0
  %v568 = vpop.f32.mrb[0].mxu0
  %v569 = vadd.f32 0.0, %v568
  %v570 = vpop.f32.mrb[0].mxu0
  %571 = vdwg.mxu0
  %v572 = vmul.f32 %v558, 0.35355338
  %v573 = vmul.f32 %v561, 0.35355338
  %v574 = vmul.f32 %v566, 0.35355338
  %v575 = vmul.f32 %v569, 0.35355338
  %v576 = vsel %vm167, %v572, -1e+30
  %v577 = vsel %vm168, %v573, -1e+30
  %v578 = vsel %vm169, %v574, -1e+30
  %v579 = vsel %vm170, %v575, -1e+30
  %v580 = vsel %vm171, %v576, -inf
  %581 = vmax.xlane.f32.xlu0 %v580
  %v582 = vpop.xlane.xlu0 %581
  %v583 = vsel %vm171, %v577, -inf
  %584 = vmax.xlane.f32.xlu0 %v583
  %v585 = vpop.xlane.xlu0 %584
  %v586 = vsel %vm171, %v578, -inf
  %587 = vmax.xlane.f32.xlu0 %v586
  %v588 = vpop.xlane.xlu0 %587
  %v589 = vsel %vm171, %v579, -inf
  %590 = vmax.xlane.f32.xlu0 %v589
  %v591 = vpop.xlane.xlu0 %590
  %v592 = vsub.f32 %v576, %v582
  %v593 = vsub.f32 %v577, %v585
  %v594 = vsub.f32 %v578, %v588
  %v595 = vsub.f32 %v579, %v591
  %v596 = vmul.f32 %v592, 1.442695
  %v597 = vpow.pop %v596
  %v598 = vmul.f32 %v593, 1.442695
  %v599 = vpow.pop %v598
  %v600 = vmul.f32 %v594, 1.442695
  %v601 = vpow.pop %v600
  %v602 = vmul.f32 %v595, 1.442695
  %v603 = vpow.pop %v602
  %v604 = vsel %vm171, %v597, 0.0
  %605 = vadd.xlane.f32.xlu0 %v604
  %v606 = vpop.xlane.xlu0 %605
  %v607 = vsel %vm171, %v599, 0.0
  %608 = vadd.xlane.f32.xlu0 %v607
  %v609 = vpop.xlane.xlu0 %608
  %v610 = vsel %vm171, %v601, 0.0
  %611 = vadd.xlane.f32.xlu0 %v610
  %v612 = vpop.xlane.xlu0 %611
  %v613 = vsel %vm171, %v603, 0.0
  %614 = vadd.xlane.f32.xlu0 %v613
  %v615 = vpop.xlane.xlu0 %614
  %v616 = vrcp.pop %v606
  %v617 = vmul.f32 %v597, %v616
  %v618 = vrcp.pop %v609
  %v619 = vmul.f32 %v599, %v618
  %v620 = vrcp.pop %v612
  %v621 = vmul.f32 %v601, %v620
  %v622 = vrcp.pop %v615
  %v623 = vmul.f32 %v603, %v622
  %v624 = vpack.c.bf16 %v619, %v617
  %v625 = vpack.c.bf16 %v623, %v621
  %626 = vrot.lane.b32.xlu0 %v318, 56
  %v627 = vpop.permute.xlu0 %626
  %628 = vrot.lane.b32.xlu0 %v319, 56
  %v629 = vpop.permute.xlu0 %628
  %v633 = vsel %vm171, %v624, 0
  %v636 = vsel %vm171, %v625, 0
  %638 = vmatprep.subr.bf16.mxu0 0
  %639 = vmatpush1.bf16.msra.mxu0 %v627
  %640 = vmatprep.subr.bf16.mxu0 0
  %641 = vmatpush1.bf16.msra.mxu0 %v629
  %642 = vmatprep.subr.bf16.mxu0 0
  %643 = vmatpush1.bf16.msra.mxu0 0
  %644 = vmatprep.subr.bf16.mxu0 0
  %645 = vmatpush1.bf16.msra.mxu0 0
  %646 = vmatprep.subr.bf16.mxu0 0
  %647 = vmatpush1.bf16.msra.mxu0 0
  %648 = vmatprep.subr.bf16.mxu0 0
  %649 = vmatpush1.bf16.msra.mxu0 0
  %650 = vmatprep.subr.bf16.mxu0 0
  %651 = vmatpush1.bf16.msra.mxu0 0
  %652 = vmatprep.subr.bf16.mxu0 0
  %653 = vmatpush1.bf16.msra.mxu0 0
  %654 = vmatprep.subr.bf16.mxu0 0
  %655 = vmatpush1.bf16.msra.mxu0 0
  %656 = vmatprep.subr.bf16.mxu0 0
  %657 = vmatpush1.bf16.msra.mxu0 0
  %658 = vmatprep.subr.bf16.mxu0 0
  %659 = vmatpush1.bf16.msra.mxu0 0
  %660 = vmatprep.subr.bf16.mxu0 0
  %661 = vmatpush1.bf16.msra.mxu0 0
  %662 = vmatprep.subr.bf16.mxu0 0
  %663 = vmatpush1.bf16.msra.mxu0 0
  %664 = vmatprep.subr.bf16.mxu0 0
  %665 = vmatpush1.bf16.msra.mxu0 0
  %666 = vmatprep.subr.bf16.mxu0 0
  %667 = vmatpush1.bf16.msra.mxu0 0
  %668 = vmatprep.subr.bf16.mxu0 0
  %669 = vmatpush1.bf16.msra.mxu0 0
  %670 = vmatprep.mubr.bf16.mxu0 0
  %671 = vmatmul.mubr.bf16.gmra.mrb[0].mxu0 %v633
  %v672 = vpop.f32.mrb[0].mxu0
  %v673 = vadd.f32 0.0, %v672
  %v674 = vpop.f32.mrb[0].mxu0
  %v675 = vpop.f32.mrb[0].mxu0
  %v676 = vadd.f32 0.0, %v675
  %v677 = vpop.f32.mrb[0].mxu0
  %678 = vmatprep.mubr.bf16.mxu0 0
  %679 = vmatmul.mubr.bf16.gmra.mrb[0].mxu0 %v636
  %v680 = vpop.f32.mrb[0].mxu0
  %v681 = vadd.f32 0.0, %v680
  %v682 = vpop.f32.mrb[0].mxu0
  %v683 = vpop.f32.mrb[0].mxu0
  %v684 = vadd.f32 0.0, %v683
  %v685 = vpop.f32.mrb[0].mxu0
  %686 = vdwg.mxu0
  %687 = vrot.lane.b32.xlu0 %v318, 112
  %v688 = vpop.permute.xlu0 %687
  %689 = vrot.lane.b32.xlu0 %v319, 112
  %v690 = vpop.permute.xlu0 %689
  %691 = vrot.lane.b32.xlu0 %v318, 80
  %v692 = vpop.permute.xlu0 %691
  %693 = vrot.lane.b32.xlu0 %v319, 80
  %v694 = vpop.permute.xlu0 %693
  %v696 = vsel %vm326, %v688, 0
  %v699 = vsel %vm326, %v690, 0
  %v702 = vsel %vm326, %v692, 0
  %v705 = vsel %vm326, %v694, 0
  %707 = vmatprep.subr.bf16.mxu0 0
  %708 = vmatpush1.bf16.xpose.msra.mxu0 %v702
  %709 = vmatprep.subr.bf16.mxu0 0
  %710 = vmatpush1.bf16.xpose.msra.mxu0 %v705
  %711 = vmatprep.subr.bf16.mxu0 0
  %712 = vmatpush1.bf16.xpose.msra.mxu0 0
  %713 = vmatprep.subr.bf16.mxu0 0
  %714 = vmatpush1.bf16.xpose.msra.mxu0 0
  %715 = vmatprep.subr.bf16.mxu0 0
  %716 = vmatpush1.bf16.xpose.msra.mxu0 0
  %717 = vmatprep.subr.bf16.mxu0 0
  %718 = vmatpush1.bf16.xpose.msra.mxu0 0
  %719 = vmatprep.subr.bf16.mxu0 0
  %720 = vmatpush1.bf16.xpose.msra.mxu0 0
  %721 = vmatprep.subr.bf16.mxu0 0
  %722 = vmatpush1.bf16.xpose.msra.mxu0 0
  %723 = vmatprep.subr.bf16.mxu0 0
  %724 = vmatpush1.bf16.xpose.msra.mxu0 0
  %725 = vmatprep.subr.bf16.mxu0 0
  %726 = vmatpush1.bf16.xpose.msra.mxu0 0
  %727 = vmatprep.subr.bf16.mxu0 0
  %728 = vmatpush1.bf16.xpose.msra.mxu0 0
  %729 = vmatprep.subr.bf16.mxu0 0
  %730 = vmatpush1.bf16.xpose.msra.mxu0 0
  %731 = vmatprep.subr.bf16.mxu0 0
  %732 = vmatpush1.bf16.xpose.msra.mxu0 0
  %733 = vmatprep.subr.bf16.mxu0 0
  %734 = vmatpush1.bf16.xpose.msra.mxu0 0
  %735 = vmatprep.subr.bf16.mxu0 0
  %736 = vmatpush1.bf16.xpose.msra.mxu0 0
  %737 = vmatprep.subr.bf16.mxu0 0
  %738 = vmatpush1.bf16.xpose.msra.mxu0 0
  %739 = vmatprep.mubr.bf16.mxu0 0
  %740 = vmatmul.mubr.bf16.gmra.mrb[0].mxu0 %v696
  %v741 = vpop.f32.mrb[0].mxu0
  %v742 = vadd.f32 0.0, %v741
  %v743 = vpop.f32.mrb[0].mxu0
  %v744 = vpop.f32.mrb[0].mxu0
  %v745 = vadd.f32 0.0, %v744
  %v746 = vpop.f32.mrb[0].mxu0
  %747 = vmatprep.mubr.bf16.mxu0 0
  %748 = vmatmul.mubr.bf16.gmra.mrb[0].mxu0 %v699
  %v749 = vpop.f32.mrb[0].mxu0
  %v750 = vadd.f32 0.0, %v749
  %v751 = vpop.f32.mrb[0].mxu0
  %v752 = vpop.f32.mrb[0].mxu0
  %v753 = vadd.f32 0.0, %v752
  %v754 = vpop.f32.mrb[0].mxu0
  %755 = vdwg.mxu0
  %v756 = vmul.f32 %v742, 0.35355338
  %v757 = vmul.f32 %v745, 0.35355338
  %v758 = vmul.f32 %v750, 0.35355338
  %v759 = vmul.f32 %v753, 0.35355338
  %v760 = vsel %vm167, %v756, -1e+30
  %v761 = vsel %vm168, %v757, -1e+30
  %v762 = vsel %vm169, %v758, -1e+30
  %v763 = vsel %vm170, %v759, -1e+30
  %v764 = vsel %vm171, %v760, -inf
  %765 = vmax.xlane.f32.xlu0 %v764
  %v766 = vpop.xlane.xlu0 %765
  %v767 = vsel %vm171, %v761, -inf
  %768 = vmax.xlane.f32.xlu0 %v767
  %v769 = vpop.xlane.xlu0 %768
  %v770 = vsel %vm171, %v762, -inf
  %771 = vmax.xlane.f32.xlu0 %v770
  %v772 = vpop.xlane.xlu0 %771
  %v773 = vsel %vm171, %v763, -inf
  %774 = vmax.xlane.f32.xlu0 %v773
  %v775 = vpop.xlane.xlu0 %774
  %v776 = vsub.f32 %v760, %v766
  %v777 = vsub.f32 %v761, %v769
  %v778 = vsub.f32 %v762, %v772
  %v779 = vsub.f32 %v763, %v775
  %v780 = vmul.f32 %v776, 1.442695
  %v781 = vpow.pop %v780
  %v782 = vmul.f32 %v777, 1.442695
  %v783 = vpow.pop %v782
  %v784 = vmul.f32 %v778, 1.442695
  %v785 = vpow.pop %v784
  %v786 = vmul.f32 %v779, 1.442695
  %v787 = vpow.pop %v786
  %v788 = vsel %vm171, %v781, 0.0
  %789 = vadd.xlane.f32.xlu0 %v788
  %v790 = vpop.xlane.xlu0 %789
  %v791 = vsel %vm171, %v783, 0.0
  %792 = vadd.xlane.f32.xlu0 %v791
  %v793 = vpop.xlane.xlu0 %792
  %v794 = vsel %vm171, %v785, 0.0
  %795 = vadd.xlane.f32.xlu0 %v794
  %v796 = vpop.xlane.xlu0 %795
  %v797 = vsel %vm171, %v787, 0.0
  %798 = vadd.xlane.f32.xlu0 %v797
  %v799 = vpop.xlane.xlu0 %798
  %v800 = vrcp.pop %v790
  %v801 = vmul.f32 %v781, %v800
  %v802 = vrcp.pop %v793
  %v803 = vmul.f32 %v783, %v802
  %v804 = vrcp.pop %v796
  %v805 = vmul.f32 %v785, %v804
  %v806 = vrcp.pop %v799
  %v807 = vmul.f32 %v787, %v806
  %v808 = vpack.c.bf16 %v803, %v801
  %v809 = vpack.c.bf16 %v807, %v805
  %810 = vrot.lane.b32.xlu0 %v318, 48
  %v811 = vpop.permute.xlu0 %810
  %812 = vrot.lane.b32.xlu0 %v319, 48
  %v813 = vpop.permute.xlu0 %812
  %v817 = vsel %vm171, %v808, 0
  %v820 = vsel %vm171, %v809, 0
  %822 = vmatprep.subr.bf16.mxu0 0
  %823 = vmatpush1.bf16.msra.mxu0 %v811
  %824 = vmatprep.subr.bf16.mxu0 0
  %825 = vmatpush1.bf16.msra.mxu0 %v813
  %826 = vmatprep.subr.bf16.mxu0 0
  %827 = vmatpush1.bf16.msra.mxu0 0
  %828 = vmatprep.subr.bf16.mxu0 0
  %829 = vmatpush1.bf16.msra.mxu0 0
  %830 = vmatprep.subr.bf16.mxu0 0
  %831 = vmatpush1.bf16.msra.mxu0 0
  %832 = vmatprep.subr.bf16.mxu0 0
  %833 = vmatpush1.bf16.msra.mxu0 0
  %834 = vmatprep.subr.bf16.mxu0 0
  %835 = vmatpush1.bf16.msra.mxu0 0
  %836 = vmatprep.subr.bf16.mxu0 0
  %837 = vmatpush1.bf16.msra.mxu0 0
  %838 = vmatprep.subr.bf16.mxu0 0
  %839 = vmatpush1.bf16.msra.mxu0 0
  %840 = vmatprep.subr.bf16.mxu0 0
  %841 = vmatpush1.bf16.msra.mxu0 0
  %842 = vmatprep.subr.bf16.mxu0 0
  %843 = vmatpush1.bf16.msra.mxu0 0
  %844 = vmatprep.subr.bf16.mxu0 0
  %845 = vmatpush1.bf16.msra.mxu0 0
  %846 = vmatprep.subr.bf16.mxu0 0
  %847 = vmatpush1.bf16.msra.mxu0 0
  %848 = vmatprep.subr.bf16.mxu0 0
  %849 = vmatpush1.bf16.msra.mxu0 0
  %850 = vmatprep.subr.bf16.mxu0 0
  %851 = vmatpush1.bf16.msra.mxu0 0
  %852 = vmatprep.subr.bf16.mxu0 0
  %853 = vmatpush1.bf16.msra.mxu0 0
  %854 = vmatprep.mubr.bf16.mxu0 0
  %855 = vmatmul.mubr.bf16.gmra.mrb[0].mxu0 %v817
  %v856 = vpop.f32.mrb[0].mxu0
  %v857 = vadd.f32 0.0, %v856
  %v858 = vpop.f32.mrb[0].mxu0
  %v859 = vpop.f32.mrb[0].mxu0
  %v860 = vadd.f32 0.0, %v859
  %v861 = vpop.f32.mrb[0].mxu0
  %862 = vmatprep.mubr.bf16.mxu0 0
  %863 = vmatmul.mubr.bf16.gmra.mrb[0].mxu0 %v820
  %v864 = vpop.f32.mrb[0].mxu0
  %v865 = vadd.f32 0.0, %v864
  %v866 = vpop.f32.mrb[0].mxu0
  %v867 = vpop.f32.mrb[0].mxu0
  %v868 = vadd.f32 0.0, %v867
  %v869 = vpop.f32.mrb[0].mxu0
  %870 = vdwg.mxu0
  %871 = vrot.lane.b32.xlu0 %v318, 104
  %v872 = vpop.permute.xlu0 %871
  %873 = vrot.lane.b32.xlu0 %v319, 104
  %v874 = vpop.permute.xlu0 %873
  %875 = vrot.lane.b32.xlu0 %v318, 72
  %v876 = vpop.permute.xlu0 %875
  %877 = vrot.lane.b32.xlu0 %v319, 72
  %v878 = vpop.permute.xlu0 %877
  %v880 = vsel %vm326, %v872, 0
  %v883 = vsel %vm326, %v874, 0
  %v886 = vsel %vm326, %v876, 0
  %v889 = vsel %vm326, %v878, 0
  %891 = vmatprep.subr.bf16.mxu0 0
  %892 = vmatpush1.bf16.xpose.msra.mxu0 %v886
  %893 = vmatprep.subr.bf16.mxu0 0
  %894 = vmatpush1.bf16.xpose.msra.mxu0 %v889
  %895 = vmatprep.subr.bf16.mxu0 0
  %896 = vmatpush1.bf16.xpose.msra.mxu0 0
  %897 = vmatprep.subr.bf16.mxu0 0
  %898 = vmatpush1.bf16.xpose.msra.mxu0 0
  %899 = vmatprep.subr.bf16.mxu0 0
  %900 = vmatpush1.bf16.xpose.msra.mxu0 0
  %901 = vmatprep.subr.bf16.mxu0 0
  %902 = vmatpush1.bf16.xpose.msra.mxu0 0
  %903 = vmatprep.subr.bf16.mxu0 0
  %904 = vmatpush1.bf16.xpose.msra.mxu0 0
  %905 = vmatprep.subr.bf16.mxu0 0
  %906 = vmatpush1.bf16.xpose.msra.mxu0 0
  %907 = vmatprep.subr.bf16.mxu0 0
  %908 = vmatpush1.bf16.xpose.msra.mxu0 0
  %909 = vmatprep.subr.bf16.mxu0 0
  %910 = vmatpush1.bf16.xpose.msra.mxu0 0
  %911 = vmatprep.subr.bf16.mxu0 0
  %912 = vmatpush1.bf16.xpose.msra.mxu0 0
  %913 = vmatprep.subr.bf16.mxu0 0
  %914 = vmatpush1.bf16.xpose.msra.mxu0 0
  %915 = vmatprep.subr.bf16.mxu0 0
  %916 = vmatpush1.bf16.xpose.msra.mxu0 0
  %917 = vmatprep.subr.bf16.mxu0 0
  %918 = vmatpush1.bf16.xpose.msra.mxu0 0
  %919 = vmatprep.subr.bf16.mxu0 0
  %920 = vmatpush1.bf16.xpose.msra.mxu0 0
  %921 = vmatprep.subr.bf16.mxu0 0
  %922 = vmatpush1.bf16.xpose.msra.mxu0 0
  %923 = vmatprep.mubr.bf16.mxu0 0
  %924 = vmatmul.mubr.bf16.gmra.mrb[0].mxu0 %v880
  %v925 = vpop.f32.mrb[0].mxu0
  %v926 = vadd.f32 0.0, %v925
  %v927 = vpop.f32.mrb[0].mxu0
  %v928 = vpop.f32.mrb[0].mxu0
  %v929 = vadd.f32 0.0, %v928
  %v930 = vpop.f32.mrb[0].mxu0
  %931 = vmatprep.mubr.bf16.mxu0 0
  %932 = vmatmul.mubr.bf16.gmra.mrb[0].mxu0 %v883
  %v933 = vpop.f32.mrb[0].mxu0
  %v934 = vadd.f32 0.0, %v933
  %v935 = vpop.f32.mrb[0].mxu0
  %v936 = vpop.f32.mrb[0].mxu0
  %v937 = vadd.f32 0.0, %v936
  %v938 = vpop.f32.mrb[0].mxu0
  %939 = vdwg.mxu0
  %v940 = vmul.f32 %v926, 0.35355338
  %v941 = vmul.f32 %v929, 0.35355338
  %v942 = vmul.f32 %v934, 0.35355338
  %v943 = vmul.f32 %v937, 0.35355338
  %v944 = vsel %vm167, %v940, -1e+30
  %v945 = vsel %vm168, %v941, -1e+30
  %v946 = vsel %vm169, %v942, -1e+30
  %v947 = vsel %vm170, %v943, -1e+30
  %v948 = vsel %vm171, %v944, -inf
  %949 = vmax.xlane.f32.xlu0 %v948
  %v950 = vpop.xlane.xlu0 %949
  %v951 = vsel %vm171, %v945, -inf
  %952 = vmax.xlane.f32.xlu0 %v951
  %v953 = vpop.xlane.xlu0 %952
  %v954 = vsel %vm171, %v946, -inf
  %955 = vmax.xlane.f32.xlu0 %v954
  %v956 = vpop.xlane.xlu0 %955
  %v957 = vsel %vm171, %v947, -inf
  %958 = vmax.xlane.f32.xlu0 %v957
  %v959 = vpop.xlane.xlu0 %958
  %v960 = vsub.f32 %v944, %v950
  %v961 = vsub.f32 %v945, %v953
  %v962 = vsub.f32 %v946, %v956
  %v963 = vsub.f32 %v947, %v959
  %v964 = vmul.f32 %v960, 1.442695
  %v965 = vpow.pop %v964
  %v966 = vmul.f32 %v961, 1.442695
  %v967 = vpow.pop %v966
  %v968 = vmul.f32 %v962, 1.442695
  %v969 = vpow.pop %v968
  %v970 = vmul.f32 %v963, 1.442695
  %v971 = vpow.pop %v970
  %v972 = vsel %vm171, %v965, 0.0
  %973 = vadd.xlane.f32.xlu0 %v972
  %v974 = vpop.xlane.xlu0 %973
  %v975 = vsel %vm171, %v967, 0.0
  %976 = vadd.xlane.f32.xlu0 %v975
  %v977 = vpop.xlane.xlu0 %976
  %v978 = vsel %vm171, %v969, 0.0
  %979 = vadd.xlane.f32.xlu0 %v978
  %v980 = vpop.xlane.xlu0 %979
  %v981 = vsel %vm171, %v971, 0.0
  %982 = vadd.xlane.f32.xlu0 %v981
  %v983 = vpop.xlane.xlu0 %982
  %v984 = vrcp.pop %v974
  %v985 = vmul.f32 %v965, %v984
  %v986 = vrcp.pop %v977
  %v987 = vmul.f32 %v967, %v986
  %v988 = vrcp.pop %v980
  %v989 = vmul.f32 %v969, %v988
  %v990 = vrcp.pop %v983
  %v991 = vmul.f32 %v971, %v990
  %v992 = vpack.c.bf16 %v987, %v985
  %v993 = vpack.c.bf16 %v991, %v989
  %994 = vrot.lane.b32.xlu0 %v318, 40
  %v995 = vpop.permute.xlu0 %994
  %996 = vrot.lane.b32.xlu0 %v319, 40
  %v997 = vpop.permute.xlu0 %996
  %v1001 = vsel %vm171, %v992, 0
  %v1004 = vsel %vm171, %v993, 0
  %1006 = vmatprep.subr.bf16.mxu0 0
  %1007 = vmatpush1.bf16.msra.mxu0 %v995
  %1008 = vmatprep.subr.bf16.mxu0 0
  %1009 = vmatpush1.bf16.msra.mxu0 %v997
  %1010 = vmatprep.subr.bf16.mxu0 0
  %1011 = vmatpush1.bf16.msra.mxu0 0
  %1012 = vmatprep.subr.bf16.mxu0 0
  %1013 = vmatpush1.bf16.msra.mxu0 0
  %1014 = vmatprep.subr.bf16.mxu0 0
  %1015 = vmatpush1.bf16.msra.mxu0 0
  %1016 = vmatprep.subr.bf16.mxu0 0
  %1017 = vmatpush1.bf16.msra.mxu0 0
  %1018 = vmatprep.subr.bf16.mxu0 0
  %1019 = vmatpush1.bf16.msra.mxu0 0
  %1020 = vmatprep.subr.bf16.mxu0 0
  %1021 = vmatpush1.bf16.msra.mxu0 0
  %1022 = vmatprep.subr.bf16.mxu0 0
  %1023 = vmatpush1.bf16.msra.mxu0 0
  %1024 = vmatprep.subr.bf16.mxu0 0
  %1025 = vmatpush1.bf16.msra.mxu0 0
  %1026 = vmatprep.subr.bf16.mxu0 0
  %1027 = vmatpush1.bf16.msra.mxu0 0
  %1028 = vmatprep.subr.bf16.mxu0 0
  %1029 = vmatpush1.bf16.msra.mxu0 0
  %1030 = vmatprep.subr.bf16.mxu0 0
  %1031 = vmatpush1.bf16.msra.mxu0 0
  %1032 = vmatprep.subr.bf16.mxu0 0
  %1033 = vmatpush1.bf16.msra.mxu0 0
  %1034 = vmatprep.subr.bf16.mxu0 0
  %1035 = vmatpush1.bf16.msra.mxu0 0
  %1036 = vmatprep.subr.bf16.mxu0 0
  %1037 = vmatpush1.bf16.msra.mxu0 0
  %1038 = vmatprep.mubr.bf16.mxu0 0
  %1039 = vmatmul.mubr.bf16.gmra.mrb[0].mxu0 %v1001
  %v1040 = vpop.f32.mrb[0].mxu0
  %v1041 = vadd.f32 0.0, %v1040
  %v1042 = vpop.f32.mrb[0].mxu0
  %v1043 = vpop.f32.mrb[0].mxu0
  %v1044 = vadd.f32 0.0, %v1043
  %v1045 = vpop.f32.mrb[0].mxu0
  %1046 = vmatprep.mubr.bf16.mxu0 0
  %1047 = vmatmul.mubr.bf16.gmra.mrb[0].mxu0 %v1004
  %v1048 = vpop.f32.mrb[0].mxu0
  %v1049 = vadd.f32 0.0, %v1048
  %v1050 = vpop.f32.mrb[0].mxu0
  %v1051 = vpop.f32.mrb[0].mxu0
  %v1052 = vadd.f32 0.0, %v1051
  %v1053 = vpop.f32.mrb[0].mxu0
  %1054 = vdwg.mxu0
  %1059 = vrot.lane.b32.xlu0 %v673, 8
  %v1060 = vpop.permute.xlu0 %1059
  %1061 = vrot.lane.b32.xlu0 %v676, 8
  %v1062 = vpop.permute.xlu0 %1061
  %1063 = vrot.lane.b32.xlu0 %v681, 8
  %v1064 = vpop.permute.xlu0 %1063
  %1065 = vrot.lane.b32.xlu0 %v684, 8
  %v1066 = vpop.permute.xlu0 %1065
  %1075 = vrot.lane.b32.xlu0 %v857, 16
  %v1076 = vpop.permute.xlu0 %1075
  %1077 = vrot.lane.b32.xlu0 %v860, 16
  %v1078 = vpop.permute.xlu0 %1077
  %1079 = vrot.lane.b32.xlu0 %v865, 16
  %v1080 = vpop.permute.xlu0 %1079
  %1081 = vrot.lane.b32.xlu0 %v868, 16
  %v1082 = vpop.permute.xlu0 %1081
  %1091 = vrot.lane.b32.xlu0 %v1041, 24
  %v1092 = vpop.permute.xlu0 %1091
  %1093 = vrot.lane.b32.xlu0 %v1044, 24
  %v1094 = vpop.permute.xlu0 %1093
  %1095 = vrot.lane.b32.xlu0 %v1049, 24
  %v1096 = vpop.permute.xlu0 %1095
  %1097 = vrot.lane.b32.xlu0 %v1052, 24
  %v1098 = vpop.permute.xlu0 %1097
  %v1103 = vsel %vm326, %v489, %v1060
  %v1104 = vsel %vm326, %v492, %v1062
  %v1105 = vsel %vm326, %v497, %v1064
  %v1106 = vsel %vm326, %v500, %v1066
  %vm1107 = vcmask 130048
  %v1108 = vsel %vm1107, %v1103, %v1076
  %v1109 = vsel %vm1107, %v1104, %v1078
  %v1110 = vsel %vm1107, %v1105, %v1080
  %v1111 = vsel %vm1107, %v1106, %v1082
  %vm1112 = vcmask 195584
  %v1113 = vsel %vm1112, %v1108, %v1092
  %v1114 = vsel %vm1112, %v1109, %v1094
  %v1115 = vsel %vm1112, %v1110, %v1096
  %v1116 = vsel %vm1112, %v1111, %v1098
  %v1117 = vpack.c.bf16 %v1114, %v1113
  %v1118 = vpack.c.bf16 %v1116, %v1115
  %v1119 = vld [vmem:[%s4] sm:$0xf]
  %v1120 = vld [vmem:[%s4 + $0x4] sm:$0xf]
  %v1121 = vld [vmem:[%s4 + $0x8] sm:$0xf]
  %v1122 = vld [vmem:[%s4 + $0xc] sm:$0xf]
  %v1127 = vunpack.c.l.b16 %v1119
  %v1128 = vunpack.c.l.b16 %v1120
  %v1129 = vunpack.c.l.b16 %v1121
  %v1130 = vunpack.c.l.b16 %v1122
  %v1131 = vpack.c.b16 %v1128, %v1127
  %v1132 = vpack.c.b16 %v1130, %v1129
  %v1136 = vsel %vm171, %v1117, 0
  %v1139 = vsel %vm171, %v1118, 0
  %1141 = vmatprep.subr.bf16.mxu0 0
  %1142 = vmatpush1.bf16.msra.mxu0 %v1131
  %1143 = vmatprep.subr.bf16.mxu0 0
  %1144 = vmatpush1.bf16.msra.mxu0 %v1132
  %1145 = vmatprep.subr.bf16.mxu0 0
  %1146 = vmatpush1.bf16.msra.mxu0 0
  %1147 = vmatprep.subr.bf16.mxu0 0
  %1148 = vmatpush1.bf16.msra.mxu0 0
  %1149 = vmatprep.subr.bf16.mxu0 0
  %1150 = vmatpush1.bf16.msra.mxu0 0
  %1151 = vmatprep.subr.bf16.mxu0 0
  %1152 = vmatpush1.bf16.msra.mxu0 0
  %1153 = vmatprep.subr.bf16.mxu0 0
  %1154 = vmatpush1.bf16.msra.mxu0 0
  %1155 = vmatprep.subr.bf16.mxu0 0
  %1156 = vmatpush1.bf16.msra.mxu0 0
  %1157 = vmatprep.subr.bf16.mxu0 0
  %1158 = vmatpush1.bf16.msra.mxu0 0
  %1159 = vmatprep.subr.bf16.mxu0 0
  %1160 = vmatpush1.bf16.msra.mxu0 0
  %1161 = vmatprep.subr.bf16.mxu0 0
  %1162 = vmatpush1.bf16.msra.mxu0 0
  %1163 = vmatprep.subr.bf16.mxu0 0
  %1164 = vmatpush1.bf16.msra.mxu0 0
  %1165 = vmatprep.subr.bf16.mxu0 0
  %1166 = vmatpush1.bf16.msra.mxu0 0
  %1167 = vmatprep.subr.bf16.mxu0 0
  %1168 = vmatpush1.bf16.msra.mxu0 0
  %1169 = vmatprep.subr.bf16.mxu0 0
  %1170 = vmatpush1.bf16.msra.mxu0 0
  %1171 = vmatprep.subr.bf16.mxu0 0
  %1172 = vmatpush1.bf16.msra.mxu0 0
  %1173 = vmatprep.mubr.bf16.mxu0 0
  %1174 = vmatmul.mubr.bf16.gmra.mrb[0].mxu0 %v1136
  %v1175 = vpop.f32.mrb[0].mxu0
  %v1176 = vadd.f32 0.0, %v1175
  %v1177 = vpop.f32.mrb[0].mxu0
  %v1178 = vpop.f32.mrb[0].mxu0
  %v1179 = vadd.f32 0.0, %v1178
  %v1180 = vpop.f32.mrb[0].mxu0
  %1181 = vmatprep.mubr.bf16.mxu0 0
  %1182 = vmatmul.mubr.bf16.gmra.mrb[0].mxu0 %v1139
  %v1183 = vpop.f32.mrb[0].mxu0
  %v1184 = vadd.f32 0.0, %v1183
  %v1185 = vpop.f32.mrb[0].mxu0
  %v1186 = vpop.f32.mrb[0].mxu0
  %v1187 = vadd.f32 0.0, %v1186
  %v1188 = vpop.f32.mrb[0].mxu0
  %1189 = vdwg.mxu0
  %v1190 = vadd.f32 %v145, %v1176
  %v1191 = vadd.f32 %v146, %v1179
  %v1192 = vadd.f32 %v147, %v1184
  %v1193 = vadd.f32 %v148, %v1187
  %v1194 = vlaneseq
  %v1195 = vshrl.u32 %v1194, 7
  %v1196 = vsub.s32 5, %v1195
  %v1197 = vrot.slane %v40, %v1196
  %v1198 = vadd.f32 %v1190, %v1197
  %v1199 = vadd.f32 %v1191, %v1197
  %v1200 = vadd.f32 %v1192, %v1197
  %v1201 = vadd.f32 %v1193, %v1197
  %v1202 = vsel %vm171, %v1198, 0.0
  %1203 = vadd.xlane.f32.xlu0 %v1202
  %v1204 = vpop.xlane.xlu0 %1203
  %v1205 = vsel %vm171, %v1199, 0.0
  %1206 = vadd.xlane.f32.xlu0 %v1205
  %v1207 = vpop.xlane.xlu0 %1206
  %v1208 = vsel %vm171, %v1200, 0.0
  %1209 = vadd.xlane.f32.xlu0 %v1208
  %v1210 = vpop.xlane.xlu0 %1209
  %v1211 = vsel %vm171, %v1201, 0.0
  %1212 = vadd.xlane.f32.xlu0 %v1211
  %v1213 = vpop.xlane.xlu0 %1212
  %v1214 = vmul.f32 %v1204, %v184
  %v1215 = vmul.f32 %v1207, %v184
  %v1216 = vmul.f32 %v1210, %v184
  %v1217 = vmul.f32 %v1213, %v184
  %v1218 = vsub.f32 %v1198, %v1214
  %v1219 = vsub.f32 %v1199, %v1215
  %v1220 = vsub.f32 %v1200, %v1216
  %v1221 = vsub.f32 %v1201, %v1217
  %v1222 = vmul.f32 %v1218, %v1218
  %v1223 = vmul.f32 %v1219, %v1219
  %v1224 = vmul.f32 %v1220, %v1220
  %v1225 = vmul.f32 %v1221, %v1221
  %v1226 = vsel %vm171, %v1222, 0.0
  %1227 = vadd.xlane.f32.xlu0 %v1226
  %v1228 = vpop.xlane.xlu0 %1227
  %v1229 = vsel %vm171, %v1223, 0.0
  %1230 = vadd.xlane.f32.xlu0 %v1229
  %v1231 = vpop.xlane.xlu0 %1230
  %v1232 = vsel %vm171, %v1224, 0.0
  %1233 = vadd.xlane.f32.xlu0 %v1232
  %v1234 = vpop.xlane.xlu0 %1233
  %v1235 = vsel %vm171, %v1225, 0.0
  %1236 = vadd.xlane.f32.xlu0 %v1235
  %v1237 = vpop.xlane.xlu0 %1236
  %v1238 = vmul.f32 %v1228, %v184
  %v1239 = vmul.f32 %v1231, %v184
  %v1240 = vmul.f32 %v1234, %v184
  %v1241 = vmul.f32 %v1237, %v184
  %v1242 = vadd.f32 %v1238, 1e-06
  %v1243 = vadd.f32 %v1239, 1e-06
  %v1244 = vadd.f32 %v1240, 1e-06
  %v1245 = vadd.f32 %v1241, 1e-06
  %v1246 = vrsqrt.pop %v1242
  %v1247 = vrsqrt.pop %v1243
  %v1248 = vrsqrt.pop %v1244
  %v1249 = vrsqrt.pop %v1245
  %v1250 = vmul.f32 %v1218, %v1246
  %v1251 = vmul.f32 %v1219, %v1247
  %v1252 = vmul.f32 %v1220, %v1248
  %v1253 = vmul.f32 %v1221, %v1249
  %v1254 = vlaneseq
  %v1255 = vshrl.u32 %v1254, 7
  %v1256 = vsub.s32 6, %v1255
  %v1257 = vrot.slane %v40, %v1256
  %v1258 = vmul.f32 %v1250, %v1257
  %v1259 = vmul.f32 %v1251, %v1257
  %v1260 = vmul.f32 %v1252, %v1257
  %v1261 = vmul.f32 %v1253, %v1257
  %v1262 = vlaneseq
  %v1263 = vshrl.u32 %v1262, 7
  %v1264 = vsub.s32 7, %v1263
  %v1265 = vrot.slane %v40, %v1264
  %v1266 = vadd.f32 %v1258, %v1265
  %v1267 = vadd.f32 %v1259, %v1265
  %v1268 = vadd.f32 %v1260, %v1265
  %v1269 = vadd.f32 %v1261, %v1265
  %v1270 = vpack.c.bf16 %v1267, %v1266
  %v1271 = vpack.c.bf16 %v1269, %v1268
  %v1272 = vld [vmem:[%s5] sm:$0xf]
  %v1273 = vld [vmem:[%s5 + $0x4] sm:$0xf]
  %v1274 = vld [vmem:[%s5 + $0x8] sm:$0xf]
  %v1275 = vld [vmem:[%s5 + $0xc] sm:$0xf]
  %v1276 = vlaneseq
  %v1277 = vshrl.u32 %v1276, 7
  %v1278 = vsub.s32 0, %v1277
  %v1279 = vrot.slane %v41, %v1278
  %v1284 = vunpack.c.l.b16 %v1272
  %v1285 = vunpack.c.l.b16 %v1273
  %v1286 = vunpack.c.l.b16 %v1274
  %v1287 = vunpack.c.l.b16 %v1275
  %v1288 = vpack.c.b16 %v1285, %v1284
  %v1289 = vpack.c.b16 %v1287, %v1286
  %v1293 = vsel %vm171, %v1270, 0
  %v1296 = vsel %vm171, %v1271, 0
  %1298 = vmatprep.subr.bf16.mxu0 0
  %1299 = vmatpush1.bf16.msra.mxu0 %v1288
  %1300 = vmatprep.subr.bf16.mxu0 0
  %1301 = vmatpush1.bf16.msra.mxu0 %v1289
  %1302 = vmatprep.subr.bf16.mxu0 0
  %1303 = vmatpush1.bf16.msra.mxu0 0
  %1304 = vmatprep.subr.bf16.mxu0 0
  %1305 = vmatpush1.bf16.msra.mxu0 0
  %1306 = vmatprep.subr.bf16.mxu0 0
  %1307 = vmatpush1.bf16.msra.mxu0 0
  %1308 = vmatprep.subr.bf16.mxu0 0
  %1309 = vmatpush1.bf16.msra.mxu0 0
  %1310 = vmatprep.subr.bf16.mxu0 0
  %1311 = vmatpush1.bf16.msra.mxu0 0
  %1312 = vmatprep.subr.bf16.mxu0 0
  %1313 = vmatpush1.bf16.msra.mxu0 0
  %1314 = vmatprep.subr.bf16.mxu0 0
  %1315 = vmatpush1.bf16.msra.mxu0 0
  %1316 = vmatprep.subr.bf16.mxu0 0
  %1317 = vmatpush1.bf16.msra.mxu0 0
  %1318 = vmatprep.subr.bf16.mxu0 0
  %1319 = vmatpush1.bf16.msra.mxu0 0
  %1320 = vmatprep.subr.bf16.mxu0 0
  %1321 = vmatpush1.bf16.msra.mxu0 0
  %1322 = vmatprep.subr.bf16.mxu0 0
  %1323 = vmatpush1.bf16.msra.mxu0 0
  %1324 = vmatprep.subr.bf16.mxu0 0
  %1325 = vmatpush1.bf16.msra.mxu0 0
  %1326 = vmatprep.subr.bf16.mxu0 0
  %1327 = vmatpush1.bf16.msra.mxu0 0
  %1328 = vmatprep.subr.bf16.mxu0 0
  %1329 = vmatpush1.bf16.msra.mxu0 0
  %1330 = vmatprep.mubr.bf16.mxu0 0
  %1331 = vmatmul.mubr.bf16.gmra.mrb[0].mxu0 %v1293
  %v1332 = vpop.f32.mrb[0].mxu0
  %v1333 = vadd.f32 %v1279, %v1332
  %v1334 = vpop.f32.mrb[0].mxu0
  %v1335 = vpop.f32.mrb[0].mxu0
  %v1336 = vadd.f32 %v1279, %v1335
  %v1337 = vpop.f32.mrb[0].mxu0
  %1338 = vmatprep.mubr.bf16.mxu0 0
  %1339 = vmatmul.mubr.bf16.gmra.mrb[0].mxu0 %v1296
  %v1340 = vpop.f32.mrb[0].mxu0
  %v1341 = vadd.f32 %v1279, %v1340
  %v1342 = vpop.f32.mrb[0].mxu0
  %v1343 = vpop.f32.mrb[0].mxu0
  %v1344 = vadd.f32 %v1279, %v1343
  %v1345 = vpop.f32.mrb[0].mxu0
  %1346 = vdwg.mxu0
  %v1347 = vmul.f32 %v1333, 0.5
  %v1348 = vmul.f32 %v1336, 0.5
  %v1349 = vmul.f32 %v1341, 0.5
  %v1350 = vmul.f32 %v1344, 0.5
  %v1351 = vmul.f32 %v1333, 0.70710677
  %v1352 = vmul.f32 %v1336, 0.70710677
  %v1353 = vmul.f32 %v1341, 0.70710677
  %v1354 = vmul.f32 %v1344, 0.70710677
  %v1355 = vand.u32 2147483647, %v1351
  %v1356 = vand.u32 2147483647, %v1352
  %v1357 = vand.u32 2147483647, %v1353
  %v1358 = vand.u32 2147483647, %v1354
  %v1359 = vmul.f32 %v1355, 0.3275911
  %v1360 = vmul.f32 %v1356, 0.3275911
  %v1361 = vmul.f32 %v1357, 0.3275911
  %v1362 = vmul.f32 %v1358, 0.3275911
  %v1363 = vadd.f32 %v1359, 1.0
  %v1364 = vadd.f32 %v1360, 1.0
  %v1365 = vadd.f32 %v1361, 1.0
  %v1366 = vadd.f32 %v1362, 1.0
  %v1367 = vrcp.pop %v1363
  %v1368 = vmul.f32 1.0, %v1367
  %v1369 = vrcp.pop %v1364
  %v1370 = vmul.f32 1.0, %v1369
  %v1371 = vrcp.pop %v1365
  %v1372 = vmul.f32 1.0, %v1371
  %v1373 = vrcp.pop %v1366
  %v1374 = vmul.f32 1.0, %v1373
  %v1375 = vmul.f32 %v1368, 1.0614054
  %v1376 = vmul.f32 %v1370, 1.0614054
  %v1377 = vmul.f32 %v1372, 1.0614054
  %v1378 = vmul.f32 %v1374, 1.0614054
  %v1379 = vadd.f32 %v1375, -1.4531521
  %v1380 = vadd.f32 %v1376, -1.4531521
  %v1381 = vadd.f32 %v1377, -1.4531521
  %v1382 = vadd.f32 %v1378, -1.4531521
  %v1383 = vmul.f32 %v1379, %v1368
  %v1384 = vmul.f32 %v1380, %v1370
  %v1385 = vmul.f32 %v1381, %v1372
  %v1386 = vmul.f32 %v1382, %v1374
  %v1387 = vadd.f32 %v1383, 1.4214138
  %v1388 = vadd.f32 %v1384, 1.4214138
  %v1389 = vadd.f32 %v1385, 1.4214138
  %v1390 = vadd.f32 %v1386, 1.4214138
  %v1391 = vmul.f32 %v1387, %v1368
  %v1392 = vmul.f32 %v1388, %v1370
  %v1393 = vmul.f32 %v1389, %v1372
  %v1394 = vmul.f32 %v1390, %v1374
  %v1395 = vadd.f32 %v1391, -0.28449672
  %v1396 = vadd.f32 %v1392, -0.28449672
  %v1397 = vadd.f32 %v1393, -0.28449672
  %v1398 = vadd.f32 %v1394, -0.28449672
  %v1399 = vmul.f32 %v1395, %v1368
  %v1400 = vmul.f32 %v1396, %v1370
  %v1401 = vmul.f32 %v1397, %v1372
  %v1402 = vmul.f32 %v1398, %v1374
  %v1403 = vadd.f32 %v1399, 0.2548296
  %v1404 = vadd.f32 %v1400, 0.2548296
  %v1405 = vadd.f32 %v1401, 0.2548296
  %v1406 = vadd.f32 %v1402, 0.2548296
  %v1407 = vmul.f32 %v1403, %v1368
  %v1408 = vmul.f32 %v1404, %v1370
  %v1409 = vmul.f32 %v1405, %v1372
  %v1410 = vmul.f32 %v1406, %v1374
  %v1411 = vsub.f32 0.0, %v1355
  %v1412 = vsub.f32 0.0, %v1356
  %v1413 = vsub.f32 0.0, %v1357
  %v1414 = vsub.f32 0.0, %v1358
  %v1415 = vmul.f32 %v1411, %v1355
  %v1416 = vmul.f32 %v1412, %v1356
  %v1417 = vmul.f32 %v1413, %v1357
  %v1418 = vmul.f32 %v1414, %v1358
  %v1419 = vmul.f32 %v1415, 1.442695
  %v1420 = vpow.pop %v1419
  %v1421 = vmul.f32 %v1416, 1.442695
  %v1422 = vpow.pop %v1421
  %v1423 = vmul.f32 %v1417, 1.442695
  %v1424 = vpow.pop %v1423
  %v1425 = vmul.f32 %v1418, 1.442695
  %v1426 = vpow.pop %v1425
  %v1427 = vmul.f32 %v1407, %v1420
  %v1428 = vmul.f32 %v1408, %v1422
  %v1429 = vmul.f32 %v1409, %v1424
  %v1430 = vmul.f32 %v1410, %v1426
  %v1431 = vsub.f32 1.0, %v1427
  %v1432 = vsub.f32 1.0, %v1428
  %v1433 = vsub.f32 1.0, %v1429
  %v1434 = vsub.f32 1.0, %v1430
  %vm1435 = vcmp.ge.f32.partialorder %v1351, 0.0
  %vm1436 = vcmp.ge.f32.partialorder %v1352, 0.0
  %vm1437 = vcmp.ge.f32.partialorder %v1353, 0.0
  %vm1438 = vcmp.ge.f32.partialorder %v1354, 0.0
  %v1439 = vsub.f32 0.0, %v1431
  %v1440 = vsub.f32 0.0, %v1432
  %v1441 = vsub.f32 0.0, %v1433
  %v1442 = vsub.f32 0.0, %v1434
  %v1443 = vsel %vm1435, %v1431, %v1439
  %v1444 = vsel %vm1436, %v1432, %v1440
  %v1445 = vsel %vm1437, %v1433, %v1441
  %v1446 = vsel %vm1438, %v1434, %v1442
  %v1447 = vadd.f32 %v1443, 1.0
  %v1448 = vadd.f32 %v1444, 1.0
  %v1449 = vadd.f32 %v1445, 1.0
  %v1450 = vadd.f32 %v1446, 1.0
  %v1451 = vmul.f32 %v1347, %v1447
  %v1452 = vmul.f32 %v1348, %v1448
  %v1453 = vmul.f32 %v1349, %v1449
  %v1454 = vmul.f32 %v1350, %v1450
  %v1455 = vpack.c.bf16 %v1452, %v1451
  %v1456 = vpack.c.bf16 %v1454, %v1453
  %v1457 = vld [vmem:[%s6] sm:$0xf]
  %v1458 = vld [vmem:[%s6 + $0x4] sm:$0xf]
  %v1459 = vld [vmem:[%s6 + $0x8] sm:$0xf]
  %v1460 = vld [vmem:[%s6 + $0xc] sm:$0xf]
  %v1461 = vld [vmem:[%s6 + $0x10] sm:$0xf]
  %v1462 = vld [vmem:[%s6 + $0x14] sm:$0xf]
  %v1463 = vld [vmem:[%s6 + $0x18] sm:$0xf]
  %v1464 = vld [vmem:[%s6 + $0x1c] sm:$0xf]
  %v1465 = vld [vmem:[%s6 + $0x20] sm:$0xf]
  %v1466 = vld [vmem:[%s6 + $0x24] sm:$0xf]
  %v1467 = vld [vmem:[%s6 + $0x28] sm:$0xf]
  %v1468 = vld [vmem:[%s6 + $0x2c] sm:$0xf]
  %v1469 = vld [vmem:[%s6 + $0x30] sm:$0xf]
  %v1470 = vld [vmem:[%s6 + $0x34] sm:$0xf]
  %v1471 = vld [vmem:[%s6 + $0x38] sm:$0xf]
  %v1472 = vld [vmem:[%s6 + $0x3c] sm:$0xf]
  %v1489 = vunpack.c.l.b16 %v1457
  %v1490 = vunpack.c.l.b16 %v1458
  %v1491 = vunpack.c.l.b16 %v1459
  %v1492 = vunpack.c.l.b16 %v1460
  %v1493 = vunpack.c.l.b16 %v1461
  %v1494 = vunpack.c.l.b16 %v1462
  %v1495 = vunpack.c.l.b16 %v1463
  %v1496 = vunpack.c.l.b16 %v1464
  %v1497 = vunpack.c.l.b16 %v1465
  %v1498 = vunpack.c.l.b16 %v1466
  %v1499 = vunpack.c.l.b16 %v1467
  %v1500 = vunpack.c.l.b16 %v1468
  %v1501 = vunpack.c.l.b16 %v1469
  %v1502 = vunpack.c.l.b16 %v1470
  %v1503 = vunpack.c.l.b16 %v1471
  %v1504 = vunpack.c.l.b16 %v1472
  %v1505 = vpack.c.b16 %v1490, %v1489
  %v1506 = vpack.c.b16 %v1492, %v1491
  %v1507 = vpack.c.b16 %v1494, %v1493
  %v1508 = vpack.c.b16 %v1496, %v1495
  %v1509 = vpack.c.b16 %v1498, %v1497
  %v1510 = vpack.c.b16 %v1500, %v1499
  %v1511 = vpack.c.b16 %v1502, %v1501
  %v1512 = vpack.c.b16 %v1504, %v1503
  %1521 = vmatprep.subr.bf16.mxu0 0
  %1522 = vmatpush1.bf16.msra.mxu0 %v1505
  %1523 = vmatprep.subr.bf16.mxu0 0
  %1524 = vmatpush1.bf16.msra.mxu0 %v1506
  %1525 = vmatprep.subr.bf16.mxu0 0
  %1526 = vmatpush1.bf16.msra.mxu0 %v1507
  %1527 = vmatprep.subr.bf16.mxu0 0
  %1528 = vmatpush1.bf16.msra.mxu0 %v1508
  %1529 = vmatprep.subr.bf16.mxu0 0
  %1530 = vmatpush1.bf16.msra.mxu0 %v1509
  %1531 = vmatprep.subr.bf16.mxu0 0
  %1532 = vmatpush1.bf16.msra.mxu0 %v1510
  %1533 = vmatprep.subr.bf16.mxu0 0
  %1534 = vmatpush1.bf16.msra.mxu0 %v1511
  %1535 = vmatprep.subr.bf16.mxu0 0
  %1536 = vmatpush1.bf16.msra.mxu0 %v1512
  %1537 = vmatprep.subr.bf16.mxu0 0
  %1538 = vmatpush1.bf16.msra.mxu0 0
  %1539 = vmatprep.subr.bf16.mxu0 0
  %1540 = vmatpush1.bf16.msra.mxu0 0
  %1541 = vmatprep.subr.bf16.mxu0 0
  %1542 = vmatpush1.bf16.msra.mxu0 0
  %1543 = vmatprep.subr.bf16.mxu0 0
  %1544 = vmatpush1.bf16.msra.mxu0 0
  %1545 = vmatprep.subr.bf16.mxu0 0
  %1546 = vmatpush1.bf16.msra.mxu0 0
  %1547 = vmatprep.subr.bf16.mxu0 0
  %1548 = vmatpush1.bf16.msra.mxu0 0
  %1549 = vmatprep.subr.bf16.mxu0 0
  %1550 = vmatpush1.bf16.msra.mxu0 0
  %1551 = vmatprep.subr.bf16.mxu0 0
  %1552 = vmatpush1.bf16.msra.mxu0 0
  %1553 = vmatprep.mubr.bf16.mxu0 0
  %1554 = vmatmul.mubr.bf16.gmra.mrb[0].mxu0 %v1455
  %v1555 = vpop.f32.mrb[0].mxu0
  %v1556 = vadd.f32 0.0, %v1555
  %v1557 = vpop.f32.mrb[0].mxu0
  %v1558 = vpop.f32.mrb[0].mxu0
  %v1559 = vadd.f32 0.0, %v1558
  %v1560 = vpop.f32.mrb[0].mxu0
  %1561 = vmatprep.mubr.bf16.mxu0 0
  %1562 = vmatmul.mubr.bf16.gmra.mrb[0].mxu0 %v1456
  %v1563 = vpop.f32.mrb[0].mxu0
  %v1564 = vadd.f32 0.0, %v1563
  %v1565 = vpop.f32.mrb[0].mxu0
  %v1566 = vpop.f32.mrb[0].mxu0
  %v1567 = vadd.f32 0.0, %v1566
  %v1568 = vpop.f32.mrb[0].mxu0
  %1569 = vdwg.mxu0
  %v1570 = vadd.f32 %v1198, %v1556
  %v1571 = vadd.f32 %v1199, %v1559
  %v1572 = vadd.f32 %v1200, %v1564
  %v1573 = vadd.f32 %v1201, %v1567
  %v1574 = vlaneseq
  %v1575 = vshrl.u32 %v1574, 7
  %v1576 = vsub.s32 1, %v1575
  %v1577 = vrot.slane %v41, %v1576
  %v1578 = vadd.f32 %v1570, %v1577
  %v1579 = vadd.f32 %v1571, %v1577
  %v1580 = vadd.f32 %v1572, %v1577
  %v1581 = vadd.f32 %v1573, %v1577
  %v1582 = vsel %vm171, %v1578, 0.0
  %1583 = vadd.xlane.f32.xlu0 %v1582
  %v1584 = vpop.xlane.xlu0 %1583
  %v1585 = vsel %vm171, %v1579, 0.0
  %1586 = vadd.xlane.f32.xlu0 %v1585
  %v1587 = vpop.xlane.xlu0 %1586
  %v1588 = vsel %vm171, %v1580, 0.0
  %1589 = vadd.xlane.f32.xlu0 %v1588
  %v1590 = vpop.xlane.xlu0 %1589
  %v1591 = vsel %vm171, %v1581, 0.0
  %1592 = vadd.xlane.f32.xlu0 %v1591
  %v1593 = vpop.xlane.xlu0 %1592
  %v1594 = vmul.f32 %v1584, %v184
  %v1595 = vmul.f32 %v1587, %v184
  %v1596 = vmul.f32 %v1590, %v184
  %v1597 = vmul.f32 %v1593, %v184
  %v1598 = vsub.f32 %v1578, %v1594
  %v1599 = vsub.f32 %v1579, %v1595
  %v1600 = vsub.f32 %v1580, %v1596
  %v1601 = vsub.f32 %v1581, %v1597
  %v1602 = vmul.f32 %v1598, %v1598
  %v1603 = vmul.f32 %v1599, %v1599
  %v1604 = vmul.f32 %v1600, %v1600
  %v1605 = vmul.f32 %v1601, %v1601
  %v1606 = vsel %vm171, %v1602, 0.0
  %1607 = vadd.xlane.f32.xlu0 %v1606
  %v1608 = vpop.xlane.xlu0 %1607
  %v1609 = vsel %vm171, %v1603, 0.0
  %1610 = vadd.xlane.f32.xlu0 %v1609
  %v1611 = vpop.xlane.xlu0 %1610
  %v1612 = vsel %vm171, %v1604, 0.0
  %1613 = vadd.xlane.f32.xlu0 %v1612
  %v1614 = vpop.xlane.xlu0 %1613
  %v1615 = vsel %vm171, %v1605, 0.0
  %1616 = vadd.xlane.f32.xlu0 %v1615
  %v1617 = vpop.xlane.xlu0 %1616
  %v1618 = vmul.f32 %v1608, %v184
  %v1619 = vmul.f32 %v1611, %v184
  %v1620 = vmul.f32 %v1614, %v184
  %v1621 = vmul.f32 %v1617, %v184
  %v1622 = vadd.f32 %v1618, 1e-06
  %v1623 = vadd.f32 %v1619, 1e-06
  %v1624 = vadd.f32 %v1620, 1e-06
  %v1625 = vadd.f32 %v1621, 1e-06
  %v1626 = vrsqrt.pop %v1622
  %v1627 = vrsqrt.pop %v1623
  %v1628 = vrsqrt.pop %v1624
  %v1629 = vrsqrt.pop %v1625
  %v1630 = vmul.f32 %v1598, %v1626
  %v1631 = vmul.f32 %v1599, %v1627
  %v1632 = vmul.f32 %v1600, %v1628
  %v1633 = vmul.f32 %v1601, %v1629
  %v1634 = vlaneseq
  %v1635 = vshrl.u32 %v1634, 7
  %v1636 = vsub.s32 2, %v1635
  %v1637 = vrot.slane %v41, %v1636
  %v1638 = vmul.f32 %v1630, %v1637
  %v1639 = vmul.f32 %v1631, %v1637
  %v1640 = vmul.f32 %v1632, %v1637
  %v1641 = vmul.f32 %v1633, %v1637
  %v1642 = vlaneseq
  %v1643 = vshrl.u32 %v1642, 7
  %v1644 = vsub.s32 3, %v1643
  %v1645 = vrot.slane %v41, %v1644
  %v1646 = vadd.f32 %v1638, %v1645
  %v1647 = vadd.f32 %v1639, %v1645
  %v1648 = vadd.f32 %v1640, %v1645
  %v1649 = vadd.f32 %v1641, %v1645
  %v1650 = vpack.c.bf16 %v1647, %v1646
  %v1651 = vpack.c.bf16 %v1649, %v1648
  %v1652 = vld [vmem:[%s7] sm:$0xf]
  %v1653 = vld [vmem:[%s7 + $0x4] sm:$0xf]
  %v1654 = vld [vmem:[%s7 + $0x8] sm:$0xf]
  %v1655 = vld [vmem:[%s7 + $0xc] sm:$0xf]
  %v1656 = vlaneseq
  %v1657 = vshrl.u32 %v1656, 7
  %v1658 = vsub.s32 4, %v1657
  %v1659 = vrot.slane %v41, %v1658
  %v1664 = vunpack.c.l.b16 %v1652
  %v1665 = vunpack.c.l.b16 %v1653
  %v1666 = vunpack.c.l.b16 %v1654
  %v1667 = vunpack.c.l.b16 %v1655
  %v1668 = vpack.c.b16 %v1665, %v1664
  %v1669 = vpack.c.b16 %v1667, %v1666
  %v1673 = vsel %vm171, %v1650, 0
  %v1676 = vsel %vm171, %v1651, 0
  %1678 = vmatprep.subr.bf16.mxu0 0
  %1679 = vmatpush1.bf16.msra.mxu0 %v1668
  %1680 = vmatprep.subr.bf16.mxu0 0
  %1681 = vmatpush1.bf16.msra.mxu0 %v1669
  %1682 = vmatprep.subr.bf16.mxu0 0
  %1683 = vmatpush1.bf16.msra.mxu0 0
  %1684 = vmatprep.subr.bf16.mxu0 0
  %1685 = vmatpush1.bf16.msra.mxu0 0
  %1686 = vmatprep.subr.bf16.mxu0 0
  %1687 = vmatpush1.bf16.msra.mxu0 0
  %1688 = vmatprep.subr.bf16.mxu0 0
  %1689 = vmatpush1.bf16.msra.mxu0 0
  %1690 = vmatprep.subr.bf16.mxu0 0
  %1691 = vmatpush1.bf16.msra.mxu0 0
  %1692 = vmatprep.subr.bf16.mxu0 0
  %1693 = vmatpush1.bf16.msra.mxu0 0
  %1694 = vmatprep.subr.bf16.mxu0 0
  %1695 = vmatpush1.bf16.msra.mxu0 0
  %1696 = vmatprep.subr.bf16.mxu0 0
  %1697 = vmatpush1.bf16.msra.mxu0 0
  %1698 = vmatprep.subr.bf16.mxu0 0
  %1699 = vmatpush1.bf16.msra.mxu0 0
  %1700 = vmatprep.subr.bf16.mxu0 0
  %1701 = vmatpush1.bf16.msra.mxu0 0
  %1702 = vmatprep.subr.bf16.mxu0 0
  %1703 = vmatpush1.bf16.msra.mxu0 0
  %1704 = vmatprep.subr.bf16.mxu0 0
  %1705 = vmatpush1.bf16.msra.mxu0 0
  %1706 = vmatprep.subr.bf16.mxu0 0
  %1707 = vmatpush1.bf16.msra.mxu0 0
  %1708 = vmatprep.subr.bf16.mxu0 0
  %1709 = vmatpush1.bf16.msra.mxu0 0
  %1710 = vmatprep.mubr.bf16.mxu0 0
  %1711 = vmatmul.mubr.bf16.gmra.mrb[0].mxu0 %v1673
  %v1712 = vpop.f32.mrb[0].mxu0
  %v1713 = vadd.f32 %v1659, %v1712
  %v1714 = vpop.f32.mrb[0].mxu0
  %v1715 = vpop.f32.mrb[0].mxu0
  %v1716 = vadd.f32 %v1659, %v1715
  %v1717 = vpop.f32.mrb[0].mxu0
  %1718 = vmatprep.mubr.bf16.mxu0 0
  %1719 = vmatmul.mubr.bf16.gmra.mrb[0].mxu0 %v1676
  %v1720 = vpop.f32.mrb[0].mxu0
  %v1721 = vadd.f32 %v1659, %v1720
  %v1722 = vpop.f32.mrb[0].mxu0
  %v1723 = vpop.f32.mrb[0].mxu0
  %v1724 = vadd.f32 %v1659, %v1723
  %v1725 = vpop.f32.mrb[0].mxu0
  %1726 = vdwg.mxu0
  %v1727 = vpack.c.bf16 %v1716, %v1713
  %v1728 = vpack.c.bf16 %v1724, %v1721
  %1731 = vrot.lane.b32.xlu0 %v1727, 96
  %v1732 = vpop.permute.xlu0 %1731
  %1733 = vrot.lane.b32.xlu0 %v1728, 96
  %v1734 = vpop.permute.xlu0 %1733
  %v1736 = vsel %vm326, %v1727, 0
  %v1739 = vsel %vm326, %v1728, 0
  %v1742 = vsel %vm326, %v1732, 0
  %v1745 = vsel %vm326, %v1734, 0
  %1747 = vmatprep.subr.bf16.mxu0 0
  %1748 = vmatpush1.bf16.xpose.msra.mxu0 %v1742
  %1749 = vmatprep.subr.bf16.mxu0 0
  %1750 = vmatpush1.bf16.xpose.msra.mxu0 %v1745
  %1751 = vmatprep.subr.bf16.mxu0 0
  %1752 = vmatpush1.bf16.xpose.msra.mxu0 0
  %1753 = vmatprep.subr.bf16.mxu0 0
  %1754 = vmatpush1.bf16.xpose.msra.mxu0 0
  %1755 = vmatprep.subr.bf16.mxu0 0
  %1756 = vmatpush1.bf16.xpose.msra.mxu0 0
  %1757 = vmatprep.subr.bf16.mxu0 0
  %1758 = vmatpush1.bf16.xpose.msra.mxu0 0
  %1759 = vmatprep.subr.bf16.mxu0 0
  %1760 = vmatpush1.bf16.xpose.msra.mxu0 0
  %1761 = vmatprep.subr.bf16.mxu0 0
  %1762 = vmatpush1.bf16.xpose.msra.mxu0 0
  %1763 = vmatprep.subr.bf16.mxu0 0
  %1764 = vmatpush1.bf16.xpose.msra.mxu0 0
  %1765 = vmatprep.subr.bf16.mxu0 0
  %1766 = vmatpush1.bf16.xpose.msra.mxu0 0
  %1767 = vmatprep.subr.bf16.mxu0 0
  %1768 = vmatpush1.bf16.xpose.msra.mxu0 0
  %1769 = vmatprep.subr.bf16.mxu0 0
  %1770 = vmatpush1.bf16.xpose.msra.mxu0 0
  %1771 = vmatprep.subr.bf16.mxu0 0
  %1772 = vmatpush1.bf16.xpose.msra.mxu0 0
  %1773 = vmatprep.subr.bf16.mxu0 0
  %1774 = vmatpush1.bf16.xpose.msra.mxu0 0
  %1775 = vmatprep.subr.bf16.mxu0 0
  %1776 = vmatpush1.bf16.xpose.msra.mxu0 0
  %1777 = vmatprep.subr.bf16.mxu0 0
  %1778 = vmatpush1.bf16.xpose.msra.mxu0 0
  %1779 = vmatprep.mubr.bf16.mxu0 0
  %1780 = vmatmul.mubr.bf16.gmra.mrb[0].mxu0 %v1736
  %v1781 = vpop.f32.mrb[0].mxu0
  %v1782 = vadd.f32 0.0, %v1781
  %v1783 = vpop.f32.mrb[0].mxu0
  %v1784 = vpop.f32.mrb[0].mxu0
  %v1785 = vadd.f32 0.0, %v1784
  %v1786 = vpop.f32.mrb[0].mxu0
  %1787 = vmatprep.mubr.bf16.mxu0 0
  %1788 = vmatmul.mubr.bf16.gmra.mrb[0].mxu0 %v1739
  %v1789 = vpop.f32.mrb[0].mxu0
  %v1790 = vadd.f32 0.0, %v1789
  %v1791 = vpop.f32.mrb[0].mxu0
  %v1792 = vpop.f32.mrb[0].mxu0
  %v1793 = vadd.f32 0.0, %v1792
  %v1794 = vpop.f32.mrb[0].mxu0
  %1795 = vdwg.mxu0
  %v1796 = vmul.f32 %v1782, 0.35355338
  %v1797 = vmul.f32 %v1785, 0.35355338
  %v1798 = vmul.f32 %v1790, 0.35355338
  %v1799 = vmul.f32 %v1793, 0.35355338
  %v1800 = vsel %vm167, %v1796, -1e+30
  %v1801 = vsel %vm168, %v1797, -1e+30
  %v1802 = vsel %vm169, %v1798, -1e+30
  %v1803 = vsel %vm170, %v1799, -1e+30
  %v1804 = vsel %vm171, %v1800, -inf
  %1805 = vmax.xlane.f32.xlu0 %v1804
  %v1806 = vpop.xlane.xlu0 %1805
  %v1807 = vsel %vm171, %v1801, -inf
  %1808 = vmax.xlane.f32.xlu0 %v1807
  %v1809 = vpop.xlane.xlu0 %1808
  %v1810 = vsel %vm171, %v1802, -inf
  %1811 = vmax.xlane.f32.xlu0 %v1810
  %v1812 = vpop.xlane.xlu0 %1811
  %v1813 = vsel %vm171, %v1803, -inf
  %1814 = vmax.xlane.f32.xlu0 %v1813
  %v1815 = vpop.xlane.xlu0 %1814
  %v1816 = vsub.f32 %v1800, %v1806
  %v1817 = vsub.f32 %v1801, %v1809
  %v1818 = vsub.f32 %v1802, %v1812
  %v1819 = vsub.f32 %v1803, %v1815
  %v1820 = vmul.f32 %v1816, 1.442695
  %v1821 = vpow.pop %v1820
  %v1822 = vmul.f32 %v1817, 1.442695
  %v1823 = vpow.pop %v1822
  %v1824 = vmul.f32 %v1818, 1.442695
  %v1825 = vpow.pop %v1824
  %v1826 = vmul.f32 %v1819, 1.442695
  %v1827 = vpow.pop %v1826
  %v1828 = vsel %vm171, %v1821, 0.0
  %1829 = vadd.xlane.f32.xlu0 %v1828
  %v1830 = vpop.xlane.xlu0 %1829
  %v1831 = vsel %vm171, %v1823, 0.0
  %1832 = vadd.xlane.f32.xlu0 %v1831
  %v1833 = vpop.xlane.xlu0 %1832
  %v1834 = vsel %vm171, %v1825, 0.0
  %1835 = vadd.xlane.f32.xlu0 %v1834
  %v1836 = vpop.xlane.xlu0 %1835
  %v1837 = vsel %vm171, %v1827, 0.0
  %1838 = vadd.xlane.f32.xlu0 %v1837
  %v1839 = vpop.xlane.xlu0 %1838
  %v1840 = vrcp.pop %v1830
  %v1841 = vmul.f32 %v1821, %v1840
  %v1842 = vrcp.pop %v1833
  %v1843 = vmul.f32 %v1823, %v1842
  %v1844 = vrcp.pop %v1836
  %v1845 = vmul.f32 %v1825, %v1844
  %v1846 = vrcp.pop %v1839
  %v1847 = vmul.f32 %v1827, %v1846
  %v1848 = vpack.c.bf16 %v1843, %v1841
  %v1849 = vpack.c.bf16 %v1847, %v1845
  %1850 = vrot.lane.b32.xlu0 %v1727, 64
  %v1851 = vpop.permute.xlu0 %1850
  %1852 = vrot.lane.b32.xlu0 %v1728, 64
  %v1853 = vpop.permute.xlu0 %1852
  %v1857 = vsel %vm171, %v1848, 0
  %v1860 = vsel %vm171, %v1849, 0
  %1862 = vmatprep.subr.bf16.mxu0 0
  %1863 = vmatpush1.bf16.msra.mxu0 %v1851
  %1864 = vmatprep.subr.bf16.mxu0 0
  %1865 = vmatpush1.bf16.msra.mxu0 %v1853
  %1866 = vmatprep.subr.bf16.mxu0 0
  %1867 = vmatpush1.bf16.msra.mxu0 0
  %1868 = vmatprep.subr.bf16.mxu0 0
  %1869 = vmatpush1.bf16.msra.mxu0 0
  %1870 = vmatprep.subr.bf16.mxu0 0
  %1871 = vmatpush1.bf16.msra.mxu0 0
  %1872 = vmatprep.subr.bf16.mxu0 0
  %1873 = vmatpush1.bf16.msra.mxu0 0
  %1874 = vmatprep.subr.bf16.mxu0 0
  %1875 = vmatpush1.bf16.msra.mxu0 0
  %1876 = vmatprep.subr.bf16.mxu0 0
  %1877 = vmatpush1.bf16.msra.mxu0 0
  %1878 = vmatprep.subr.bf16.mxu0 0
  %1879 = vmatpush1.bf16.msra.mxu0 0
  %1880 = vmatprep.subr.bf16.mxu0 0
  %1881 = vmatpush1.bf16.msra.mxu0 0
  %1882 = vmatprep.subr.bf16.mxu0 0
  %1883 = vmatpush1.bf16.msra.mxu0 0
  %1884 = vmatprep.subr.bf16.mxu0 0
  %1885 = vmatpush1.bf16.msra.mxu0 0
  %1886 = vmatprep.subr.bf16.mxu0 0
  %1887 = vmatpush1.bf16.msra.mxu0 0
  %1888 = vmatprep.subr.bf16.mxu0 0
  %1889 = vmatpush1.bf16.msra.mxu0 0
  %1890 = vmatprep.subr.bf16.mxu0 0
  %1891 = vmatpush1.bf16.msra.mxu0 0
  %1892 = vmatprep.subr.bf16.mxu0 0
  %1893 = vmatpush1.bf16.msra.mxu0 0
  %1894 = vmatprep.mubr.bf16.mxu0 0
  %1895 = vmatmul.mubr.bf16.gmra.mrb[0].mxu0 %v1857
  %v1896 = vpop.f32.mrb[0].mxu0
  %v1897 = vadd.f32 0.0, %v1896
  %v1898 = vpop.f32.mrb[0].mxu0
  %v1899 = vpop.f32.mrb[0].mxu0
  %v1900 = vadd.f32 0.0, %v1899
  %v1901 = vpop.f32.mrb[0].mxu0
  %1902 = vmatprep.mubr.bf16.mxu0 0
  %1903 = vmatmul.mubr.bf16.gmra.mrb[0].mxu0 %v1860
  %v1904 = vpop.f32.mrb[0].mxu0
  %v1905 = vadd.f32 0.0, %v1904
  %v1906 = vpop.f32.mrb[0].mxu0
  %v1907 = vpop.f32.mrb[0].mxu0
  %v1908 = vadd.f32 0.0, %v1907
  %v1909 = vpop.f32.mrb[0].mxu0
  %1910 = vdwg.mxu0
  %1911 = vrot.lane.b32.xlu0 %v1727, 120
  %v1912 = vpop.permute.xlu0 %1911
  %1913 = vrot.lane.b32.xlu0 %v1728, 120
  %v1914 = vpop.permute.xlu0 %1913
  %1915 = vrot.lane.b32.xlu0 %v1727, 88
  %v1916 = vpop.permute.xlu0 %1915
  %1917 = vrot.lane.b32.xlu0 %v1728, 88
  %v1918 = vpop.permute.xlu0 %1917
  %v1920 = vsel %vm326, %v1912, 0
  %v1923 = vsel %vm326, %v1914, 0
  %v1926 = vsel %vm326, %v1916, 0
  %v1929 = vsel %vm326, %v1918, 0
  %1931 = vmatprep.subr.bf16.mxu0 0
  %1932 = vmatpush1.bf16.xpose.msra.mxu0 %v1926
  %1933 = vmatprep.subr.bf16.mxu0 0
  %1934 = vmatpush1.bf16.xpose.msra.mxu0 %v1929
  %1935 = vmatprep.subr.bf16.mxu0 0
  %1936 = vmatpush1.bf16.xpose.msra.mxu0 0
  %1937 = vmatprep.subr.bf16.mxu0 0
  %1938 = vmatpush1.bf16.xpose.msra.mxu0 0
  %1939 = vmatprep.subr.bf16.mxu0 0
  %1940 = vmatpush1.bf16.xpose.msra.mxu0 0
  %1941 = vmatprep.subr.bf16.mxu0 0
  %1942 = vmatpush1.bf16.xpose.msra.mxu0 0
  %1943 = vmatprep.subr.bf16.mxu0 0
  %1944 = vmatpush1.bf16.xpose.msra.mxu0 0
  %1945 = vmatprep.subr.bf16.mxu0 0
  %1946 = vmatpush1.bf16.xpose.msra.mxu0 0
  %1947 = vmatprep.subr.bf16.mxu0 0
  %1948 = vmatpush1.bf16.xpose.msra.mxu0 0
  %1949 = vmatprep.subr.bf16.mxu0 0
  %1950 = vmatpush1.bf16.xpose.msra.mxu0 0
  %1951 = vmatprep.subr.bf16.mxu0 0
  %1952 = vmatpush1.bf16.xpose.msra.mxu0 0
  %1953 = vmatprep.subr.bf16.mxu0 0
  %1954 = vmatpush1.bf16.xpose.msra.mxu0 0
  %1955 = vmatprep.subr.bf16.mxu0 0
  %1956 = vmatpush1.bf16.xpose.msra.mxu0 0
  %1957 = vmatprep.subr.bf16.mxu0 0
  %1958 = vmatpush1.bf16.xpose.msra.mxu0 0
  %1959 = vmatprep.subr.bf16.mxu0 0
  %1960 = vmatpush1.bf16.xpose.msra.mxu0 0
  %1961 = vmatprep.subr.bf16.mxu0 0
  %1962 = vmatpush1.bf16.xpose.msra.mxu0 0
  %1963 = vmatprep.mubr.bf16.mxu0 0
  %1964 = vmatmul.mubr.bf16.gmra.mrb[0].mxu0 %v1920
  %v1965 = vpop.f32.mrb[0].mxu0
  %v1966 = vadd.f32 0.0, %v1965
  %v1967 = vpop.f32.mrb[0].mxu0
  %v1968 = vpop.f32.mrb[0].mxu0
  %v1969 = vadd.f32 0.0, %v1968
  %v1970 = vpop.f32.mrb[0].mxu0
  %1971 = vmatprep.mubr.bf16.mxu0 0
  %1972 = vmatmul.mubr.bf16.gmra.mrb[0].mxu0 %v1923
  %v1973 = vpop.f32.mrb[0].mxu0
  %v1974 = vadd.f32 0.0, %v1973
  %v1975 = vpop.f32.mrb[0].mxu0
  %v1976 = vpop.f32.mrb[0].mxu0
  %v1977 = vadd.f32 0.0, %v1976
  %v1978 = vpop.f32.mrb[0].mxu0
  %1979 = vdwg.mxu0
  %v1980 = vmul.f32 %v1966, 0.35355338
  %v1981 = vmul.f32 %v1969, 0.35355338
  %v1982 = vmul.f32 %v1974, 0.35355338
  %v1983 = vmul.f32 %v1977, 0.35355338
  %v1984 = vsel %vm167, %v1980, -1e+30
  %v1985 = vsel %vm168, %v1981, -1e+30
  %v1986 = vsel %vm169, %v1982, -1e+30
  %v1987 = vsel %vm170, %v1983, -1e+30
  %v1988 = vsel %vm171, %v1984, -inf
  %1989 = vmax.xlane.f32.xlu0 %v1988
  %v1990 = vpop.xlane.xlu0 %1989
  %v1991 = vsel %vm171, %v1985, -inf
  %1992 = vmax.xlane.f32.xlu0 %v1991
  %v1993 = vpop.xlane.xlu0 %1992
  %v1994 = vsel %vm171, %v1986, -inf
  %1995 = vmax.xlane.f32.xlu0 %v1994
  %v1996 = vpop.xlane.xlu0 %1995
  %v1997 = vsel %vm171, %v1987, -inf
  %1998 = vmax.xlane.f32.xlu0 %v1997
  %v1999 = vpop.xlane.xlu0 %1998
  %v2000 = vsub.f32 %v1984, %v1990
  %v2001 = vsub.f32 %v1985, %v1993
  %v2002 = vsub.f32 %v1986, %v1996
  %v2003 = vsub.f32 %v1987, %v1999
  %v2004 = vmul.f32 %v2000, 1.442695
  %v2005 = vpow.pop %v2004
  %v2006 = vmul.f32 %v2001, 1.442695
  %v2007 = vpow.pop %v2006
  %v2008 = vmul.f32 %v2002, 1.442695
  %v2009 = vpow.pop %v2008
  %v2010 = vmul.f32 %v2003, 1.442695
  %v2011 = vpow.pop %v2010
  %v2012 = vsel %vm171, %v2005, 0.0
  %2013 = vadd.xlane.f32.xlu0 %v2012
  %v2014 = vpop.xlane.xlu0 %2013
  %v2015 = vsel %vm171, %v2007, 0.0
  %2016 = vadd.xlane.f32.xlu0 %v2015
  %v2017 = vpop.xlane.xlu0 %2016
  %v2018 = vsel %vm171, %v2009, 0.0
  %2019 = vadd.xlane.f32.xlu0 %v2018
  %v2020 = vpop.xlane.xlu0 %2019
  %v2021 = vsel %vm171, %v2011, 0.0
  %2022 = vadd.xlane.f32.xlu0 %v2021
  %v2023 = vpop.xlane.xlu0 %2022
  %v2024 = vrcp.pop %v2014
  %v2025 = vmul.f32 %v2005, %v2024
  %v2026 = vrcp.pop %v2017
  %v2027 = vmul.f32 %v2007, %v2026
  %v2028 = vrcp.pop %v2020
  %v2029 = vmul.f32 %v2009, %v2028
  %v2030 = vrcp.pop %v2023
  %v2031 = vmul.f32 %v2011, %v2030
  %v2032 = vpack.c.bf16 %v2027, %v2025
  %v2033 = vpack.c.bf16 %v2031, %v2029
  %2034 = vrot.lane.b32.xlu0 %v1727, 56
  %v2035 = vpop.permute.xlu0 %2034
  %2036 = vrot.lane.b32.xlu0 %v1728, 56
  %v2037 = vpop.permute.xlu0 %2036
  %v2041 = vsel %vm171, %v2032, 0
  %v2044 = vsel %vm171, %v2033, 0
  %2046 = vmatprep.subr.bf16.mxu0 0
  %2047 = vmatpush1.bf16.msra.mxu0 %v2035
  %2048 = vmatprep.subr.bf16.mxu0 0
  %2049 = vmatpush1.bf16.msra.mxu0 %v2037
  %2050 = vmatprep.subr.bf16.mxu0 0
  %2051 = vmatpush1.bf16.msra.mxu0 0
  %2052 = vmatprep.subr.bf16.mxu0 0
  %2053 = vmatpush1.bf16.msra.mxu0 0
  %2054 = vmatprep.subr.bf16.mxu0 0
  %2055 = vmatpush1.bf16.msra.mxu0 0
  %2056 = vmatprep.subr.bf16.mxu0 0
  %2057 = vmatpush1.bf16.msra.mxu0 0
  %2058 = vmatprep.subr.bf16.mxu0 0
  %2059 = vmatpush1.bf16.msra.mxu0 0
  %2060 = vmatprep.subr.bf16.mxu0 0
  %2061 = vmatpush1.bf16.msra.mxu0 0
  %2062 = vmatprep.subr.bf16.mxu0 0
  %2063 = vmatpush1.bf16.msra.mxu0 0
  %2064 = vmatprep.subr.bf16.mxu0 0
  %2065 = vmatpush1.bf16.msra.mxu0 0
  %2066 = vmatprep.subr.bf16.mxu0 0
  %2067 = vmatpush1.bf16.msra.mxu0 0
  %2068 = vmatprep.subr.bf16.mxu0 0
  %2069 = vmatpush1.bf16.msra.mxu0 0
  %2070 = vmatprep.subr.bf16.mxu0 0
  %2071 = vmatpush1.bf16.msra.mxu0 0
  %2072 = vmatprep.subr.bf16.mxu0 0
  %2073 = vmatpush1.bf16.msra.mxu0 0
  %2074 = vmatprep.subr.bf16.mxu0 0
  %2075 = vmatpush1.bf16.msra.mxu0 0
  %2076 = vmatprep.subr.bf16.mxu0 0
  %2077 = vmatpush1.bf16.msra.mxu0 0
  %2078 = vmatprep.mubr.bf16.mxu0 0
  %2079 = vmatmul.mubr.bf16.gmra.mrb[0].mxu0 %v2041
  %v2080 = vpop.f32.mrb[0].mxu0
  %v2081 = vadd.f32 0.0, %v2080
  %v2082 = vpop.f32.mrb[0].mxu0
  %v2083 = vpop.f32.mrb[0].mxu0
  %v2084 = vadd.f32 0.0, %v2083
  %v2085 = vpop.f32.mrb[0].mxu0
  %2086 = vmatprep.mubr.bf16.mxu0 0
  %2087 = vmatmul.mubr.bf16.gmra.mrb[0].mxu0 %v2044
  %v2088 = vpop.f32.mrb[0].mxu0
  %v2089 = vadd.f32 0.0, %v2088
  %v2090 = vpop.f32.mrb[0].mxu0
  %v2091 = vpop.f32.mrb[0].mxu0
  %v2092 = vadd.f32 0.0, %v2091
  %v2093 = vpop.f32.mrb[0].mxu0
  %2094 = vdwg.mxu0
  %2095 = vrot.lane.b32.xlu0 %v1727, 112
  %v2096 = vpop.permute.xlu0 %2095
  %2097 = vrot.lane.b32.xlu0 %v1728, 112
  %v2098 = vpop.permute.xlu0 %2097
  %2099 = vrot.lane.b32.xlu0 %v1727, 80
  %v2100 = vpop.permute.xlu0 %2099
  %2101 = vrot.lane.b32.xlu0 %v1728, 80
  %v2102 = vpop.permute.xlu0 %2101
  %v2104 = vsel %vm326, %v2096, 0
  %v2107 = vsel %vm326, %v2098, 0
  %v2110 = vsel %vm326, %v2100, 0
  %v2113 = vsel %vm326, %v2102, 0
  %2115 = vmatprep.subr.bf16.mxu0 0
  %2116 = vmatpush1.bf16.xpose.msra.mxu0 %v2110
  %2117 = vmatprep.subr.bf16.mxu0 0
  %2118 = vmatpush1.bf16.xpose.msra.mxu0 %v2113
  %2119 = vmatprep.subr.bf16.mxu0 0
  %2120 = vmatpush1.bf16.xpose.msra.mxu0 0
  %2121 = vmatprep.subr.bf16.mxu0 0
  %2122 = vmatpush1.bf16.xpose.msra.mxu0 0
  %2123 = vmatprep.subr.bf16.mxu0 0
  %2124 = vmatpush1.bf16.xpose.msra.mxu0 0
  %2125 = vmatprep.subr.bf16.mxu0 0
  %2126 = vmatpush1.bf16.xpose.msra.mxu0 0
  %2127 = vmatprep.subr.bf16.mxu0 0
  %2128 = vmatpush1.bf16.xpose.msra.mxu0 0
  %2129 = vmatprep.subr.bf16.mxu0 0
  %2130 = vmatpush1.bf16.xpose.msra.mxu0 0
  %2131 = vmatprep.subr.bf16.mxu0 0
  %2132 = vmatpush1.bf16.xpose.msra.mxu0 0
  %2133 = vmatprep.subr.bf16.mxu0 0
  %2134 = vmatpush1.bf16.xpose.msra.mxu0 0
  %2135 = vmatprep.subr.bf16.mxu0 0
  %2136 = vmatpush1.bf16.xpose.msra.mxu0 0
  %2137 = vmatprep.subr.bf16.mxu0 0
  %2138 = vmatpush1.bf16.xpose.msra.mxu0 0
  %2139 = vmatprep.subr.bf16.mxu0 0
  %2140 = vmatpush1.bf16.xpose.msra.mxu0 0
  %2141 = vmatprep.subr.bf16.mxu0 0
  %2142 = vmatpush1.bf16.xpose.msra.mxu0 0
  %2143 = vmatprep.subr.bf16.mxu0 0
  %2144 = vmatpush1.bf16.xpose.msra.mxu0 0
  %2145 = vmatprep.subr.bf16.mxu0 0
  %2146 = vmatpush1.bf16.xpose.msra.mxu0 0
  %2147 = vmatprep.mubr.bf16.mxu0 0
  %2148 = vmatmul.mubr.bf16.gmra.mrb[0].mxu0 %v2104
  %v2149 = vpop.f32.mrb[0].mxu0
  %v2150 = vadd.f32 0.0, %v2149
  %v2151 = vpop.f32.mrb[0].mxu0
  %v2152 = vpop.f32.mrb[0].mxu0
  %v2153 = vadd.f32 0.0, %v2152
  %v2154 = vpop.f32.mrb[0].mxu0
  %2155 = vmatprep.mubr.bf16.mxu0 0
  %2156 = vmatmul.mubr.bf16.gmra.mrb[0].mxu0 %v2107
  %v2157 = vpop.f32.mrb[0].mxu0
  %v2158 = vadd.f32 0.0, %v2157
  %v2159 = vpop.f32.mrb[0].mxu0
  %v2160 = vpop.f32.mrb[0].mxu0
  %v2161 = vadd.f32 0.0, %v2160
  %v2162 = vpop.f32.mrb[0].mxu0
  %2163 = vdwg.mxu0
  %v2164 = vmul.f32 %v2150, 0.35355338
  %v2165 = vmul.f32 %v2153, 0.35355338
  %v2166 = vmul.f32 %v2158, 0.35355338
  %v2167 = vmul.f32 %v2161, 0.35355338
  %v2168 = vsel %vm167, %v2164, -1e+30
  %v2169 = vsel %vm168, %v2165, -1e+30
  %v2170 = vsel %vm169, %v2166, -1e+30
  %v2171 = vsel %vm170, %v2167, -1e+30
  %v2172 = vsel %vm171, %v2168, -inf
  %2173 = vmax.xlane.f32.xlu0 %v2172
  %v2174 = vpop.xlane.xlu0 %2173
  %v2175 = vsel %vm171, %v2169, -inf
  %2176 = vmax.xlane.f32.xlu0 %v2175
  %v2177 = vpop.xlane.xlu0 %2176
  %v2178 = vsel %vm171, %v2170, -inf
  %2179 = vmax.xlane.f32.xlu0 %v2178
  %v2180 = vpop.xlane.xlu0 %2179
  %v2181 = vsel %vm171, %v2171, -inf
  %2182 = vmax.xlane.f32.xlu0 %v2181
  %v2183 = vpop.xlane.xlu0 %2182
  %v2184 = vsub.f32 %v2168, %v2174
  %v2185 = vsub.f32 %v2169, %v2177
  %v2186 = vsub.f32 %v2170, %v2180
  %v2187 = vsub.f32 %v2171, %v2183
  %v2188 = vmul.f32 %v2184, 1.442695
  %v2189 = vpow.pop %v2188
  %v2190 = vmul.f32 %v2185, 1.442695
  %v2191 = vpow.pop %v2190
  %v2192 = vmul.f32 %v2186, 1.442695
  %v2193 = vpow.pop %v2192
  %v2194 = vmul.f32 %v2187, 1.442695
  %v2195 = vpow.pop %v2194
  %v2196 = vsel %vm171, %v2189, 0.0
  %2197 = vadd.xlane.f32.xlu0 %v2196
  %v2198 = vpop.xlane.xlu0 %2197
  %v2199 = vsel %vm171, %v2191, 0.0
  %2200 = vadd.xlane.f32.xlu0 %v2199
  %v2201 = vpop.xlane.xlu0 %2200
  %v2202 = vsel %vm171, %v2193, 0.0
  %2203 = vadd.xlane.f32.xlu0 %v2202
  %v2204 = vpop.xlane.xlu0 %2203
  %v2205 = vsel %vm171, %v2195, 0.0
  %2206 = vadd.xlane.f32.xlu0 %v2205
  %v2207 = vpop.xlane.xlu0 %2206
  %v2208 = vrcp.pop %v2198
  %v2209 = vmul.f32 %v2189, %v2208
  %v2210 = vrcp.pop %v2201
  %v2211 = vmul.f32 %v2191, %v2210
  %v2212 = vrcp.pop %v2204
  %v2213 = vmul.f32 %v2193, %v2212
  %v2214 = vrcp.pop %v2207
  %v2215 = vmul.f32 %v2195, %v2214
  %v2216 = vpack.c.bf16 %v2211, %v2209
  %v2217 = vpack.c.bf16 %v2215, %v2213
  %2218 = vrot.lane.b32.xlu0 %v1727, 48
  %v2219 = vpop.permute.xlu0 %2218
  %2220 = vrot.lane.b32.xlu0 %v1728, 48
  %v2221 = vpop.permute.xlu0 %2220
  %v2225 = vsel %vm171, %v2216, 0
  %v2228 = vsel %vm171, %v2217, 0
  %2230 = vmatprep.subr.bf16.mxu0 0
  %2231 = vmatpush1.bf16.msra.mxu0 %v2219
  %2232 = vmatprep.subr.bf16.mxu0 0
  %2233 = vmatpush1.bf16.msra.mxu0 %v2221
  %2234 = vmatprep.subr.bf16.mxu0 0
  %2235 = vmatpush1.bf16.msra.mxu0 0
  %2236 = vmatprep.subr.bf16.mxu0 0
  %2237 = vmatpush1.bf16.msra.mxu0 0
  %2238 = vmatprep.subr.bf16.mxu0 0
  %2239 = vmatpush1.bf16.msra.mxu0 0
  %2240 = vmatprep.subr.bf16.mxu0 0
  %2241 = vmatpush1.bf16.msra.mxu0 0
  %2242 = vmatprep.subr.bf16.mxu0 0
  %2243 = vmatpush1.bf16.msra.mxu0 0
  %2244 = vmatprep.subr.bf16.mxu0 0
  %2245 = vmatpush1.bf16.msra.mxu0 0
  %2246 = vmatprep.subr.bf16.mxu0 0
  %2247 = vmatpush1.bf16.msra.mxu0 0
  %2248 = vmatprep.subr.bf16.mxu0 0
  %2249 = vmatpush1.bf16.msra.mxu0 0
  %2250 = vmatprep.subr.bf16.mxu0 0
  %2251 = vmatpush1.bf16.msra.mxu0 0
  %2252 = vmatprep.subr.bf16.mxu0 0
  %2253 = vmatpush1.bf16.msra.mxu0 0
  %2254 = vmatprep.subr.bf16.mxu0 0
  %2255 = vmatpush1.bf16.msra.mxu0 0
  %2256 = vmatprep.subr.bf16.mxu0 0
  %2257 = vmatpush1.bf16.msra.mxu0 0
  %2258 = vmatprep.subr.bf16.mxu0 0
  %2259 = vmatpush1.bf16.msra.mxu0 0
  %2260 = vmatprep.subr.bf16.mxu0 0
  %2261 = vmatpush1.bf16.msra.mxu0 0
  %2262 = vmatprep.mubr.bf16.mxu0 0
  %2263 = vmatmul.mubr.bf16.gmra.mrb[0].mxu0 %v2225
  %v2264 = vpop.f32.mrb[0].mxu0
  %v2265 = vadd.f32 0.0, %v2264
  %v2266 = vpop.f32.mrb[0].mxu0
  %v2267 = vpop.f32.mrb[0].mxu0
  %v2268 = vadd.f32 0.0, %v2267
  %v2269 = vpop.f32.mrb[0].mxu0
  %2270 = vmatprep.mubr.bf16.mxu0 0
  %2271 = vmatmul.mubr.bf16.gmra.mrb[0].mxu0 %v2228
  %v2272 = vpop.f32.mrb[0].mxu0
  %v2273 = vadd.f32 0.0, %v2272
  %v2274 = vpop.f32.mrb[0].mxu0
  %v2275 = vpop.f32.mrb[0].mxu0
  %v2276 = vadd.f32 0.0, %v2275
  %v2277 = vpop.f32.mrb[0].mxu0
  %2278 = vdwg.mxu0
  %2279 = vrot.lane.b32.xlu0 %v1727, 104
  %v2280 = vpop.permute.xlu0 %2279
  %2281 = vrot.lane.b32.xlu0 %v1728, 104
  %v2282 = vpop.permute.xlu0 %2281
  %2283 = vrot.lane.b32.xlu0 %v1727, 72
  %v2284 = vpop.permute.xlu0 %2283
  %2285 = vrot.lane.b32.xlu0 %v1728, 72
  %v2286 = vpop.permute.xlu0 %2285
  %v2288 = vsel %vm326, %v2280, 0
  %v2291 = vsel %vm326, %v2282, 0
  %v2294 = vsel %vm326, %v2284, 0
  %v2297 = vsel %vm326, %v2286, 0
  %2299 = vmatprep.subr.bf16.mxu0 0
  %2300 = vmatpush1.bf16.xpose.msra.mxu0 %v2294
  %2301 = vmatprep.subr.bf16.mxu0 0
  %2302 = vmatpush1.bf16.xpose.msra.mxu0 %v2297
  %2303 = vmatprep.subr.bf16.mxu0 0
  %2304 = vmatpush1.bf16.xpose.msra.mxu0 0
  %2305 = vmatprep.subr.bf16.mxu0 0
  %2306 = vmatpush1.bf16.xpose.msra.mxu0 0
  %2307 = vmatprep.subr.bf16.mxu0 0
  %2308 = vmatpush1.bf16.xpose.msra.mxu0 0
  %2309 = vmatprep.subr.bf16.mxu0 0
  %2310 = vmatpush1.bf16.xpose.msra.mxu0 0
  %2311 = vmatprep.subr.bf16.mxu0 0
  %2312 = vmatpush1.bf16.xpose.msra.mxu0 0
  %2313 = vmatprep.subr.bf16.mxu0 0
  %2314 = vmatpush1.bf16.xpose.msra.mxu0 0
  %2315 = vmatprep.subr.bf16.mxu0 0
  %2316 = vmatpush1.bf16.xpose.msra.mxu0 0
  %2317 = vmatprep.subr.bf16.mxu0 0
  %2318 = vmatpush1.bf16.xpose.msra.mxu0 0
  %2319 = vmatprep.subr.bf16.mxu0 0
  %2320 = vmatpush1.bf16.xpose.msra.mxu0 0
  %2321 = vmatprep.subr.bf16.mxu0 0
  %2322 = vmatpush1.bf16.xpose.msra.mxu0 0
  %2323 = vmatprep.subr.bf16.mxu0 0
  %2324 = vmatpush1.bf16.xpose.msra.mxu0 0
  %2325 = vmatprep.subr.bf16.mxu0 0
  %2326 = vmatpush1.bf16.xpose.msra.mxu0 0
  %2327 = vmatprep.subr.bf16.mxu0 0
  %2328 = vmatpush1.bf16.xpose.msra.mxu0 0
  %2329 = vmatprep.subr.bf16.mxu0 0
  %2330 = vmatpush1.bf16.xpose.msra.mxu0 0
  %2331 = vmatprep.mubr.bf16.mxu0 0
  %2332 = vmatmul.mubr.bf16.gmra.mrb[0].mxu0 %v2288
  %v2333 = vpop.f32.mrb[0].mxu0
  %v2334 = vadd.f32 0.0, %v2333
  %v2335 = vpop.f32.mrb[0].mxu0
  %v2336 = vpop.f32.mrb[0].mxu0
  %v2337 = vadd.f32 0.0, %v2336
  %v2338 = vpop.f32.mrb[0].mxu0
  %2339 = vmatprep.mubr.bf16.mxu0 0
  %2340 = vmatmul.mubr.bf16.gmra.mrb[0].mxu0 %v2291
  %v2341 = vpop.f32.mrb[0].mxu0
  %v2342 = vadd.f32 0.0, %v2341
  %v2343 = vpop.f32.mrb[0].mxu0
  %v2344 = vpop.f32.mrb[0].mxu0
  %v2345 = vadd.f32 0.0, %v2344
  %v2346 = vpop.f32.mrb[0].mxu0
  %2347 = vdwg.mxu0
  %v2348 = vmul.f32 %v2334, 0.35355338
  %v2349 = vmul.f32 %v2337, 0.35355338
  %v2350 = vmul.f32 %v2342, 0.35355338
  %v2351 = vmul.f32 %v2345, 0.35355338
  %v2352 = vsel %vm167, %v2348, -1e+30
  %v2353 = vsel %vm168, %v2349, -1e+30
  %v2354 = vsel %vm169, %v2350, -1e+30
  %v2355 = vsel %vm170, %v2351, -1e+30
  %v2356 = vsel %vm171, %v2352, -inf
  %2357 = vmax.xlane.f32.xlu0 %v2356
  %v2358 = vpop.xlane.xlu0 %2357
  %v2359 = vsel %vm171, %v2353, -inf
  %2360 = vmax.xlane.f32.xlu0 %v2359
  %v2361 = vpop.xlane.xlu0 %2360
  %v2362 = vsel %vm171, %v2354, -inf
  %2363 = vmax.xlane.f32.xlu0 %v2362
  %v2364 = vpop.xlane.xlu0 %2363
  %v2365 = vsel %vm171, %v2355, -inf
  %2366 = vmax.xlane.f32.xlu0 %v2365
  %v2367 = vpop.xlane.xlu0 %2366
  %v2368 = vsub.f32 %v2352, %v2358
  %v2369 = vsub.f32 %v2353, %v2361
  %v2370 = vsub.f32 %v2354, %v2364
  %v2371 = vsub.f32 %v2355, %v2367
  %v2372 = vmul.f32 %v2368, 1.442695
  %v2373 = vpow.pop %v2372
  %v2374 = vmul.f32 %v2369, 1.442695
  %v2375 = vpow.pop %v2374
  %v2376 = vmul.f32 %v2370, 1.442695
  %v2377 = vpow.pop %v2376
  %v2378 = vmul.f32 %v2371, 1.442695
  %v2379 = vpow.pop %v2378
  %v2380 = vsel %vm171, %v2373, 0.0
  %2381 = vadd.xlane.f32.xlu0 %v2380
  %v2382 = vpop.xlane.xlu0 %2381
  %v2383 = vsel %vm171, %v2375, 0.0
  %2384 = vadd.xlane.f32.xlu0 %v2383
  %v2385 = vpop.xlane.xlu0 %2384
  %v2386 = vsel %vm171, %v2377, 0.0
  %2387 = vadd.xlane.f32.xlu0 %v2386
  %v2388 = vpop.xlane.xlu0 %2387
  %v2389 = vsel %vm171, %v2379, 0.0
  %2390 = vadd.xlane.f32.xlu0 %v2389
  %v2391 = vpop.xlane.xlu0 %2390
  %v2392 = vrcp.pop %v2382
  %v2393 = vmul.f32 %v2373, %v2392
  %v2394 = vrcp.pop %v2385
  %v2395 = vmul.f32 %v2375, %v2394
  %v2396 = vrcp.pop %v2388
  %v2397 = vmul.f32 %v2377, %v2396
  %v2398 = vrcp.pop %v2391
  %v2399 = vmul.f32 %v2379, %v2398
  %v2400 = vpack.c.bf16 %v2395, %v2393
  %v2401 = vpack.c.bf16 %v2399, %v2397
  %2402 = vrot.lane.b32.xlu0 %v1727, 40
  %v2403 = vpop.permute.xlu0 %2402
  %2404 = vrot.lane.b32.xlu0 %v1728, 40
  %v2405 = vpop.permute.xlu0 %2404
  %v2409 = vsel %vm171, %v2400, 0
  %v2412 = vsel %vm171, %v2401, 0
  %2414 = vmatprep.subr.bf16.mxu0 0
  %2415 = vmatpush1.bf16.msra.mxu0 %v2403
  %2416 = vmatprep.subr.bf16.mxu0 0
  %2417 = vmatpush1.bf16.msra.mxu0 %v2405
  %2418 = vmatprep.subr.bf16.mxu0 0
  %2419 = vmatpush1.bf16.msra.mxu0 0
  %2420 = vmatprep.subr.bf16.mxu0 0
  %2421 = vmatpush1.bf16.msra.mxu0 0
  %2422 = vmatprep.subr.bf16.mxu0 0
  %2423 = vmatpush1.bf16.msra.mxu0 0
  %2424 = vmatprep.subr.bf16.mxu0 0
  %2425 = vmatpush1.bf16.msra.mxu0 0
  %2426 = vmatprep.subr.bf16.mxu0 0
  %2427 = vmatpush1.bf16.msra.mxu0 0
  %2428 = vmatprep.subr.bf16.mxu0 0
  %2429 = vmatpush1.bf16.msra.mxu0 0
  %2430 = vmatprep.subr.bf16.mxu0 0
  %2431 = vmatpush1.bf16.msra.mxu0 0
  %2432 = vmatprep.subr.bf16.mxu0 0
  %2433 = vmatpush1.bf16.msra.mxu0 0
  %2434 = vmatprep.subr.bf16.mxu0 0
  %2435 = vmatpush1.bf16.msra.mxu0 0
  %2436 = vmatprep.subr.bf16.mxu0 0
  %2437 = vmatpush1.bf16.msra.mxu0 0
  %2438 = vmatprep.subr.bf16.mxu0 0
  %2439 = vmatpush1.bf16.msra.mxu0 0
  %2440 = vmatprep.subr.bf16.mxu0 0
  %2441 = vmatpush1.bf16.msra.mxu0 0
  %2442 = vmatprep.subr.bf16.mxu0 0
  %2443 = vmatpush1.bf16.msra.mxu0 0
  %2444 = vmatprep.subr.bf16.mxu0 0
  %2445 = vmatpush1.bf16.msra.mxu0 0
  %2446 = vmatprep.mubr.bf16.mxu0 0
  %2447 = vmatmul.mubr.bf16.gmra.mrb[0].mxu0 %v2409
  %v2448 = vpop.f32.mrb[0].mxu0
  %v2449 = vadd.f32 0.0, %v2448
  %v2450 = vpop.f32.mrb[0].mxu0
  %v2451 = vpop.f32.mrb[0].mxu0
  %v2452 = vadd.f32 0.0, %v2451
  %v2453 = vpop.f32.mrb[0].mxu0
  %2454 = vmatprep.mubr.bf16.mxu0 0
  %2455 = vmatmul.mubr.bf16.gmra.mrb[0].mxu0 %v2412
  %v2456 = vpop.f32.mrb[0].mxu0
  %v2457 = vadd.f32 0.0, %v2456
  %v2458 = vpop.f32.mrb[0].mxu0
  %v2459 = vpop.f32.mrb[0].mxu0
  %v2460 = vadd.f32 0.0, %v2459
  %v2461 = vpop.f32.mrb[0].mxu0
  %2462 = vdwg.mxu0
  %2467 = vrot.lane.b32.xlu0 %v2081, 8
  %v2468 = vpop.permute.xlu0 %2467
  %2469 = vrot.lane.b32.xlu0 %v2084, 8
  %v2470 = vpop.permute.xlu0 %2469
  %2471 = vrot.lane.b32.xlu0 %v2089, 8
  %v2472 = vpop.permute.xlu0 %2471
  %2473 = vrot.lane.b32.xlu0 %v2092, 8
  %v2474 = vpop.permute.xlu0 %2473
  %2483 = vrot.lane.b32.xlu0 %v2265, 16
  %v2484 = vpop.permute.xlu0 %2483
  %2485 = vrot.lane.b32.xlu0 %v2268, 16
  %v2486 = vpop.permute.xlu0 %2485
  %2487 = vrot.lane.b32.xlu0 %v2273, 16
  %v2488 = vpop.permute.xlu0 %2487
  %2489 = vrot.lane.b32.xlu0 %v2276, 16
  %v2490 = vpop.permute.xlu0 %2489
  %2499 = vrot.lane.b32.xlu0 %v2449, 24
  %v2500 = vpop.permute.xlu0 %2499
  %2501 = vrot.lane.b32.xlu0 %v2452, 24
  %v2502 = vpop.permute.xlu0 %2501
  %2503 = vrot.lane.b32.xlu0 %v2457, 24
  %v2504 = vpop.permute.xlu0 %2503
  %2505 = vrot.lane.b32.xlu0 %v2460, 24
  %v2506 = vpop.permute.xlu0 %2505
  %v2511 = vsel %vm326, %v1897, %v2468
  %v2512 = vsel %vm326, %v1900, %v2470
  %v2513 = vsel %vm326, %v1905, %v2472
  %v2514 = vsel %vm326, %v1908, %v2474
  %v2515 = vsel %vm1107, %v2511, %v2484
  %v2516 = vsel %vm1107, %v2512, %v2486
  %v2517 = vsel %vm1107, %v2513, %v2488
  %v2518 = vsel %vm1107, %v2514, %v2490
  %v2519 = vsel %vm1112, %v2515, %v2500
  %v2520 = vsel %vm1112, %v2516, %v2502
  %v2521 = vsel %vm1112, %v2517, %v2504
  %v2522 = vsel %vm1112, %v2518, %v2506
  %v2523 = vpack.c.bf16 %v2520, %v2519
  %v2524 = vpack.c.bf16 %v2522, %v2521
  %v2525 = vld [vmem:[%s8] sm:$0xf]
  %v2526 = vld [vmem:[%s8 + $0x4] sm:$0xf]
  %v2527 = vld [vmem:[%s8 + $0x8] sm:$0xf]
  %v2528 = vld [vmem:[%s8 + $0xc] sm:$0xf]
  %v2533 = vunpack.c.l.b16 %v2525
  %v2534 = vunpack.c.l.b16 %v2526
  %v2535 = vunpack.c.l.b16 %v2527
  %v2536 = vunpack.c.l.b16 %v2528
  %v2537 = vpack.c.b16 %v2534, %v2533
  %v2538 = vpack.c.b16 %v2536, %v2535
  %v2542 = vsel %vm171, %v2523, 0
  %v2545 = vsel %vm171, %v2524, 0
  %2547 = vmatprep.subr.bf16.mxu0 0
  %2548 = vmatpush1.bf16.msra.mxu0 %v2537
  %2549 = vmatprep.subr.bf16.mxu0 0
  %2550 = vmatpush1.bf16.msra.mxu0 %v2538
  %2551 = vmatprep.subr.bf16.mxu0 0
  %2552 = vmatpush1.bf16.msra.mxu0 0
  %2553 = vmatprep.subr.bf16.mxu0 0
  %2554 = vmatpush1.bf16.msra.mxu0 0
  %2555 = vmatprep.subr.bf16.mxu0 0
  %2556 = vmatpush1.bf16.msra.mxu0 0
  %2557 = vmatprep.subr.bf16.mxu0 0
  %2558 = vmatpush1.bf16.msra.mxu0 0
  %2559 = vmatprep.subr.bf16.mxu0 0
  %2560 = vmatpush1.bf16.msra.mxu0 0
  %2561 = vmatprep.subr.bf16.mxu0 0
  %2562 = vmatpush1.bf16.msra.mxu0 0
  %2563 = vmatprep.subr.bf16.mxu0 0
  %2564 = vmatpush1.bf16.msra.mxu0 0
  %2565 = vmatprep.subr.bf16.mxu0 0
  %2566 = vmatpush1.bf16.msra.mxu0 0
  %2567 = vmatprep.subr.bf16.mxu0 0
  %2568 = vmatpush1.bf16.msra.mxu0 0
  %2569 = vmatprep.subr.bf16.mxu0 0
  %2570 = vmatpush1.bf16.msra.mxu0 0
  %2571 = vmatprep.subr.bf16.mxu0 0
  %2572 = vmatpush1.bf16.msra.mxu0 0
  %2573 = vmatprep.subr.bf16.mxu0 0
  %2574 = vmatpush1.bf16.msra.mxu0 0
  %2575 = vmatprep.subr.bf16.mxu0 0
  %2576 = vmatpush1.bf16.msra.mxu0 0
  %2577 = vmatprep.subr.bf16.mxu0 0
  %2578 = vmatpush1.bf16.msra.mxu0 0
  %2579 = vmatprep.mubr.bf16.mxu0 0
  %2580 = vmatmul.mubr.bf16.gmra.mrb[0].mxu0 %v2542
  %v2581 = vpop.f32.mrb[0].mxu0
  %v2582 = vadd.f32 0.0, %v2581
  %v2583 = vpop.f32.mrb[0].mxu0
  %v2584 = vpop.f32.mrb[0].mxu0
  %v2585 = vadd.f32 0.0, %v2584
  %v2586 = vpop.f32.mrb[0].mxu0
  %2587 = vmatprep.mubr.bf16.mxu0 0
  %2588 = vmatmul.mubr.bf16.gmra.mrb[0].mxu0 %v2545
  %v2589 = vpop.f32.mrb[0].mxu0
  %v2590 = vadd.f32 0.0, %v2589
  %v2591 = vpop.f32.mrb[0].mxu0
  %v2592 = vpop.f32.mrb[0].mxu0
  %v2593 = vadd.f32 0.0, %v2592
  %v2594 = vpop.f32.mrb[0].mxu0
  %2595 = vdwg.mxu0
  %v2596 = vadd.f32 %v1578, %v2582
  %v2597 = vadd.f32 %v1579, %v2585
  %v2598 = vadd.f32 %v1580, %v2590
  %v2599 = vadd.f32 %v1581, %v2593
  %v2600 = vlaneseq
  %v2601 = vshrl.u32 %v2600, 7
  %v2602 = vsub.s32 5, %v2601
  %v2603 = vrot.slane %v41, %v2602
  %v2604 = vadd.f32 %v2596, %v2603
  %v2605 = vadd.f32 %v2597, %v2603
  %v2606 = vadd.f32 %v2598, %v2603
  %v2607 = vadd.f32 %v2599, %v2603
  %v2608 = vsel %vm171, %v2604, 0.0
  %2609 = vadd.xlane.f32.xlu0 %v2608
  %v2610 = vpop.xlane.xlu0 %2609
  %v2611 = vsel %vm171, %v2605, 0.0
  %2612 = vadd.xlane.f32.xlu0 %v2611
  %v2613 = vpop.xlane.xlu0 %2612
  %v2614 = vsel %vm171, %v2606, 0.0
  %2615 = vadd.xlane.f32.xlu0 %v2614
  %v2616 = vpop.xlane.xlu0 %2615
  %v2617 = vsel %vm171, %v2607, 0.0
  %2618 = vadd.xlane.f32.xlu0 %v2617
  %v2619 = vpop.xlane.xlu0 %2618
  %v2620 = vmul.f32 %v2610, %v184
  %v2621 = vmul.f32 %v2613, %v184
  %v2622 = vmul.f32 %v2616, %v184
  %v2623 = vmul.f32 %v2619, %v184
  %v2624 = vsub.f32 %v2604, %v2620
  %v2625 = vsub.f32 %v2605, %v2621
  %v2626 = vsub.f32 %v2606, %v2622
  %v2627 = vsub.f32 %v2607, %v2623
  %v2628 = vmul.f32 %v2624, %v2624
  %v2629 = vmul.f32 %v2625, %v2625
  %v2630 = vmul.f32 %v2626, %v2626
  %v2631 = vmul.f32 %v2627, %v2627
  %v2632 = vsel %vm171, %v2628, 0.0
  %2633 = vadd.xlane.f32.xlu0 %v2632
  %v2634 = vpop.xlane.xlu0 %2633
  %v2635 = vsel %vm171, %v2629, 0.0
  %2636 = vadd.xlane.f32.xlu0 %v2635
  %v2637 = vpop.xlane.xlu0 %2636
  %v2638 = vsel %vm171, %v2630, 0.0
  %2639 = vadd.xlane.f32.xlu0 %v2638
  %v2640 = vpop.xlane.xlu0 %2639
  %v2641 = vsel %vm171, %v2631, 0.0
  %2642 = vadd.xlane.f32.xlu0 %v2641
  %v2643 = vpop.xlane.xlu0 %2642
  %v2644 = vmul.f32 %v2634, %v184
  %v2645 = vmul.f32 %v2637, %v184
  %v2646 = vmul.f32 %v2640, %v184
  %v2647 = vmul.f32 %v2643, %v184
  %v2648 = vadd.f32 %v2644, 1e-06
  %v2649 = vadd.f32 %v2645, 1e-06
  %v2650 = vadd.f32 %v2646, 1e-06
  %v2651 = vadd.f32 %v2647, 1e-06
  %v2652 = vrsqrt.pop %v2648
  %v2653 = vrsqrt.pop %v2649
  %v2654 = vrsqrt.pop %v2650
  %v2655 = vrsqrt.pop %v2651
  %v2656 = vmul.f32 %v2624, %v2652
  %v2657 = vmul.f32 %v2625, %v2653
  %v2658 = vmul.f32 %v2626, %v2654
  %v2659 = vmul.f32 %v2627, %v2655
  %v2660 = vlaneseq
  %v2661 = vshrl.u32 %v2660, 7
  %v2662 = vsub.s32 6, %v2661
  %v2663 = vrot.slane %v41, %v2662
  %v2664 = vmul.f32 %v2656, %v2663
  %v2665 = vmul.f32 %v2657, %v2663
  %v2666 = vmul.f32 %v2658, %v2663
  %v2667 = vmul.f32 %v2659, %v2663
  %v2668 = vlaneseq
  %v2669 = vshrl.u32 %v2668, 7
  %v2670 = vsub.s32 7, %v2669
  %v2671 = vrot.slane %v41, %v2670
  %v2672 = vadd.f32 %v2664, %v2671
  %v2673 = vadd.f32 %v2665, %v2671
  %v2674 = vadd.f32 %v2666, %v2671
  %v2675 = vadd.f32 %v2667, %v2671
  %v2676 = vpack.c.bf16 %v2673, %v2672
  %v2677 = vpack.c.bf16 %v2675, %v2674
  %v2678 = vld [vmem:[%s9] sm:$0xf]
  %v2679 = vld [vmem:[%s9 + $0x4] sm:$0xf]
  %v2680 = vld [vmem:[%s9 + $0x8] sm:$0xf]
  %v2681 = vld [vmem:[%s9 + $0xc] sm:$0xf]
  %v2682 = vlaneseq
  %v2683 = vshrl.u32 %v2682, 7
  %v2684 = vsub.s32 0, %v2683
  %v2685 = vrot.slane %v42, %v2684
  %v2690 = vunpack.c.l.b16 %v2678
  %v2691 = vunpack.c.l.b16 %v2679
  %v2692 = vunpack.c.l.b16 %v2680
  %v2693 = vunpack.c.l.b16 %v2681
  %v2694 = vpack.c.b16 %v2691, %v2690
  %v2695 = vpack.c.b16 %v2693, %v2692
  %v2699 = vsel %vm171, %v2676, 0
  %v2702 = vsel %vm171, %v2677, 0
  %2704 = vmatprep.subr.bf16.mxu0 0
  %2705 = vmatpush1.bf16.msra.mxu0 %v2694
  %2706 = vmatprep.subr.bf16.mxu0 0
  %2707 = vmatpush1.bf16.msra.mxu0 %v2695
  %2708 = vmatprep.subr.bf16.mxu0 0
  %2709 = vmatpush1.bf16.msra.mxu0 0
  %2710 = vmatprep.subr.bf16.mxu0 0
  %2711 = vmatpush1.bf16.msra.mxu0 0
  %2712 = vmatprep.subr.bf16.mxu0 0
  %2713 = vmatpush1.bf16.msra.mxu0 0
  %2714 = vmatprep.subr.bf16.mxu0 0
  %2715 = vmatpush1.bf16.msra.mxu0 0
  %2716 = vmatprep.subr.bf16.mxu0 0
  %2717 = vmatpush1.bf16.msra.mxu0 0
  %2718 = vmatprep.subr.bf16.mxu0 0
  %2719 = vmatpush1.bf16.msra.mxu0 0
  %2720 = vmatprep.subr.bf16.mxu0 0
  %2721 = vmatpush1.bf16.msra.mxu0 0
  %2722 = vmatprep.subr.bf16.mxu0 0
  %2723 = vmatpush1.bf16.msra.mxu0 0
  %2724 = vmatprep.subr.bf16.mxu0 0
  %2725 = vmatpush1.bf16.msra.mxu0 0
  %2726 = vmatprep.subr.bf16.mxu0 0
  %2727 = vmatpush1.bf16.msra.mxu0 0
  %2728 = vmatprep.subr.bf16.mxu0 0
  %2729 = vmatpush1.bf16.msra.mxu0 0
  %2730 = vmatprep.subr.bf16.mxu0 0
  %2731 = vmatpush1.bf16.msra.mxu0 0
  %2732 = vmatprep.subr.bf16.mxu0 0
  %2733 = vmatpush1.bf16.msra.mxu0 0
  %2734 = vmatprep.subr.bf16.mxu0 0
  %2735 = vmatpush1.bf16.msra.mxu0 0
  %2736 = vmatprep.mubr.bf16.mxu0 0
  %2737 = vmatmul.mubr.bf16.gmra.mrb[0].mxu0 %v2699
  %v2738 = vpop.f32.mrb[0].mxu0
  %v2739 = vadd.f32 %v2685, %v2738
  %v2740 = vpop.f32.mrb[0].mxu0
  %v2741 = vpop.f32.mrb[0].mxu0
  %v2742 = vadd.f32 %v2685, %v2741
  %v2743 = vpop.f32.mrb[0].mxu0
  %2744 = vmatprep.mubr.bf16.mxu0 0
  %2745 = vmatmul.mubr.bf16.gmra.mrb[0].mxu0 %v2702
  %v2746 = vpop.f32.mrb[0].mxu0
  %v2747 = vadd.f32 %v2685, %v2746
  %v2748 = vpop.f32.mrb[0].mxu0
  %v2749 = vpop.f32.mrb[0].mxu0
  %v2750 = vadd.f32 %v2685, %v2749
  %v2751 = vpop.f32.mrb[0].mxu0
  %2752 = vdwg.mxu0
  %v2753 = vmul.f32 %v2739, 0.5
  %v2754 = vmul.f32 %v2742, 0.5
  %v2755 = vmul.f32 %v2747, 0.5
  %v2756 = vmul.f32 %v2750, 0.5
  %v2757 = vmul.f32 %v2739, 0.70710677
  %v2758 = vmul.f32 %v2742, 0.70710677
  %v2759 = vmul.f32 %v2747, 0.70710677
  %v2760 = vmul.f32 %v2750, 0.70710677
  %v2761 = vand.u32 2147483647, %v2757
  %v2762 = vand.u32 2147483647, %v2758
  %v2763 = vand.u32 2147483647, %v2759
  %v2764 = vand.u32 2147483647, %v2760
  %v2765 = vmul.f32 %v2761, 0.3275911
  %v2766 = vmul.f32 %v2762, 0.3275911
  %v2767 = vmul.f32 %v2763, 0.3275911
  %v2768 = vmul.f32 %v2764, 0.3275911
  %v2769 = vadd.f32 %v2765, 1.0
  %v2770 = vadd.f32 %v2766, 1.0
  %v2771 = vadd.f32 %v2767, 1.0
  %v2772 = vadd.f32 %v2768, 1.0
  %v2773 = vrcp.pop %v2769
  %v2774 = vmul.f32 1.0, %v2773
  %v2775 = vrcp.pop %v2770
  %v2776 = vmul.f32 1.0, %v2775
  %v2777 = vrcp.pop %v2771
  %v2778 = vmul.f32 1.0, %v2777
  %v2779 = vrcp.pop %v2772
  %v2780 = vmul.f32 1.0, %v2779
  %v2781 = vmul.f32 %v2774, 1.0614054
  %v2782 = vmul.f32 %v2776, 1.0614054
  %v2783 = vmul.f32 %v2778, 1.0614054
  %v2784 = vmul.f32 %v2780, 1.0614054
  %v2785 = vadd.f32 %v2781, -1.4531521
  %v2786 = vadd.f32 %v2782, -1.4531521
  %v2787 = vadd.f32 %v2783, -1.4531521
  %v2788 = vadd.f32 %v2784, -1.4531521
  %v2789 = vmul.f32 %v2785, %v2774
  %v2790 = vmul.f32 %v2786, %v2776
  %v2791 = vmul.f32 %v2787, %v2778
  %v2792 = vmul.f32 %v2788, %v2780
  %v2793 = vadd.f32 %v2789, 1.4214138
  %v2794 = vadd.f32 %v2790, 1.4214138
  %v2795 = vadd.f32 %v2791, 1.4214138
  %v2796 = vadd.f32 %v2792, 1.4214138
  %v2797 = vmul.f32 %v2793, %v2774
  %v2798 = vmul.f32 %v2794, %v2776
  %v2799 = vmul.f32 %v2795, %v2778
  %v2800 = vmul.f32 %v2796, %v2780
  %v2801 = vadd.f32 %v2797, -0.28449672
  %v2802 = vadd.f32 %v2798, -0.28449672
  %v2803 = vadd.f32 %v2799, -0.28449672
  %v2804 = vadd.f32 %v2800, -0.28449672
  %v2805 = vmul.f32 %v2801, %v2774
  %v2806 = vmul.f32 %v2802, %v2776
  %v2807 = vmul.f32 %v2803, %v2778
  %v2808 = vmul.f32 %v2804, %v2780
  %v2809 = vadd.f32 %v2805, 0.2548296
  %v2810 = vadd.f32 %v2806, 0.2548296
  %v2811 = vadd.f32 %v2807, 0.2548296
  %v2812 = vadd.f32 %v2808, 0.2548296
  %v2813 = vmul.f32 %v2809, %v2774
  %v2814 = vmul.f32 %v2810, %v2776
  %v2815 = vmul.f32 %v2811, %v2778
  %v2816 = vmul.f32 %v2812, %v2780
  %v2817 = vsub.f32 0.0, %v2761
  %v2818 = vsub.f32 0.0, %v2762
  %v2819 = vsub.f32 0.0, %v2763
  %v2820 = vsub.f32 0.0, %v2764
  %v2821 = vmul.f32 %v2817, %v2761
  %v2822 = vmul.f32 %v2818, %v2762
  %v2823 = vmul.f32 %v2819, %v2763
  %v2824 = vmul.f32 %v2820, %v2764
  %v2825 = vmul.f32 %v2821, 1.442695
  %v2826 = vpow.pop %v2825
  %v2827 = vmul.f32 %v2822, 1.442695
  %v2828 = vpow.pop %v2827
  %v2829 = vmul.f32 %v2823, 1.442695
  %v2830 = vpow.pop %v2829
  %v2831 = vmul.f32 %v2824, 1.442695
  %v2832 = vpow.pop %v2831
  %v2833 = vmul.f32 %v2813, %v2826
  %v2834 = vmul.f32 %v2814, %v2828
  %v2835 = vmul.f32 %v2815, %v2830
  %v2836 = vmul.f32 %v2816, %v2832
  %v2837 = vsub.f32 1.0, %v2833
  %v2838 = vsub.f32 1.0, %v2834
  %v2839 = vsub.f32 1.0, %v2835
  %v2840 = vsub.f32 1.0, %v2836
  %vm2841 = vcmp.ge.f32.partialorder %v2757, 0.0
  %vm2842 = vcmp.ge.f32.partialorder %v2758, 0.0
  %vm2843 = vcmp.ge.f32.partialorder %v2759, 0.0
  %vm2844 = vcmp.ge.f32.partialorder %v2760, 0.0
  %v2845 = vsub.f32 0.0, %v2837
  %v2846 = vsub.f32 0.0, %v2838
  %v2847 = vsub.f32 0.0, %v2839
  %v2848 = vsub.f32 0.0, %v2840
  %v2849 = vsel %vm2841, %v2837, %v2845
  %v2850 = vsel %vm2842, %v2838, %v2846
  %v2851 = vsel %vm2843, %v2839, %v2847
  %v2852 = vsel %vm2844, %v2840, %v2848
  %v2853 = vadd.f32 %v2849, 1.0
  %v2854 = vadd.f32 %v2850, 1.0
  %v2855 = vadd.f32 %v2851, 1.0
  %v2856 = vadd.f32 %v2852, 1.0
  %v2857 = vmul.f32 %v2753, %v2853
  %v2858 = vmul.f32 %v2754, %v2854
  %v2859 = vmul.f32 %v2755, %v2855
  %v2860 = vmul.f32 %v2756, %v2856
  %v2861 = vpack.c.bf16 %v2858, %v2857
  %v2862 = vpack.c.bf16 %v2860, %v2859
  %v2863 = vld [vmem:[%s10] sm:$0xf]
  %v2864 = vld [vmem:[%s10 + $0x4] sm:$0xf]
  %v2865 = vld [vmem:[%s10 + $0x8] sm:$0xf]
  %v2866 = vld [vmem:[%s10 + $0xc] sm:$0xf]
  %v2867 = vld [vmem:[%s10 + $0x10] sm:$0xf]
  %v2868 = vld [vmem:[%s10 + $0x14] sm:$0xf]
  %v2869 = vld [vmem:[%s10 + $0x18] sm:$0xf]
  %v2870 = vld [vmem:[%s10 + $0x1c] sm:$0xf]
  %v2871 = vld [vmem:[%s10 + $0x20] sm:$0xf]
  %v2872 = vld [vmem:[%s10 + $0x24] sm:$0xf]
  %v2873 = vld [vmem:[%s10 + $0x28] sm:$0xf]
  %v2874 = vld [vmem:[%s10 + $0x2c] sm:$0xf]
  %v2875 = vld [vmem:[%s10 + $0x30] sm:$0xf]
  %v2876 = vld [vmem:[%s10 + $0x34] sm:$0xf]
  %v2877 = vld [vmem:[%s10 + $0x38] sm:$0xf]
  %v2878 = vld [vmem:[%s10 + $0x3c] sm:$0xf]
  %v2895 = vunpack.c.l.b16 %v2863
  %v2896 = vunpack.c.l.b16 %v2864
  %v2897 = vunpack.c.l.b16 %v2865
  %v2898 = vunpack.c.l.b16 %v2866
  %v2899 = vunpack.c.l.b16 %v2867
  %v2900 = vunpack.c.l.b16 %v2868
  %v2901 = vunpack.c.l.b16 %v2869
  %v2902 = vunpack.c.l.b16 %v2870
  %v2903 = vunpack.c.l.b16 %v2871
  %v2904 = vunpack.c.l.b16 %v2872
  %v2905 = vunpack.c.l.b16 %v2873
  %v2906 = vunpack.c.l.b16 %v2874
  %v2907 = vunpack.c.l.b16 %v2875
  %v2908 = vunpack.c.l.b16 %v2876
  %v2909 = vunpack.c.l.b16 %v2877
  %v2910 = vunpack.c.l.b16 %v2878
  %v2911 = vpack.c.b16 %v2896, %v2895
  %v2912 = vpack.c.b16 %v2898, %v2897
  %v2913 = vpack.c.b16 %v2900, %v2899
  %v2914 = vpack.c.b16 %v2902, %v2901
  %v2915 = vpack.c.b16 %v2904, %v2903
  %v2916 = vpack.c.b16 %v2906, %v2905
  %v2917 = vpack.c.b16 %v2908, %v2907
  %v2918 = vpack.c.b16 %v2910, %v2909
  %2927 = vmatprep.subr.bf16.mxu0 0
  %2928 = vmatpush1.bf16.msra.mxu0 %v2911
  %2929 = vmatprep.subr.bf16.mxu0 0
  %2930 = vmatpush1.bf16.msra.mxu0 %v2912
  %2931 = vmatprep.subr.bf16.mxu0 0
  %2932 = vmatpush1.bf16.msra.mxu0 %v2913
  %2933 = vmatprep.subr.bf16.mxu0 0
  %2934 = vmatpush1.bf16.msra.mxu0 %v2914
  %2935 = vmatprep.subr.bf16.mxu0 0
  %2936 = vmatpush1.bf16.msra.mxu0 %v2915
  %2937 = vmatprep.subr.bf16.mxu0 0
  %2938 = vmatpush1.bf16.msra.mxu0 %v2916
  %2939 = vmatprep.subr.bf16.mxu0 0
  %2940 = vmatpush1.bf16.msra.mxu0 %v2917
  %2941 = vmatprep.subr.bf16.mxu0 0
  %2942 = vmatpush1.bf16.msra.mxu0 %v2918
  %2943 = vmatprep.subr.bf16.mxu0 0
  %2944 = vmatpush1.bf16.msra.mxu0 0
  %2945 = vmatprep.subr.bf16.mxu0 0
  %2946 = vmatpush1.bf16.msra.mxu0 0
  %2947 = vmatprep.subr.bf16.mxu0 0
  %2948 = vmatpush1.bf16.msra.mxu0 0
  %2949 = vmatprep.subr.bf16.mxu0 0
  %2950 = vmatpush1.bf16.msra.mxu0 0
  %2951 = vmatprep.subr.bf16.mxu0 0
  %2952 = vmatpush1.bf16.msra.mxu0 0
  %2953 = vmatprep.subr.bf16.mxu0 0
  %2954 = vmatpush1.bf16.msra.mxu0 0
  %2955 = vmatprep.subr.bf16.mxu0 0
  %2956 = vmatpush1.bf16.msra.mxu0 0
  %2957 = vmatprep.subr.bf16.mxu0 0
  %2958 = vmatpush1.bf16.msra.mxu0 0
  %2959 = vmatprep.mubr.bf16.mxu0 0
  %2960 = vmatmul.mubr.bf16.gmra.mrb[0].mxu0 %v2861
  %v2961 = vpop.f32.mrb[0].mxu0
  %v2962 = vadd.f32 0.0, %v2961
  %v2963 = vpop.f32.mrb[0].mxu0
  %v2964 = vpop.f32.mrb[0].mxu0
  %v2965 = vadd.f32 0.0, %v2964
  %v2966 = vpop.f32.mrb[0].mxu0
  %2967 = vmatprep.mubr.bf16.mxu0 0
  %2968 = vmatmul.mubr.bf16.gmra.mrb[0].mxu0 %v2862
  %v2969 = vpop.f32.mrb[0].mxu0
  %v2970 = vadd.f32 0.0, %v2969
  %v2971 = vpop.f32.mrb[0].mxu0
  %v2972 = vpop.f32.mrb[0].mxu0
  %v2973 = vadd.f32 0.0, %v2972
  %v2974 = vpop.f32.mrb[0].mxu0
  %2975 = vdwg.mxu0
  %v2976 = vadd.f32 %v2604, %v2962
  %v2977 = vadd.f32 %v2605, %v2965
  %v2978 = vadd.f32 %v2606, %v2970
  %v2979 = vadd.f32 %v2607, %v2973
  %v2980 = vlaneseq
  %v2981 = vshrl.u32 %v2980, 7
  %v2982 = vsub.s32 1, %v2981
  %v2983 = vrot.slane %v42, %v2982
  %v2984 = vadd.f32 %v2976, %v2983
  %v2985 = vadd.f32 %v2977, %v2983
  %v2986 = vadd.f32 %v2978, %v2983
  %v2987 = vadd.f32 %v2979, %v2983
  %vm2988 = vcmp.eq.s32.totalorder %v150, 0
  %v2989 = vsel %vm2988, 1, 0
  %v2990 = vcvt.s32.f32 %v2989
  %vm2991 = vcmp.ge.s32.totalorder %v150, 1
  %vm2992 = vcmp.lt.s32.totalorder %v150, 5
  %vm2993 = vmand %vm2991, %vm2992
  %v2994 = vsel %vm2993, 1, 0
  %v2995 = vcvt.s32.f32 %v2994
  %v2996 = vmul.f32 %v2995, 0.25
  %v2997 = vlaneseq
  %v2998 = vshrl.u32 %v2997, 7
  %v2999 = vsub.s32 0, %v2998
  %v3000 = vrot.slane %v40, %v2999
  %v3001 = vmul.f32 %v1630, %v3000
  %v3002 = vmul.f32 %v1631, %v3000
  %v3003 = vmul.f32 %v1632, %v3000
  %v3004 = vmul.f32 %v1633, %v3000
  %v3005 = vlaneseq
  %v3006 = vshrl.u32 %v3005, 7
  %v3007 = vsub.s32 1, %v3006
  %v3008 = vrot.slane %v40, %v3007
  %v3009 = vadd.f32 %v3001, %v3008
  %v3010 = vadd.f32 %v3002, %v3008
  %v3011 = vadd.f32 %v3003, %v3008
  %v3012 = vadd.f32 %v3004, %v3008
  %v3013 = vmul.f32 %v3009, %v2990
  %v3014 = vmul.f32 %v3010, %v2990
  %v3015 = vmul.f32 %v3011, %v2990
  %v3016 = vmul.f32 %v3012, %v2990
  %v3017 = vsel %vm171, %v3013, 0.0
  %v3018 = vrot.slane %v3017, 4
  %v3019 = vadd.f32 %v3017, %v3018
  %v3020 = vrot.slane %v3019, 2
  %v3021 = vadd.f32 %v3019, %v3020
  %v3022 = vrot.slane %v3021, 1
  %v3023 = vadd.f32 %v3021, %v3022
  %v3024 = vsel %vm171, %v3014, 0.0
  %v3025 = vrot.slane %v3024, 4
  %v3026 = vadd.f32 %v3024, %v3025
  %v3027 = vrot.slane %v3026, 2
  %v3028 = vadd.f32 %v3026, %v3027
  %v3029 = vrot.slane %v3028, 1
  %v3030 = vadd.f32 %v3028, %v3029
  %v3031 = vsel %vm171, %v3015, 0.0
  %v3032 = vrot.slane %v3031, 4
  %v3033 = vadd.f32 %v3031, %v3032
  %v3034 = vrot.slane %v3033, 2
  %v3035 = vadd.f32 %v3033, %v3034
  %v3036 = vrot.slane %v3035, 1
  %v3037 = vadd.f32 %v3035, %v3036
  %v3038 = vsel %vm171, %v3016, 0.0
  %v3039 = vrot.slane %v3038, 4
  %v3040 = vadd.f32 %v3038, %v3039
  %v3041 = vrot.slane %v3040, 2
  %v3042 = vadd.f32 %v3040, %v3041
  %v3043 = vrot.slane %v3042, 1
  %v3044 = vadd.f32 %v3042, %v3043
  %v3045 = vmul.f32 %v3009, %v2996
  %v3046 = vmul.f32 %v3010, %v2996
  %v3047 = vmul.f32 %v3011, %v2996
  %v3048 = vmul.f32 %v3012, %v2996
  %v3049 = vsel %vm171, %v3045, 0.0
  %v3050 = vrot.slane %v3049, 4
  %v3051 = vadd.f32 %v3049, %v3050
  %v3052 = vrot.slane %v3051, 2
  %v3053 = vadd.f32 %v3051, %v3052
  %v3054 = vrot.slane %v3053, 1
  %v3055 = vadd.f32 %v3053, %v3054
  %v3056 = vsel %vm171, %v3046, 0.0
  %v3057 = vrot.slane %v3056, 4
  %v3058 = vadd.f32 %v3056, %v3057
  %v3059 = vrot.slane %v3058, 2
  %v3060 = vadd.f32 %v3058, %v3059
  %v3061 = vrot.slane %v3060, 1
  %v3062 = vadd.f32 %v3060, %v3061
  %v3063 = vsel %vm171, %v3047, 0.0
  %v3064 = vrot.slane %v3063, 4
  %v3065 = vadd.f32 %v3063, %v3064
  %v3066 = vrot.slane %v3065, 2
  %v3067 = vadd.f32 %v3065, %v3066
  %v3068 = vrot.slane %v3067, 1
  %v3069 = vadd.f32 %v3067, %v3068
  %v3070 = vsel %vm171, %v3048, 0.0
  %v3071 = vrot.slane %v3070, 4
  %v3072 = vadd.f32 %v3070, %v3071
  %v3073 = vrot.slane %v3072, 2
  %v3074 = vadd.f32 %v3072, %v3073
  %v3075 = vrot.slane %v3074, 1
  %v3076 = vadd.f32 %v3074, %v3075
  %v3077 = vsel %vm171, %v2984, 0.0
  %3078 = vadd.xlane.f32.xlu0 %v3077
  %v3079 = vpop.xlane.xlu0 %3078
  %v3080 = vsel %vm171, %v2985, 0.0
  %3081 = vadd.xlane.f32.xlu0 %v3080
  %v3082 = vpop.xlane.xlu0 %3081
  %v3083 = vsel %vm171, %v2986, 0.0
  %3084 = vadd.xlane.f32.xlu0 %v3083
  %v3085 = vpop.xlane.xlu0 %3084
  %v3086 = vsel %vm171, %v2987, 0.0
  %3087 = vadd.xlane.f32.xlu0 %v3086
  %v3088 = vpop.xlane.xlu0 %3087
  %v3089 = vmul.f32 %v3079, %v184
  %v3090 = vmul.f32 %v3082, %v184
  %v3091 = vmul.f32 %v3085, %v184
  %v3092 = vmul.f32 %v3088, %v184
  %v3093 = vsub.f32 %v2984, %v3089
  %v3094 = vsub.f32 %v2985, %v3090
  %v3095 = vsub.f32 %v2986, %v3091
  %v3096 = vsub.f32 %v2987, %v3092
  %v3097 = vmul.f32 %v3093, %v3093
  %v3098 = vmul.f32 %v3094, %v3094
  %v3099 = vmul.f32 %v3095, %v3095
  %v3100 = vmul.f32 %v3096, %v3096
  %v3101 = vsel %vm171, %v3097, 0.0
  %3102 = vadd.xlane.f32.xlu0 %v3101
  %v3103 = vpop.xlane.xlu0 %3102
  %v3104 = vsel %vm171, %v3098, 0.0
  %3105 = vadd.xlane.f32.xlu0 %v3104
  %v3106 = vpop.xlane.xlu0 %3105
  %v3107 = vsel %vm171, %v3099, 0.0
  %3108 = vadd.xlane.f32.xlu0 %v3107
  %v3109 = vpop.xlane.xlu0 %3108
  %v3110 = vsel %vm171, %v3100, 0.0
  %3111 = vadd.xlane.f32.xlu0 %v3110
  %v3112 = vpop.xlane.xlu0 %3111
  %v3113 = vmul.f32 %v3103, %v184
  %v3114 = vmul.f32 %v3106, %v184
  %v3115 = vmul.f32 %v3109, %v184
  %v3116 = vmul.f32 %v3112, %v184
  %v3117 = vadd.f32 %v3113, 1e-06
  %v3118 = vadd.f32 %v3114, 1e-06
  %v3119 = vadd.f32 %v3115, 1e-06
  %v3120 = vadd.f32 %v3116, 1e-06
  %v3121 = vrsqrt.pop %v3117
  %v3122 = vrsqrt.pop %v3118
  %v3123 = vrsqrt.pop %v3119
  %v3124 = vrsqrt.pop %v3120
  %v3125 = vmul.f32 %v3093, %v3121
  %v3126 = vmul.f32 %v3094, %v3122
  %v3127 = vmul.f32 %v3095, %v3123
  %v3128 = vmul.f32 %v3096, %v3124
  %v3129 = vmul.f32 %v3125, %v3000
  %v3130 = vmul.f32 %v3126, %v3000
  %v3131 = vmul.f32 %v3127, %v3000
  %v3132 = vmul.f32 %v3128, %v3000
  %v3133 = vadd.f32 %v3129, %v3008
  %v3134 = vadd.f32 %v3130, %v3008
  %v3135 = vadd.f32 %v3131, %v3008
  %v3136 = vadd.f32 %v3132, %v3008
  %v3137 = vmul.f32 %v3133, %v2990
  %v3138 = vmul.f32 %v3134, %v2990
  %v3139 = vmul.f32 %v3135, %v2990
  %v3140 = vmul.f32 %v3136, %v2990
  %v3141 = vsel %vm171, %v3137, 0.0
  %v3142 = vrot.slane %v3141, 4
  %v3143 = vadd.f32 %v3141, %v3142
  %v3144 = vrot.slane %v3143, 2
  %v3145 = vadd.f32 %v3143, %v3144
  %v3146 = vrot.slane %v3145, 1
  %v3147 = vadd.f32 %v3145, %v3146
  %v3148 = vsel %vm171, %v3138, 0.0
  %v3149 = vrot.slane %v3148, 4
  %v3150 = vadd.f32 %v3148, %v3149
  %v3151 = vrot.slane %v3150, 2
  %v3152 = vadd.f32 %v3150, %v3151
  %v3153 = vrot.slane %v3152, 1
  %v3154 = vadd.f32 %v3152, %v3153
  %v3155 = vsel %vm171, %v3139, 0.0
  %v3156 = vrot.slane %v3155, 4
  %v3157 = vadd.f32 %v3155, %v3156
  %v3158 = vrot.slane %v3157, 2
  %v3159 = vadd.f32 %v3157, %v3158
  %v3160 = vrot.slane %v3159, 1
  %v3161 = vadd.f32 %v3159, %v3160
  %v3162 = vsel %vm171, %v3140, 0.0
  %v3163 = vrot.slane %v3162, 4
  %v3164 = vadd.f32 %v3162, %v3163
  %v3165 = vrot.slane %v3164, 2
  %v3166 = vadd.f32 %v3164, %v3165
  %v3167 = vrot.slane %v3166, 1
  %v3168 = vadd.f32 %v3166, %v3167
  %v3169 = vmul.f32 %v3133, %v2996
  %v3170 = vmul.f32 %v3134, %v2996
  %v3171 = vmul.f32 %v3135, %v2996
  %v3172 = vmul.f32 %v3136, %v2996
  %v3173 = vsel %vm171, %v3169, 0.0
  %v3174 = vrot.slane %v3173, 4
  %v3175 = vadd.f32 %v3173, %v3174
  %v3176 = vrot.slane %v3175, 2
  %v3177 = vadd.f32 %v3175, %v3176
  %v3178 = vrot.slane %v3177, 1
  %v3179 = vadd.f32 %v3177, %v3178
  %v3180 = vsel %vm171, %v3170, 0.0
  %v3181 = vrot.slane %v3180, 4
  %v3182 = vadd.f32 %v3180, %v3181
  %v3183 = vrot.slane %v3182, 2
  %v3184 = vadd.f32 %v3182, %v3183
  %v3185 = vrot.slane %v3184, 1
  %v3186 = vadd.f32 %v3184, %v3185
  %v3187 = vsel %vm171, %v3171, 0.0
  %v3188 = vrot.slane %v3187, 4
  %v3189 = vadd.f32 %v3187, %v3188
  %v3190 = vrot.slane %v3189, 2
  %v3191 = vadd.f32 %v3189, %v3190
  %v3192 = vrot.slane %v3191, 1
  %v3193 = vadd.f32 %v3191, %v3192
  %v3194 = vsel %vm171, %v3172, 0.0
  %v3195 = vrot.slane %v3194, 4
  %v3196 = vadd.f32 %v3194, %v3195
  %v3197 = vrot.slane %v3196, 2
  %v3198 = vadd.f32 %v3196, %v3197
  %v3199 = vrot.slane %v3198, 1
  %v3200 = vadd.f32 %v3198, %v3199
  %vm3205 = vcmask 1041409
  %v3206 = vsel %vm3205, %v3030, %v3023
  %vm3207 = vcmask 1042434
  %v3208 = vsel %vm3207, %v3037, %v3206
  %vm3209 = vcmask 1043459
  %v3210 = vsel %vm3209, %v3044, %v3208
  %v3216 = vsel %vm3205, %v3062, %v3055
  %v3217 = vsel %vm3207, %v3069, %v3216
  %v3218 = vsel %vm3209, %v3076, %v3217
  %3219 = vrot.lane.b32.xlu0 %v3218, 32
  %v3220 = vpop.permute.xlu0 %3219
  %v3226 = vsel %vm3205, %v3154, %v3147
  %v3227 = vsel %vm3207, %v3161, %v3226
  %v3228 = vsel %vm3209, %v3168, %v3227
  %3229 = vrot.lane.b32.xlu0 %v3228, 64
  %v3230 = vpop.permute.xlu0 %3229
  %v3236 = vsel %vm3205, %v3186, %v3179
  %v3237 = vsel %vm3207, %v3193, %v3236
  %v3238 = vsel %vm3209, %v3200, %v3237
  %3239 = vrot.lane.b32.xlu0 %v3238, 96
  %v3240 = vpop.permute.xlu0 %3239
  %v3242 = vsel %vm171, %v3210, %v3220
  %v3243 = vsel %vm89, %v3242, %v3230
  %vm3244 = vcmask 785408
  %v3245 = vsel %vm3244, %v3243, %v3240
  %3246 = vst [vmem:[%s11] sm:$0xf] %v3245
  // Predicated region
  $region46: #{pretrained_encoder_forward.1} parent=0 // pred_check
    _
  $region47: #{pretrained_encoder_forward.1} parent=0 // pred_check_branch
    %3248 = sbr.rel (0) target = $region49
  $region48: #{pretrained_encoder_forward.1} parent=0 // pred_region
    _
  $region49: #{pretrained_encoder_forward.1} parent=0 // pred_fallthru
    _
  // Predicated region
  $region50: #{pretrained_encoder_forward.1} parent=0 // pred_check
    _
  $region51: #{pretrained_encoder_forward.1} parent=0 // pred_check_branch
    %3250 = sbr.rel (0) target = $region53
  $region52: #{pretrained_encoder_forward.1} parent=0 // pred_region
    _
  $region53: #{pretrained_encoder_forward.1} parent=0 // pred_fallthru
    _

</llo_original>
